<compile_context>
chip_gen: v5e
topology: v5e:2x2
jax: 0.10.0
libtpu: 0.0.40
codegen_flags: <defaults>
</compile_context>

<pallas_src>
import jax
import jax.numpy as jnp
from jax import lax
from jax.experimental import pallas as pl
from jax.experimental.pallas import tpu as pltpu

# ---------------- static configuration (small synthetic shapes) ----------------
TIME_STEPS = 8     # NTM timesteps batched into one kernel launch
BATCH = 2          # memory.batch_dim
INPUT_DIM = 32     # controller hidden size
NBR_HEADS = 1
MEM_DIM = 16       # memory.mem_dim
MEM_SLOTS = 8      # memory.mem_nbr_slots
IS_READ = True
HEAD_GATE_DIM = (MEM_DIM + 6) if IS_READ else (3 * MEM_DIM + 6)
OUT_DIM = NBR_HEADS * HEAD_GATE_DIM
OUT_FLAT = TIME_STEPS * BATCH * NBR_HEADS * MEM_SLOTS   # 128 -> lane-dense output row
EPS = 1e-8


# ---------------- in-kernel math helpers (VPU/EUP friendly) ----------------
def _softplus(x):
    # numerically stable softplus = max(x,0) + log(1 + exp(-|x|))
    return jnp.maximum(x, 0.0) + jnp.log(1.0 + jnp.exp(-jnp.abs(x)))


def _sigmoid(x):
    return 1.0 / (1.0 + jnp.exp(-x))


def _softmax_lastdim(x):
    # exact softmax (exact divide: errors must not compound through the recurrence)
    z = x - jnp.max(x, axis=-1, keepdims=True)
    e = jnp.exp(z)
    return e / jnp.sum(e, axis=-1, keepdims=True)


# ---------------- Pallas kernel: fused Linear + T-step recurrence ----------------
def basic_heads_kernel(x_ref, w_ref, b_ref, mem_ref, prevw_ref, out_ref):
    # ---- fused controller Linear for all T*B rows: y = x W^T + b (one MXU push) ----
    ctrl_all = lax.dot_general(
        x_ref[...], w_ref[...],
        dimension_numbers=(((1,), (1,)), ((), ())),
        preferred_element_type=jnp.float32) + b_ref[...]             # (T*B, OUT_DIM)

    # ---- loop-invariant precompute (hoisted out of the recurrence) ----
    mem = mem_ref[...]                                               # (B, N, D)
    mem_norm = jnp.sqrt(jnp.sum(mem * mem, axis=-1))                 # (B, N)

    # 3-tap circular-shift selection masks, built once (pure iota/VPU, no MXU).
    row = lax.broadcasted_iota(jnp.int32, (MEM_SLOTS, MEM_SLOTS), 0)  # j
    col = lax.broadcasted_iota(jnp.int32, (MEM_SLOTS, MEM_SLOTS), 1)  # i
    d = row - col
    m_p1 = jnp.where((d == 1) | (d == 1 - MEM_SLOTS), 1.0, 0.0)      # j == (i+1) % N
    m_m1 = jnp.where((d == -1) | (d == MEM_SLOTS - 1), 1.0, 0.0)     # j == (i-1) % N

    prev = prevw_ref[...]                                            # (B, H*N)

    # ---- statically unrolled recurrence over T timesteps ----
    for t in range(TIME_STEPS):
        ctrl = ctrl_all[t * BATCH:(t + 1) * BATCH, :]                # (B, OUT_DIM)
        new_heads = []
        for h in range(NBR_HEADS):                                   # static unroll over heads
            base = h * HEAD_GATE_DIM
            k = ctrl[:, base:base + MEM_DIM]                                         # (B, Dm)
            beta = _softplus(ctrl[:, base + MEM_DIM:base + MEM_DIM + 1])             # (B, 1)
            g = _sigmoid(ctrl[:, base + MEM_DIM + 1:base + MEM_DIM + 2])             # (B, 1)
            s = _softmax_lastdim(
                _softplus(ctrl[:, base + MEM_DIM + 2:base + MEM_DIM + 5]))           # (B, 3)
            gamma = 1.0 + _softplus(ctrl[:, base + MEM_DIM + 5:base + MEM_DIM + 6])  # (B, 1)

            # ---- content addressing: softmax(beta * cosine_sim(k, M)) over slots ----
            dot = jnp.sum(k[:, None, :] * mem, axis=-1)                    # (B, N)
            k_norm = jnp.sqrt(jnp.sum(k * k, axis=-1, keepdims=True))      # (B, 1)
            sim = dot / (k_norm * mem_norm + EPS)                          # EPS like reference
            wc = _softmax_lastdim(beta * sim)                              # (B, N)

            # ---- location addressing ----
            prev_h = prev[:, h * MEM_SLOTS:(h + 1) * MEM_SLOTS]            # (B, N)
            wg = g * wc + (1.0 - g) * prev_h

            # circular shift: wtilde[i] = s0*wg[(i+1)%N] + s1*wg[i] + s2*wg[(i-1)%N]
            wg_p1 = jnp.sum(wg[:, :, None] * m_p1[None, :, :], axis=1)     # wg[(i+1)%N]
            wg_m1 = jnp.sum(wg[:, :, None] * m_m1[None, :, :], axis=1)     # wg[(i-1)%N]
            wtilde = s[:, 0:1] * wg_p1 + s[:, 1:2] * wg + s[:, 2:3] * wg_m1

            # sharpening: wtilde**gamma via exp/log on the EUP, EPS-floored
            wpow = jnp.exp(gamma * jnp.log(jnp.maximum(wtilde, EPS)))
            wnorm = wpow / (jnp.sum(wpow, axis=-1, keepdims=True) + EPS)   # exact divide
            new_heads.append(wnorm)

            # lane-dense packing: flat index (t,b,h,n) -> t*B*H*N + b*H*N + h*N + n
            for b in range(BATCH):
                off = (t * BATCH + b) * NBR_HEADS * MEM_SLOTS + h * MEM_SLOTS
                out_ref[0:1, off:off + MEM_SLOTS] = wnorm[b:b + 1, :]

        # carry prev_w to the next timestep
        if NBR_HEADS == 1:
            prev = new_heads[0]
        else:
            prev = jnp.concatenate(new_heads, axis=-1)                     # (B, H*N)


# ---------------- wrapper ----------------
@jax.jit
def basic_heads_forward_seq(ctrl_inputs, weight, bias, memory, prev_w0):
    """Runs T sequential BasicHeads.forward() calls (prev_w carried) in ONE kernel."""
    T = ctrl_inputs.shape[0]
    x2d = ctrl_inputs.reshape(T * BATCH, INPUT_DIM)           # metadata-only reshape
    bias2d = bias.reshape(1, OUT_DIM)
    prev2d = prev_w0.reshape(BATCH, NBR_HEADS * MEM_SLOTS)

    out_flat = pl.pallas_call(
        basic_heads_kernel,
        out_shape=jax.ShapeDtypeStruct((1, OUT_FLAT), jnp.float32),
        grid_spec=pltpu.PrefetchScalarGridSpec(
            num_scalar_prefetch=0,
            grid=(1,),
            in_specs=[
                pl.BlockSpec((T * BATCH, INPUT_DIM), lambda i: (0, 0)),           # ctrl inputs
                pl.BlockSpec((OUT_DIM, INPUT_DIM), lambda i: (0, 0)),             # Linear weight
                pl.BlockSpec((1, OUT_DIM), lambda i: (0, 0)),                     # Linear bias
                pl.BlockSpec((BATCH, MEM_SLOTS, MEM_DIM), lambda i: (0, 0, 0)),   # memory
                pl.BlockSpec((BATCH, NBR_HEADS * MEM_SLOTS), lambda i: (0, 0)),   # prev_w0
            ],
            out_specs=pl.BlockSpec((1, OUT_FLAT), lambda i: (0, 0)),
        ),
        compiler_params=pltpu.CompilerParams(dimension_semantics=("arbitrary",)),
    )(x2d, weight, bias2d, memory, prev2d)

    return out_flat.reshape(T, BATCH, NBR_HEADS, MEM_SLOTS)


# ---------------- pure-JAX reference (same semantics) ----------------
def reference_forward(ctrl_inputs, weight, bias, memory, prev_w0):
    ctrl_all = jnp.einsum('tbi,oi->tbo', ctrl_inputs, weight) + bias
    mem_norm = jnp.sqrt(jnp.sum(memory * memory, axis=-1))               # (B, N)
    prev = prev_w0
    outs = []
    for t in range(ctrl_all.shape[0]):
        ctrl = ctrl_all[t]
        heads = []
        for h in range(NBR_HEADS):
            base = h * HEAD_GATE_DIM
            k = ctrl[:, base:base + MEM_DIM]
            beta = jax.nn.softplus(ctrl[:, base + MEM_DIM:base + MEM_DIM + 1])
            g = jax.nn.sigmoid(ctrl[:, base + MEM_DIM + 1:base + MEM_DIM + 2])
            s = jax.nn.softmax(
                jax.nn.softplus(ctrl[:, base + MEM_DIM + 2:base + MEM_DIM + 5]), axis=-1)
            gamma = 1.0 + jax.nn.softplus(ctrl[:, base + MEM_DIM + 5:base + MEM_DIM + 6])

            dot = jnp.einsum('bd,bnd->bn', k, memory)
            k_norm = jnp.sqrt(jnp.sum(k * k, axis=-1, keepdims=True))
            sim = dot / (k_norm * mem_norm + EPS)
            wc = jax.nn.softmax(beta * sim, axis=-1)

            wg = g * wc + (1.0 - g) * prev[:, h, :]
            wtilde = (s[:, 0:1] * jnp.roll(wg, -1, axis=-1)     # wg[(i+1)%N]
                      + s[:, 1:2] * wg
                      + s[:, 2:3] * jnp.roll(wg, 1, axis=-1))   # wg[(i-1)%N]
            wpow = jnp.power(jnp.maximum(wtilde, EPS), gamma)
            heads.append(wpow / (jnp.sum(wpow, axis=-1, keepdims=True) + EPS))
        w = jnp.stack(heads, axis=1)
        prev = w
        outs.append(w)
    return jnp.stack(outs, axis=0)


if __name__ == "__main__":
    key = jax.random.PRNGKey(0)
    k1, k2, k3, k4 = jax.random.split(key, 4)

    ctrl_inputs = jax.random.normal(k1, (TIME_STEPS, BATCH, INPUT_DIM), dtype=jnp.float32)

    # PyTorch-style Linear init: uniform(-1/sqrt(fan_in), 1/sqrt(fan_in))
    bound = 1.0 / (INPUT_DIM ** 0.5)
    weight = jax.random.uniform(k2, (OUT_DIM, INPUT_DIM),
                                minval=-bound, maxval=bound, dtype=jnp.float32)
    bias = jax.random.uniform(k3, (OUT_DIM,),
                              minval=-bound, maxval=bound, dtype=jnp.float32)

    # external memory matrix (constant across the read-head timesteps here)
    memory = jax.random.normal(k4, (BATCH, MEM_SLOTS, MEM_DIM), dtype=jnp.float32)

    # reset_prev_w(): zeros
    prev_w0 = jnp.zeros((BATCH, NBR_HEADS, MEM_SLOTS), dtype=jnp.float32)

    out = basic_heads_forward_seq(ctrl_inputs, weight, bias, memory, prev_w0)
    jax.block_until_ready(out)

    assert out.shape == (TIME_STEPS, BATCH, NBR_HEADS, MEM_SLOTS)
    assert bool(jnp.all(jnp.isfinite(out)))

    ref = reference_forward(ctrl_inputs, weight, bias, memory, prev_w0)
    max_err = float(jnp.max(jnp.abs(out - ref)))
    assert max_err < 2e-2, f"kernel/reference mismatch: max_err={max_err}"

    print("KERNEL_OK")
</pallas_src>

<mosaic_0001>
module attributes {stable_mosaic.version = 11 : i64} {
  func.func @basic_heads_kernel(%arg0: i32, %arg1: memref<16x32xf32, #tpu.memory_space<vmem>>, %arg2: memref<22x32xf32, #tpu.memory_space<vmem>>, %arg3: memref<1x22xf32, #tpu.memory_space<vmem>>, %arg4: memref<2x8x16xf32, #tpu.memory_space<vmem>>, %arg5: memref<2x8xf32, #tpu.memory_space<vmem>>, %arg6: memref<1x128xf32, #tpu.memory_space<vmem>>) attributes {dimension_semantics = [#tpu.dimension_semantics<arbitrary>], iteration_bounds = array<i64: 1>, scalar_prefetch = 0 : i64, scratch_operands = 0 : i64, tpu.core_type = #tpu.core_type<tc>, window_params = [{pipeline_mode = #tpu.pipeline_mode<synchronous>, transform_indices = @transform_0, window_bounds = array<i64: 16, 32>}, {pipeline_mode = #tpu.pipeline_mode<synchronous>, transform_indices = @transform_1, window_bounds = array<i64: 22, 32>}, {pipeline_mode = #tpu.pipeline_mode<synchronous>, transform_indices = @transform_2, window_bounds = array<i64: 1, 22>}, {pipeline_mode = #tpu.pipeline_mode<synchronous>, transform_indices = @transform_3, window_bounds = array<i64: 2, 8, 16>}, {pipeline_mode = #tpu.pipeline_mode<synchronous>, transform_indices = @transform_4, window_bounds = array<i64: 2, 8>}, {pipeline_mode = #tpu.pipeline_mode<synchronous>, transform_indices = @transform_5, window_bounds = array<i64: 1, 128>}]} {
    %c0 = arith.constant 0 : index
    %c0_0 = arith.constant 0 : index
    %0 = vector.load %arg1[%c0, %c0_0] : memref<16x32xf32, #tpu.memory_space<vmem>>, vector<16x32xf32>
    %c0_1 = arith.constant 0 : index
    %c0_2 = arith.constant 0 : index
    %1 = vector.load %arg2[%c0_1, %c0_2] : memref<22x32xf32, #tpu.memory_space<vmem>>, vector<22x32xf32>
    %cst = arith.constant dense<0.000000e+00> : vector<16x22xf32>
    %2 = tpu.matmul %0, %1, %cst {dimension_numbers = #tpu.dot_dimension_numbers<[1], [1], [0], [0], [0, 0, 1, 0], [], []>} : vector<16x32xf32>, vector<22x32xf32>, vector<16x22xf32> -> vector<16x22xf32>
    %c0_3 = arith.constant 0 : index
    %c0_4 = arith.constant 0 : index
    %3 = vector.load %arg3[%c0_3, %c0_4] : memref<1x22xf32, #tpu.memory_space<vmem>>, vector<1x22xf32>
    %4 = vector.broadcast %3 : vector<1x22xf32> to vector<16x22xf32>
    %5 = arith.addf %2, %4 : vector<16x22xf32>
    %c0_5 = arith.constant 0 : index
    %c0_6 = arith.constant 0 : index
    %c0_7 = arith.constant 0 : index
    %6 = vector.load %arg4[%c0_5, %c0_6, %c0_7] : memref<2x8x16xf32, #tpu.memory_space<vmem>>, vector<2x8x16xf32>
    %7 = arith.mulf %6, %6 : vector<2x8x16xf32>
    %cst_8 = arith.constant dense<0.000000e+00> : vector<2x8xf32>
    %8 = vector.multi_reduction <add>, %7, %cst_8 [2] : vector<2x8x16xf32> to vector<2x8xf32>
    %9 = math.sqrt %8 : vector<2x8xf32>
    %10 = tpu.iota {dimensions = array<i32: 0>} : vector<8x8xi32>
    %11 = tpu.iota {dimensions = array<i32: 1>} : vector<8x8xi32>
    %12 = arith.subi %10, %11 : vector<8x8xi32>
    %c1_i32 = arith.constant 1 : i32
    %13 = vector.broadcast %c1_i32 : i32 to vector<8x8xi32>
    %14 = arith.cmpi eq, %12, %13 : vector<8x8xi32>
    %c-7_i32 = arith.constant -7 : i32
    %15 = vector.broadcast %c-7_i32 : i32 to vector<8x8xi32>
    %16 = arith.cmpi eq, %12, %15 : vector<8x8xi32>
    %17 = arith.ori %14, %16 : vector<8x8xi1>
    %cst_9 = arith.constant 1.000000e+00 : f32
    %cst_10 = arith.constant 0.000000e+00 : f32
    %18 = vector.broadcast %cst_9 : f32 to vector<8x8xf32>
    %19 = vector.broadcast %cst_10 : f32 to vector<8x8xf32>
    %20 = arith.select %17, %18, %19 : vector<8x8xi1>, vector<8x8xf32>
    %c-1_i32 = arith.constant -1 : i32
    %21 = vector.broadcast %c-1_i32 : i32 to vector<8x8xi32>
    %22 = arith.cmpi eq, %12, %21 : vector<8x8xi32>
    %c7_i32 = arith.constant 7 : i32
    %23 = vector.broadcast %c7_i32 : i32 to vector<8x8xi32>
    %24 = arith.cmpi eq, %12, %23 : vector<8x8xi32>
    %25 = arith.ori %22, %24 : vector<8x8xi1>
    %cst_11 = arith.constant 1.000000e+00 : f32
    %cst_12 = arith.constant 0.000000e+00 : f32
    %26 = vector.broadcast %cst_11 : f32 to vector<8x8xf32>
    %27 = vector.broadcast %cst_12 : f32 to vector<8x8xf32>
    %28 = arith.select %25, %26, %27 : vector<8x8xi1>, vector<8x8xf32>
    %c0_13 = arith.constant 0 : index
    %c0_14 = arith.constant 0 : index
    %29 = vector.load %arg5[%c0_13, %c0_14] : memref<2x8xf32, #tpu.memory_space<vmem>>, vector<2x8xf32>
    %30 = vector.extract_strided_slice %5 {offsets = [0, 0], sizes = [2, 22], strides = [1, 1]} : vector<16x22xf32> to vector<2x22xf32>
    %31 = vector.extract_strided_slice %30 {offsets = [0, 0], sizes = [2, 16], strides = [1, 1]} : vector<2x22xf32> to vector<2x16xf32>
    %32 = vector.extract_strided_slice %30 {offsets = [0, 16], sizes = [2, 1], strides = [1, 1]} : vector<2x22xf32> to vector<2x1xf32>
    %cst_15 = arith.constant 0.000000e+00 : f32
    %33 = vector.broadcast %cst_15 : f32 to vector<2x1xf32>
    %34 = arith.maximumf %32, %33 : vector<2x1xf32>
    %35 = math.absf %32 : vector<2x1xf32>
    %cst_16 = arith.constant 0.000000e+00 : f32
    %36 = vector.broadcast %cst_16 : f32 to vector<2x1xf32>
    %37 = arith.subf %36, %35 : vector<2x1xf32>
    %38 = math.exp %37 : vector<2x1xf32>
    %cst_17 = arith.constant 1.000000e+00 : f32
    %39 = vector.broadcast %cst_17 : f32 to vector<2x1xf32>
    %40 = arith.addf %39, %38 : vector<2x1xf32>
    %41 = math.log %40 : vector<2x1xf32>
    %42 = arith.addf %34, %41 : vector<2x1xf32>
    %43 = vector.extract_strided_slice %30 {offsets = [0, 17], sizes = [2, 1], strides = [1, 1]} : vector<2x22xf32> to vector<2x1xf32>
    %cst_18 = arith.constant 0.000000e+00 : f32
    %44 = vector.broadcast %cst_18 : f32 to vector<2x1xf32>
    %45 = arith.subf %44, %43 : vector<2x1xf32>
    %46 = math.exp %45 : vector<2x1xf32>
    %cst_19 = arith.constant 1.000000e+00 : f32
    %47 = vector.broadcast %cst_19 : f32 to vector<2x1xf32>
    %48 = arith.addf %47, %46 : vector<2x1xf32>
    %cst_20 = arith.constant 1.000000e+00 : f32
    %49 = vector.broadcast %cst_20 : f32 to vector<2x1xf32>
    %50 = arith.divf %49, %48 : vector<2x1xf32>
    %51 = vector.extract_strided_slice %30 {offsets = [0, 18], sizes = [2, 3], strides = [1, 1]} : vector<2x22xf32> to vector<2x3xf32>
    %cst_21 = arith.constant 0.000000e+00 : f32
    %52 = vector.broadcast %cst_21 : f32 to vector<2x3xf32>
    %53 = arith.maximumf %51, %52 : vector<2x3xf32>
    %54 = math.absf %51 : vector<2x3xf32>
    %cst_22 = arith.constant 0.000000e+00 : f32
    %55 = vector.broadcast %cst_22 : f32 to vector<2x3xf32>
    %56 = arith.subf %55, %54 : vector<2x3xf32>
    %57 = math.exp %56 : vector<2x3xf32>
    %cst_23 = arith.constant 1.000000e+00 : f32
    %58 = vector.broadcast %cst_23 : f32 to vector<2x3xf32>
    %59 = arith.addf %58, %57 : vector<2x3xf32>
    %60 = math.log %59 : vector<2x3xf32>
    %61 = arith.addf %53, %60 : vector<2x3xf32>
    %cst_24 = arith.constant dense<0xFF800000> : vector<2xf32>
    %62 = vector.multi_reduction <maximumf>, %61, %cst_24 [1] : vector<2x3xf32> to vector<2xf32>
    %63 = vector.shape_cast %62 : vector<2xf32> to vector<2x1xf32>
    %64 = vector.broadcast %63 : vector<2x1xf32> to vector<2x3xf32>
    %65 = arith.subf %61, %64 : vector<2x3xf32>
    %66 = math.exp %65 : vector<2x3xf32>
    %cst_25 = arith.constant dense<0.000000e+00> : vector<2xf32>
    %67 = vector.multi_reduction <add>, %66, %cst_25 [1] : vector<2x3xf32> to vector<2xf32>
    %68 = vector.shape_cast %67 : vector<2xf32> to vector<2x1xf32>
    %69 = vector.broadcast %68 : vector<2x1xf32> to vector<2x3xf32>
    %70 = arith.divf %66, %69 : vector<2x3xf32>
    %71 = vector.extract_strided_slice %30 {offsets = [0, 21], sizes = [2, 1], strides = [1, 1]} : vector<2x22xf32> to vector<2x1xf32>
    %cst_26 = arith.constant 0.000000e+00 : f32
    %72 = vector.broadcast %cst_26 : f32 to vector<2x1xf32>
    %73 = arith.maximumf %71, %72 : vector<2x1xf32>
    %74 = math.absf %71 : vector<2x1xf32>
    %cst_27 = arith.constant 0.000000e+00 : f32
    %75 = vector.broadcast %cst_27 : f32 to vector<2x1xf32>
    %76 = arith.subf %75, %74 : vector<2x1xf32>
    %77 = math.exp %76 : vector<2x1xf32>
    %cst_28 = arith.constant 1.000000e+00 : f32
    %78 = vector.broadcast %cst_28 : f32 to vector<2x1xf32>
    %79 = arith.addf %78, %77 : vector<2x1xf32>
    %80 = math.log %79 : vector<2x1xf32>
    %81 = arith.addf %73, %80 : vector<2x1xf32>
    %cst_29 = arith.constant 1.000000e+00 : f32
    %82 = vector.broadcast %cst_29 : f32 to vector<2x1xf32>
    %83 = arith.addf %82, %81 : vector<2x1xf32>
    %84 = vector.shape_cast %31 : vector<2x16xf32> to vector<2x1x16xf32>
    %85 = vector.broadcast %84 : vector<2x1x16xf32> to vector<2x8x16xf32>
    %86 = arith.mulf %85, %6 : vector<2x8x16xf32>
    %cst_30 = arith.constant dense<0.000000e+00> : vector<2x8xf32>
    %87 = vector.multi_reduction <add>, %86, %cst_30 [2] : vector<2x8x16xf32> to vector<2x8xf32>
    %88 = arith.mulf %31, %31 : vector<2x16xf32>
    %cst_31 = arith.constant dense<0.000000e+00> : vector<2xf32>
    %89 = vector.multi_reduction <add>, %88, %cst_31 [1] : vector<2x16xf32> to vector<2xf32>
    %90 = vector.shape_cast %89 : vector<2xf32> to vector<2x1xf32>
    %91 = math.sqrt %90 : vector<2x1xf32>
    %92 = vector.broadcast %91 : vector<2x1xf32> to vector<2x8xf32>
    %93 = arith.mulf %92, %9 : vector<2x8xf32>
    %cst_32 = arith.constant 9.99999993E-9 : f32
    %94 = vector.broadcast %cst_32 : f32 to vector<2x8xf32>
    %95 = arith.addf %93, %94 : vector<2x8xf32>
    %96 = arith.divf %87, %95 : vector<2x8xf32>
    %97 = vector.broadcast %42 : vector<2x1xf32> to vector<2x8xf32>
    %98 = arith.mulf %97, %96 : vector<2x8xf32>
    %cst_33 = arith.constant dense<0xFF800000> : vector<2xf32>
    %99 = vector.multi_reduction <maximumf>, %98, %cst_33 [1] : vector<2x8xf32> to vector<2xf32>
    %100 = vector.shape_cast %99 : vector<2xf32> to vector<2x1xf32>
    %101 = vector.broadcast %100 : vector<2x1xf32> to vector<2x8xf32>
    %102 = arith.subf %98, %101 : vector<2x8xf32>
    %103 = math.exp %102 : vector<2x8xf32>
    %cst_34 = arith.constant dense<0.000000e+00> : vector<2xf32>
    %104 = vector.multi_reduction <add>, %103, %cst_34 [1] : vector<2x8xf32> to vector<2xf32>
    %105 = vector.shape_cast %104 : vector<2xf32> to vector<2x1xf32>
    %106 = vector.broadcast %105 : vector<2x1xf32> to vector<2x8xf32>
    %107 = arith.divf %103, %106 : vector<2x8xf32>
    %108 = vector.broadcast %50 : vector<2x1xf32> to vector<2x8xf32>
    %109 = arith.mulf %108, %107 : vector<2x8xf32>
    %cst_35 = arith.constant 1.000000e+00 : f32
    %110 = vector.broadcast %cst_35 : f32 to vector<2x1xf32>
    %111 = arith.subf %110, %50 : vector<2x1xf32>
    %112 = vector.broadcast %111 : vector<2x1xf32> to vector<2x8xf32>
    %113 = arith.mulf %112, %29 : vector<2x8xf32>
    %114 = arith.addf %109, %113 : vector<2x8xf32>
    %115 = vector.shape_cast %114 : vector<2x8xf32> to vector<2x8x1xf32>
    %116 = vector.shape_cast %20 : vector<8x8xf32> to vector<1x8x8xf32>
    %117 = vector.broadcast %115 : vector<2x8x1xf32> to vector<2x8x8xf32>
    %118 = vector.broadcast %116 : vector<1x8x8xf32> to vector<2x8x8xf32>
    %119 = arith.mulf %117, %118 : vector<2x8x8xf32>
    %cst_36 = arith.constant dense<0.000000e+00> : vector<2x8xf32>
    %120 = vector.multi_reduction <add>, %119, %cst_36 [1] : vector<2x8x8xf32> to vector<2x8xf32>
    %121 = vector.shape_cast %114 : vector<2x8xf32> to vector<2x8x1xf32>
    %122 = vector.shape_cast %28 : vector<8x8xf32> to vector<1x8x8xf32>
    %123 = vector.broadcast %121 : vector<2x8x1xf32> to vector<2x8x8xf32>
    %124 = vector.broadcast %122 : vector<1x8x8xf32> to vector<2x8x8xf32>
    %125 = arith.mulf %123, %124 : vector<2x8x8xf32>
    %cst_37 = arith.constant dense<0.000000e+00> : vector<2x8xf32>
    %126 = vector.multi_reduction <add>, %125, %cst_37 [1] : vector<2x8x8xf32> to vector<2x8xf32>
    %127 = vector.extract_strided_slice %70 {offsets = [0, 0], sizes = [2, 1], strides = [1, 1]} : vector<2x3xf32> to vector<2x1xf32>
    %128 = vector.broadcast %127 : vector<2x1xf32> to vector<2x8xf32>
    %129 = arith.mulf %128, %120 : vector<2x8xf32>
    %130 = vector.extract_strided_slice %70 {offsets = [0, 1], sizes = [2, 1], strides = [1, 1]} : vector<2x3xf32> to vector<2x1xf32>
    %131 = vector.broadcast %130 : vector<2x1xf32> to vector<2x8xf32>
    %132 = arith.mulf %131, %114 : vector<2x8xf32>
    %133 = arith.addf %129, %132 : vector<2x8xf32>
    %134 = vector.extract_strided_slice %70 {offsets = [0, 2], sizes = [2, 1], strides = [1, 1]} : vector<2x3xf32> to vector<2x1xf32>
    %135 = vector.broadcast %134 : vector<2x1xf32> to vector<2x8xf32>
    %136 = arith.mulf %135, %126 : vector<2x8xf32>
    %137 = arith.addf %133, %136 : vector<2x8xf32>
    %cst_38 = arith.constant 9.99999993E-9 : f32
    %138 = vector.broadcast %cst_38 : f32 to vector<2x8xf32>
    %139 = arith.maximumf %137, %138 : vector<2x8xf32>
    %140 = math.log %139 : vector<2x8xf32>
    %141 = vector.broadcast %83 : vector<2x1xf32> to vector<2x8xf32>
    %142 = arith.mulf %141, %140 : vector<2x8xf32>
    %143 = math.exp %142 : vector<2x8xf32>
    %cst_39 = arith.constant dense<0.000000e+00> : vector<2xf32>
    %144 = vector.multi_reduction <add>, %143, %cst_39 [1] : vector<2x8xf32> to vector<2xf32>
    %145 = vector.shape_cast %144 : vector<2xf32> to vector<2x1xf32>
    %cst_40 = arith.constant 9.99999993E-9 : f32
    %146 = vector.broadcast %cst_40 : f32 to vector<2x1xf32>
    %147 = arith.addf %145, %146 : vector<2x1xf32>
    %148 = vector.broadcast %147 : vector<2x1xf32> to vector<2x8xf32>
    %149 = arith.divf %143, %148 : vector<2x8xf32>
    %150 = vector.extract_strided_slice %149 {offsets = [0, 0], sizes = [1, 8], strides = [1, 1]} : vector<2x8xf32> to vector<1x8xf32>
    %c0_41 = arith.constant 0 : index
    %c0_42 = arith.constant 0 : index
    %151 = vector.load %arg6[%c0_41, %c0_42] : memref<1x128xf32, #tpu.memory_space<vmem>>, vector<1x8xf32>
    tpu.vector_store %arg6[%c0_41, %c0_42], %150 {strides = array<i32>} : memref<1x128xf32, #tpu.memory_space<vmem>>, vector<1x8xf32>,
    %152 = vector.extract_strided_slice %149 {offsets = [1, 0], sizes = [1, 8], strides = [1, 1]} : vector<2x8xf32> to vector<1x8xf32>
    %c0_43 = arith.constant 0 : index
    %c8 = arith.constant 8 : index
    %153 = vector.load %arg6[%c0_43, %c8] : memref<1x128xf32, #tpu.memory_space<vmem>>, vector<1x8xf32>
    tpu.vector_store %arg6[%c0_43, %c8], %152 {strides = array<i32>} : memref<1x128xf32, #tpu.memory_space<vmem>>, vector<1x8xf32>,
    %154 = vector.extract_strided_slice %5 {offsets = [2, 0], sizes = [2, 22], strides = [1, 1]} : vector<16x22xf32> to vector<2x22xf32>
    %155 = vector.extract_strided_slice %154 {offsets = [0, 0], sizes = [2, 16], strides = [1, 1]} : vector<2x22xf32> to vector<2x16xf32>
    %156 = vector.extract_strided_slice %154 {offsets = [0, 16], sizes = [2, 1], strides = [1, 1]} : vector<2x22xf32> to vector<2x1xf32>
    %cst_44 = arith.constant 0.000000e+00 : f32
    %157 = vector.broadcast %cst_44 : f32 to vector<2x1xf32>
    %158 = arith.maximumf %156, %157 : vector<2x1xf32>
    %159 = math.absf %156 : vector<2x1xf32>
    %cst_45 = arith.constant 0.000000e+00 : f32
    %160 = vector.broadcast %cst_45 : f32 to vector<2x1xf32>
    %161 = arith.subf %160, %159 : vector<2x1xf32>
    %162 = math.exp %161 : vector<2x1xf32>
    %cst_46 = arith.constant 1.000000e+00 : f32
    %163 = vector.broadcast %cst_46 : f32 to vector<2x1xf32>
    %164 = arith.addf %163, %162 : vector<2x1xf32>
    %165 = math.log %164 : vector<2x1xf32>
    %166 = arith.addf %158, %165 : vector<2x1xf32>
    %167 = vector.extract_strided_slice %154 {offsets = [0, 17], sizes = [2, 1], strides = [1, 1]} : vector<2x22xf32> to vector<2x1xf32>
    %cst_47 = arith.constant 0.000000e+00 : f32
    %168 = vector.broadcast %cst_47 : f32 to vector<2x1xf32>
    %169 = arith.subf %168, %167 : vector<2x1xf32>
    %170 = math.exp %169 : vector<2x1xf32>
    %cst_48 = arith.constant 1.000000e+00 : f32
    %171 = vector.broadcast %cst_48 : f32 to vector<2x1xf32>
    %172 = arith.addf %171, %170 : vector<2x1xf32>
    %cst_49 = arith.constant 1.000000e+00 : f32
    %173 = vector.broadcast %cst_49 : f32 to vector<2x1xf32>
    %174 = arith.divf %173, %172 : vector<2x1xf32>
    %175 = vector.extract_strided_slice %154 {offsets = [0, 18], sizes = [2, 3], strides = [1, 1]} : vector<2x22xf32> to vector<2x3xf32>
    %cst_50 = arith.constant 0.000000e+00 : f32
    %176 = vector.broadcast %cst_50 : f32 to vector<2x3xf32>
    %177 = arith.maximumf %175, %176 : vector<2x3xf32>
    %178 = math.absf %175 : vector<2x3xf32>
    %cst_51 = arith.constant 0.000000e+00 : f32
    %179 = vector.broadcast %cst_51 : f32 to vector<2x3xf32>
    %180 = arith.subf %179, %178 : vector<2x3xf32>
    %181 = math.exp %180 : vector<2x3xf32>
    %cst_52 = arith.constant 1.000000e+00 : f32
    %182 = vector.broadcast %cst_52 : f32 to vector<2x3xf32>
    %183 = arith.addf %182, %181 : vector<2x3xf32>
    %184 = math.log %183 : vector<2x3xf32>
    %185 = arith.addf %177, %184 : vector<2x3xf32>
    %cst_53 = arith.constant dense<0xFF800000> : vector<2xf32>
    %186 = vector.multi_reduction <maximumf>, %185, %cst_53 [1] : vector<2x3xf32> to vector<2xf32>
    %187 = vector.shape_cast %186 : vector<2xf32> to vector<2x1xf32>
    %188 = vector.broadcast %187 : vector<2x1xf32> to vector<2x3xf32>
    %189 = arith.subf %185, %188 : vector<2x3xf32>
    %190 = math.exp %189 : vector<2x3xf32>
    %cst_54 = arith.constant dense<0.000000e+00> : vector<2xf32>
    %191 = vector.multi_reduction <add>, %190, %cst_54 [1] : vector<2x3xf32> to vector<2xf32>
    %192 = vector.shape_cast %191 : vector<2xf32> to vector<2x1xf32>
    %193 = vector.broadcast %192 : vector<2x1xf32> to vector<2x3xf32>
    %194 = arith.divf %190, %193 : vector<2x3xf32>
    %195 = vector.extract_strided_slice %154 {offsets = [0, 21], sizes = [2, 1], strides = [1, 1]} : vector<2x22xf32> to vector<2x1xf32>
    %cst_55 = arith.constant 0.000000e+00 : f32
    %196 = vector.broadcast %cst_55 : f32 to vector<2x1xf32>
    %197 = arith.maximumf %195, %196 : vector<2x1xf32>
    %198 = math.absf %195 : vector<2x1xf32>
    %cst_56 = arith.constant 0.000000e+00 : f32
    %199 = vector.broadcast %cst_56 : f32 to vector<2x1xf32>
    %200 = arith.subf %199, %198 : vector<2x1xf32>
    %201 = math.exp %200 : vector<2x1xf32>
    %cst_57 = arith.constant 1.000000e+00 : f32
    %202 = vector.broadcast %cst_57 : f32 to vector<2x1xf32>
    %203 = arith.addf %202, %201 : vector<2x1xf32>
    %204 = math.log %203 : vector<2x1xf32>
    %205 = arith.addf %197, %204 : vector<2x1xf32>
    %cst_58 = arith.constant 1.000000e+00 : f32
    %206 = vector.broadcast %cst_58 : f32 to vector<2x1xf32>
    %207 = arith.addf %206, %205 : vector<2x1xf32>
    %208 = vector.shape_cast %155 : vector<2x16xf32> to vector<2x1x16xf32>
    %209 = vector.broadcast %208 : vector<2x1x16xf32> to vector<2x8x16xf32>
    %210 = arith.mulf %209, %6 : vector<2x8x16xf32>
    %cst_59 = arith.constant dense<0.000000e+00> : vector<2x8xf32>
    %211 = vector.multi_reduction <add>, %210, %cst_59 [2] : vector<2x8x16xf32> to vector<2x8xf32>
    %212 = arith.mulf %155, %155 : vector<2x16xf32>
    %cst_60 = arith.constant dense<0.000000e+00> : vector<2xf32>
    %213 = vector.multi_reduction <add>, %212, %cst_60 [1] : vector<2x16xf32> to vector<2xf32>
    %214 = vector.shape_cast %213 : vector<2xf32> to vector<2x1xf32>
    %215 = math.sqrt %214 : vector<2x1xf32>
    %216 = vector.broadcast %215 : vector<2x1xf32> to vector<2x8xf32>
    %217 = arith.mulf %216, %9 : vector<2x8xf32>
    %cst_61 = arith.constant 9.99999993E-9 : f32
    %218 = vector.broadcast %cst_61 : f32 to vector<2x8xf32>
    %219 = arith.addf %217, %218 : vector<2x8xf32>
    %220 = arith.divf %211, %219 : vector<2x8xf32>
    %221 = vector.broadcast %166 : vector<2x1xf32> to vector<2x8xf32>
    %222 = arith.mulf %221, %220 : vector<2x8xf32>
    %cst_62 = arith.constant dense<0xFF800000> : vector<2xf32>
    %223 = vector.multi_reduction <maximumf>, %222, %cst_62 [1] : vector<2x8xf32> to vector<2xf32>
    %224 = vector.shape_cast %223 : vector<2xf32> to vector<2x1xf32>
    %225 = vector.broadcast %224 : vector<2x1xf32> to vector<2x8xf32>
    %226 = arith.subf %222, %225 : vector<2x8xf32>
    %227 = math.exp %226 : vector<2x8xf32>
    %cst_63 = arith.constant dense<0.000000e+00> : vector<2xf32>
    %228 = vector.multi_reduction <add>, %227, %cst_63 [1] : vector<2x8xf32> to vector<2xf32>
    %229 = vector.shape_cast %228 : vector<2xf32> to vector<2x1xf32>
    %230 = vector.broadcast %229 : vector<2x1xf32> to vector<2x8xf32>
    %231 = arith.divf %227, %230 : vector<2x8xf32>
    %232 = vector.broadcast %174 : vector<2x1xf32> to vector<2x8xf32>
    %233 = arith.mulf %232, %231 : vector<2x8xf32>
    %cst_64 = arith.constant 1.000000e+00 : f32
    %234 = vector.broadcast %cst_64 : f32 to vector<2x1xf32>
    %235 = arith.subf %234, %174 : vector<2x1xf32>
    %236 = vector.broadcast %235 : vector<2x1xf32> to vector<2x8xf32>
    %237 = arith.mulf %236, %149 : vector<2x8xf32>
    %238 = arith.addf %233, %237 : vector<2x8xf32>
    %239 = vector.shape_cast %238 : vector<2x8xf32> to vector<2x8x1xf32>
    %240 = vector.shape_cast %20 : vector<8x8xf32> to vector<1x8x8xf32>
    %241 = vector.broadcast %239 : vector<2x8x1xf32> to vector<2x8x8xf32>
    %242 = vector.broadcast %240 : vector<1x8x8xf32> to vector<2x8x8xf32>
    %243 = arith.mulf %241, %242 : vector<2x8x8xf32>
    %cst_65 = arith.constant dense<0.000000e+00> : vector<2x8xf32>
    %244 = vector.multi_reduction <add>, %243, %cst_65 [1] : vector<2x8x8xf32> to vector<2x8xf32>
    %245 = vector.shape_cast %238 : vector<2x8xf32> to vector<2x8x1xf32>
    %246 = vector.shape_cast %28 : vector<8x8xf32> to vector<1x8x8xf32>
    %247 = vector.broadcast %245 : vector<2x8x1xf32> to vector<2x8x8xf32>
    %248 = vector.broadcast %246 : vector<1x8x8xf32> to vector<2x8x8xf32>
    %249 = arith.mulf %247, %248 : vector<2x8x8xf32>
    %cst_66 = arith.constant dense<0.000000e+00> : vector<2x8xf32>
    %250 = vector.multi_reduction <add>, %249, %cst_66 [1] : vector<2x8x8xf32> to vector<2x8xf32>
    %251 = vector.extract_strided_slice %194 {offsets = [0, 0], sizes = [2, 1], strides = [1, 1]} : vector<2x3xf32> to vector<2x1xf32>
    %252 = vector.broadcast %251 : vector<2x1xf32> to vector<2x8xf32>
    %253 = arith.mulf %252, %244 : vector<2x8xf32>
    %254 = vector.extract_strided_slice %194 {offsets = [0, 1], sizes = [2, 1], strides = [1, 1]} : vector<2x3xf32> to vector<2x1xf32>
    %255 = vector.broadcast %254 : vector<2x1xf32> to vector<2x8xf32>
    %256 = arith.mulf %255, %238 : vector<2x8xf32>
    %257 = arith.addf %253, %256 : vector<2x8xf32>
    %258 = vector.extract_strided_slice %194 {offsets = [0, 2], sizes = [2, 1], strides = [1, 1]} : vector<2x3xf32> to vector<2x1xf32>
    %259 = vector.broadcast %258 : vector<2x1xf32> to vector<2x8xf32>
    %260 = arith.mulf %259, %250 : vector<2x8xf32>
    %261 = arith.addf %257, %260 : vector<2x8xf32>
    %cst_67 = arith.constant 9.99999993E-9 : f32
    %262 = vector.broadcast %cst_67 : f32 to vector<2x8xf32>
    %263 = arith.maximumf %261, %262 : vector<2x8xf32>
    %264 = math.log %263 : vector<2x8xf32>
    %265 = vector.broadcast %207 : vector<2x1xf32> to vector<2x8xf32>
    %266 = arith.mulf %265, %264 : vector<2x8xf32>
    %267 = math.exp %266 : vector<2x8xf32>
    %cst_68 = arith.constant dense<0.000000e+00> : vector<2xf32>
    %268 = vector.multi_reduction <add>, %267, %cst_68 [1] : vector<2x8xf32> to vector<2xf32>
    %269 = vector.shape_cast %268 : vector<2xf32> to vector<2x1xf32>
    %cst_69 = arith.constant 9.99999993E-9 : f32
    %270 = vector.broadcast %cst_69 : f32 to vector<2x1xf32>
    %271 = arith.addf %269, %270 : vector<2x1xf32>
    %272 = vector.broadcast %271 : vector<2x1xf32> to vector<2x8xf32>
    %273 = arith.divf %267, %272 : vector<2x8xf32>
    %274 = vector.extract_strided_slice %273 {offsets = [0, 0], sizes = [1, 8], strides = [1, 1]} : vector<2x8xf32> to vector<1x8xf32>
    %c0_70 = arith.constant 0 : index
    %c16 = arith.constant 16 : index
    %275 = vector.load %arg6[%c0_70, %c16] : memref<1x128xf32, #tpu.memory_space<vmem>>, vector<1x8xf32>
    tpu.vector_store %arg6[%c0_70, %c16], %274 {strides = array<i32>} : memref<1x128xf32, #tpu.memory_space<vmem>>, vector<1x8xf32>,
    %276 = vector.extract_strided_slice %273 {offsets = [1, 0], sizes = [1, 8], strides = [1, 1]} : vector<2x8xf32> to vector<1x8xf32>
    %c0_71 = arith.constant 0 : index
    %c24 = arith.constant 24 : index
    %277 = vector.load %arg6[%c0_71, %c24] : memref<1x128xf32, #tpu.memory_space<vmem>>, vector<1x8xf32>
    tpu.vector_store %arg6[%c0_71, %c24], %276 {strides = array<i32>} : memref<1x128xf32, #tpu.memory_space<vmem>>, vector<1x8xf32>,
    %278 = vector.extract_strided_slice %5 {offsets = [4, 0], sizes = [2, 22], strides = [1, 1]} : vector<16x22xf32> to vector<2x22xf32>
    %279 = vector.extract_strided_slice %278 {offsets = [0, 0], sizes = [2, 16], strides = [1, 1]} : vector<2x22xf32> to vector<2x16xf32>
    %280 = vector.extract_strided_slice %278 {offsets = [0, 16], sizes = [2, 1], strides = [1, 1]} : vector<2x22xf32> to vector<2x1xf32>
    %cst_72 = arith.constant 0.000000e+00 : f32
    %281 = vector.broadcast %cst_72 : f32 to vector<2x1xf32>
    %282 = arith.maximumf %280, %281 : vector<2x1xf32>
    %283 = math.absf %280 : vector<2x1xf32>
    %cst_73 = arith.constant 0.000000e+00 : f32
    %284 = vector.broadcast %cst_73 : f32 to vector<2x1xf32>
    %285 = arith.subf %284, %283 : vector<2x1xf32>
    %286 = math.exp %285 : vector<2x1xf32>
    %cst_74 = arith.constant 1.000000e+00 : f32
    %287 = vector.broadcast %cst_74 : f32 to vector<2x1xf32>
    %288 = arith.addf %287, %286 : vector<2x1xf32>
    %289 = math.log %288 : vector<2x1xf32>
    %290 = arith.addf %282, %289 : vector<2x1xf32>
    %291 = vector.extract_strided_slice %278 {offsets = [0, 17], sizes = [2, 1], strides = [1, 1]} : vector<2x22xf32> to vector<2x1xf32>
    %cst_75 = arith.constant 0.000000e+00 : f32
    %292 = vector.broadcast %cst_75 : f32 to vector<2x1xf32>
    %293 = arith.subf %292, %291 : vector<2x1xf32>
    %294 = math.exp %293 : vector<2x1xf32>
    %cst_76 = arith.constant 1.000000e+00 : f32
    %295 = vector.broadcast %cst_76 : f32 to vector<2x1xf32>
    %296 = arith.addf %295, %294 : vector<2x1xf32>
    %cst_77 = arith.constant 1.000000e+00 : f32
    %297 = vector.broadcast %cst_77 : f32 to vector<2x1xf32>
    %298 = arith.divf %297, %296 : vector<2x1xf32>
    %299 = vector.extract_strided_slice %278 {offsets = [0, 18], sizes = [2, 3], strides = [1, 1]} : vector<2x22xf32> to vector<2x3xf32>
    %cst_78 = arith.constant 0.000000e+00 : f32
    %300 = vector.broadcast %cst_78 : f32 to vector<2x3xf32>
    %301 = arith.maximumf %299, %300 : vector<2x3xf32>
    %302 = math.absf %299 : vector<2x3xf32>
    %cst_79 = arith.constant 0.000000e+00 : f32
    %303 = vector.broadcast %cst_79 : f32 to vector<2x3xf32>
    %304 = arith.subf %303, %302 : vector<2x3xf32>
    %305 = math.exp %304 : vector<2x3xf32>
    %cst_80 = arith.constant 1.000000e+00 : f32
    %306 = vector.broadcast %cst_80 : f32 to vector<2x3xf32>
    %307 = arith.addf %306, %305 : vector<2x3xf32>
    %308 = math.log %307 : vector<2x3xf32>
    %309 = arith.addf %301, %308 : vector<2x3xf32>
    %cst_81 = arith.constant dense<0xFF800000> : vector<2xf32>
    %310 = vector.multi_reduction <maximumf>, %309, %cst_81 [1] : vector<2x3xf32> to vector<2xf32>
    %311 = vector.shape_cast %310 : vector<2xf32> to vector<2x1xf32>
    %312 = vector.broadcast %311 : vector<2x1xf32> to vector<2x3xf32>
    %313 = arith.subf %309, %312 : vector<2x3xf32>
    %314 = math.exp %313 : vector<2x3xf32>
    %cst_82 = arith.constant dense<0.000000e+00> : vector<2xf32>
    %315 = vector.multi_reduction <add>, %314, %cst_82 [1] : vector<2x3xf32> to vector<2xf32>
    %316 = vector.shape_cast %315 : vector<2xf32> to vector<2x1xf32>
    %317 = vector.broadcast %316 : vector<2x1xf32> to vector<2x3xf32>
    %318 = arith.divf %314, %317 : vector<2x3xf32>
    %319 = vector.extract_strided_slice %278 {offsets = [0, 21], sizes = [2, 1], strides = [1, 1]} : vector<2x22xf32> to vector<2x1xf32>
    %cst_83 = arith.constant 0.000000e+00 : f32
    %320 = vector.broadcast %cst_83 : f32 to vector<2x1xf32>
    %321 = arith.maximumf %319, %320 : vector<2x1xf32>
    %322 = math.absf %319 : vector<2x1xf32>
    %cst_84 = arith.constant 0.000000e+00 : f32
    %323 = vector.broadcast %cst_84 : f32 to vector<2x1xf32>
    %324 = arith.subf %323, %322 : vector<2x1xf32>
    %325 = math.exp %324 : vector<2x1xf32>
    %cst_85 = arith.constant 1.000000e+00 : f32
    %326 = vector.broadcast %cst_85 : f32 to vector<2x1xf32>
    %327 = arith.addf %326, %325 : vector<2x1xf32>
    %328 = math.log %327 : vector<2x1xf32>
    %329 = arith.addf %321, %328 : vector<2x1xf32>
    %cst_86 = arith.constant 1.000000e+00 : f32
    %330 = vector.broadcast %cst_86 : f32 to vector<2x1xf32>
    %331 = arith.addf %330, %329 : vector<2x1xf32>
    %332 = vector.shape_cast %279 : vector<2x16xf32> to vector<2x1x16xf32>
    %333 = vector.broadcast %332 : vector<2x1x16xf32> to vector<2x8x16xf32>
    %334 = arith.mulf %333, %6 : vector<2x8x16xf32>
    %cst_87 = arith.constant dense<0.000000e+00> : vector<2x8xf32>
    %335 = vector.multi_reduction <add>, %334, %cst_87 [2] : vector<2x8x16xf32> to vector<2x8xf32>
    %336 = arith.mulf %279, %279 : vector<2x16xf32>
    %cst_88 = arith.constant dense<0.000000e+00> : vector<2xf32>
    %337 = vector.multi_reduction <add>, %336, %cst_88 [1] : vector<2x16xf32> to vector<2xf32>
    %338 = vector.shape_cast %337 : vector<2xf32> to vector<2x1xf32>
    %339 = math.sqrt %338 : vector<2x1xf32>
    %340 = vector.broadcast %339 : vector<2x1xf32> to vector<2x8xf32>
    %341 = arith.mulf %340, %9 : vector<2x8xf32>
    %cst_89 = arith.constant 9.99999993E-9 : f32
    %342 = vector.broadcast %cst_89 : f32 to vector<2x8xf32>
    %343 = arith.addf %341, %342 : vector<2x8xf32>
    %344 = arith.divf %335, %343 : vector<2x8xf32>
    %345 = vector.broadcast %290 : vector<2x1xf32> to vector<2x8xf32>
    %346 = arith.mulf %345, %344 : vector<2x8xf32>
    %cst_90 = arith.constant dense<0xFF800000> : vector<2xf32>
    %347 = vector.multi_reduction <maximumf>, %346, %cst_90 [1] : vector<2x8xf32> to vector<2xf32>
    %348 = vector.shape_cast %347 : vector<2xf32> to vector<2x1xf32>
    %349 = vector.broadcast %348 : vector<2x1xf32> to vector<2x8xf32>
    %350 = arith.subf %346, %349 : vector<2x8xf32>
    %351 = math.exp %350 : vector<2x8xf32>
    %cst_91 = arith.constant dense<0.000000e+00> : vector<2xf32>
    %352 = vector.multi_reduction <add>, %351, %cst_91 [1] : vector<2x8xf32> to vector<2xf32>
    %353 = vector.shape_cast %352 : vector<2xf32> to vector<2x1xf32>
    %354 = vector.broadcast %353 : vector<2x1xf32> to vector<2x8xf32>
    %355 = arith.divf %351, %354 : vector<2x8xf32>
    %356 = vector.broadcast %298 : vector<2x1xf32> to vector<2x8xf32>
    %357 = arith.mulf %356, %355 : vector<2x8xf32>
    %cst_92 = arith.constant 1.000000e+00 : f32
    %358 = vector.broadcast %cst_92 : f32 to vector<2x1xf32>
    %359 = arith.subf %358, %298 : vector<2x1xf32>
    %360 = vector.broadcast %359 : vector<2x1xf32> to vector<2x8xf32>
    %361 = arith.mulf %360, %273 : vector<2x8xf32>
    %362 = arith.addf %357, %361 : vector<2x8xf32>
    %363 = vector.shape_cast %362 : vector<2x8xf32> to vector<2x8x1xf32>
    %364 = vector.shape_cast %20 : vector<8x8xf32> to vector<1x8x8xf32>
    %365 = vector.broadcast %363 : vector<2x8x1xf32> to vector<2x8x8xf32>
    %366 = vector.broadcast %364 : vector<1x8x8xf32> to vector<2x8x8xf32>
    %367 = arith.mulf %365, %366 : vector<2x8x8xf32>
    %cst_93 = arith.constant dense<0.000000e+00> : vector<2x8xf32>
    %368 = vector.multi_reduction <add>, %367, %cst_93 [1] : vector<2x8x8xf32> to vector<2x8xf32>
    %369 = vector.shape_cast %362 : vector<2x8xf32> to vector<2x8x1xf32>
    %370 = vector.shape_cast %28 : vector<8x8xf32> to vector<1x8x8xf32>
    %371 = vector.broadcast %369 : vector<2x8x1xf32> to vector<2x8x8xf32>
    %372 = vector.broadcast %370 : vector<1x8x8xf32> to vector<2x8x8xf32>
    %373 = arith.mulf %371, %372 : vector<2x8x8xf32>
    %cst_94 = arith.constant dense<0.000000e+00> : vector<2x8xf32>
    %374 = vector.multi_reduction <add>, %373, %cst_94 [1] : vector<2x8x8xf32> to vector<2x8xf32>
    %375 = vector.extract_strided_slice %318 {offsets = [0, 0], sizes = [2, 1], strides = [1, 1]} : vector<2x3xf32> to vector<2x1xf32>
    %376 = vector.broadcast %375 : vector<2x1xf32> to vector<2x8xf32>
    %377 = arith.mulf %376, %368 : vector<2x8xf32>
    %378 = vector.extract_strided_slice %318 {offsets = [0, 1], sizes = [2, 1], strides = [1, 1]} : vector<2x3xf32> to vector<2x1xf32>
    %379 = vector.broadcast %378 : vector<2x1xf32> to vector<2x8xf32>
    %380 = arith.mulf %379, %362 : vector<2x8xf32>
    %381 = arith.addf %377, %380 : vector<2x8xf32>
    %382 = vector.extract_strided_slice %318 {offsets = [0, 2], sizes = [2, 1], strides = [1, 1]} : vector<2x3xf32> to vector<2x1xf32>
    %383 = vector.broadcast %382 : vector<2x1xf32> to vector<2x8xf32>
    %384 = arith.mulf %383, %374 : vector<2x8xf32>
    %385 = arith.addf %381, %384 : vector<2x8xf32>
    %cst_95 = arith.constant 9.99999993E-9 : f32
    %386 = vector.broadcast %cst_95 : f32 to vector<2x8xf32>
    %387 = arith.maximumf %385, %386 : vector<2x8xf32>
    %388 = math.log %387 : vector<2x8xf32>
    %389 = vector.broadcast %331 : vector<2x1xf32> to vector<2x8xf32>
    %390 = arith.mulf %389, %388 : vector<2x8xf32>
    %391 = math.exp %390 : vector<2x8xf32>
    %cst_96 = arith.constant dense<0.000000e+00> : vector<2xf32>
    %392 = vector.multi_reduction <add>, %391, %cst_96 [1] : vector<2x8xf32> to vector<2xf32>
    %393 = vector.shape_cast %392 : vector<2xf32> to vector<2x1xf32>
    %cst_97 = arith.constant 9.99999993E-9 : f32
    %394 = vector.broadcast %cst_97 : f32 to vector<2x1xf32>
    %395 = arith.addf %393, %394 : vector<2x1xf32>
    %396 = vector.broadcast %395 : vector<2x1xf32> to vector<2x8xf32>
    %397 = arith.divf %391, %396 : vector<2x8xf32>
    %398 = vector.extract_strided_slice %397 {offsets = [0, 0], sizes = [1, 8], strides = [1, 1]} : vector<2x8xf32> to vector<1x8xf32>
    %c0_98 = arith.constant 0 : index
    %c32 = arith.constant 32 : index
    %399 = vector.load %arg6[%c0_98, %c32] : memref<1x128xf32, #tpu.memory_space<vmem>>, vector<1x8xf32>
    tpu.vector_store %arg6[%c0_98, %c32], %398 {strides = array<i32>} : memref<1x128xf32, #tpu.memory_space<vmem>>, vector<1x8xf32>,
    %400 = vector.extract_strided_slice %397 {offsets = [1, 0], sizes = [1, 8], strides = [1, 1]} : vector<2x8xf32> to vector<1x8xf32>
    %c0_99 = arith.constant 0 : index
    %c40 = arith.constant 40 : index
    %401 = vector.load %arg6[%c0_99, %c40] : memref<1x128xf32, #tpu.memory_space<vmem>>, vector<1x8xf32>
    tpu.vector_store %arg6[%c0_99, %c40], %400 {strides = array<i32>} : memref<1x128xf32, #tpu.memory_space<vmem>>, vector<1x8xf32>,
    %402 = vector.extract_strided_slice %5 {offsets = [6, 0], sizes = [2, 22], strides = [1, 1]} : vector<16x22xf32> to vector<2x22xf32>
    %403 = vector.extract_strided_slice %402 {offsets = [0, 0], sizes = [2, 16], strides = [1, 1]} : vector<2x22xf32> to vector<2x16xf32>
    %404 = vector.extract_strided_slice %402 {offsets = [0, 16], sizes = [2, 1], strides = [1, 1]} : vector<2x22xf32> to vector<2x1xf32>
    %cst_100 = arith.constant 0.000000e+00 : f32
    %405 = vector.broadcast %cst_100 : f32 to vector<2x1xf32>
    %406 = arith.maximumf %404, %405 : vector<2x1xf32>
    %407 = math.absf %404 : vector<2x1xf32>
    %cst_101 = arith.constant 0.000000e+00 : f32
    %408 = vector.broadcast %cst_101 : f32 to vector<2x1xf32>
    %409 = arith.subf %408, %407 : vector<2x1xf32>
    %410 = math.exp %409 : vector<2x1xf32>
    %cst_102 = arith.constant 1.000000e+00 : f32
    %411 = vector.broadcast %cst_102 : f32 to vector<2x1xf32>
    %412 = arith.addf %411, %410 : vector<2x1xf32>
    %413 = math.log %412 : vector<2x1xf32>
    %414 = arith.addf %406, %413 : vector<2x1xf32>
    %415 = vector.extract_strided_slice %402 {offsets = [0, 17], sizes = [2, 1], strides = [1, 1]} : vector<2x22xf32> to vector<2x1xf32>
    %cst_103 = arith.constant 0.000000e+00 : f32
    %416 = vector.broadcast %cst_103 : f32 to vector<2x1xf32>
    %417 = arith.subf %416, %415 : vector<2x1xf32>
    %418 = math.exp %417 : vector<2x1xf32>
    %cst_104 = arith.constant 1.000000e+00 : f32
    %419 = vector.broadcast %cst_104 : f32 to vector<2x1xf32>
    %420 = arith.addf %419, %418 : vector<2x1xf32>
    %cst_105 = arith.constant 1.000000e+00 : f32
    %421 = vector.broadcast %cst_105 : f32 to vector<2x1xf32>
    %422 = arith.divf %421, %420 : vector<2x1xf32>
    %423 = vector.extract_strided_slice %402 {offsets = [0, 18], sizes = [2, 3], strides = [1, 1]} : vector<2x22xf32> to vector<2x3xf32>
    %cst_106 = arith.constant 0.000000e+00 : f32
    %424 = vector.broadcast %cst_106 : f32 to vector<2x3xf32>
    %425 = arith.maximumf %423, %424 : vector<2x3xf32>
    %426 = math.absf %423 : vector<2x3xf32>
    %cst_107 = arith.constant 0.000000e+00 : f32
    %427 = vector.broadcast %cst_107 : f32 to vector<2x3xf32>
    %428 = arith.subf %427, %426 : vector<2x3xf32>
    %429 = math.exp %428 : vector<2x3xf32>
    %cst_108 = arith.constant 1.000000e+00 : f32
    %430 = vector.broadcast %cst_108 : f32 to vector<2x3xf32>
    %431 = arith.addf %430, %429 : vector<2x3xf32>
    %432 = math.log %431 : vector<2x3xf32>
    %433 = arith.addf %425, %432 : vector<2x3xf32>
    %cst_109 = arith.constant dense<0xFF800000> : vector<2xf32>
    %434 = vector.multi_reduction <maximumf>, %433, %cst_109 [1] : vector<2x3xf32> to vector<2xf32>
    %435 = vector.shape_cast %434 : vector<2xf32> to vector<2x1xf32>
    %436 = vector.broadcast %435 : vector<2x1xf32> to vector<2x3xf32>
    %437 = arith.subf %433, %436 : vector<2x3xf32>
    %438 = math.exp %437 : vector<2x3xf32>
    %cst_110 = arith.constant dense<0.000000e+00> : vector<2xf32>
    %439 = vector.multi_reduction <add>, %438, %cst_110 [1] : vector<2x3xf32> to vector<2xf32>
    %440 = vector.shape_cast %439 : vector<2xf32> to vector<2x1xf32>
    %441 = vector.broadcast %440 : vector<2x1xf32> to vector<2x3xf32>
    %442 = arith.divf %438, %441 : vector<2x3xf32>
    %443 = vector.extract_strided_slice %402 {offsets = [0, 21], sizes = [2, 1], strides = [1, 1]} : vector<2x22xf32> to vector<2x1xf32>
    %cst_111 = arith.constant 0.000000e+00 : f32
    %444 = vector.broadcast %cst_111 : f32 to vector<2x1xf32>
    %445 = arith.maximumf %443, %444 : vector<2x1xf32>
    %446 = math.absf %443 : vector<2x1xf32>
    %cst_112 = arith.constant 0.000000e+00 : f32
    %447 = vector.broadcast %cst_112 : f32 to vector<2x1xf32>
    %448 = arith.subf %447, %446 : vector<2x1xf32>
    %449 = math.exp %448 : vector<2x1xf32>
    %cst_113 = arith.constant 1.000000e+00 : f32
    %450 = vector.broadcast %cst_113 : f32 to vector<2x1xf32>
    %451 = arith.addf %450, %449 : vector<2x1xf32>
    %452 = math.log %451 : vector<2x1xf32>
    %453 = arith.addf %445, %452 : vector<2x1xf32>
    %cst_114 = arith.constant 1.000000e+00 : f32
    %454 = vector.broadcast %cst_114 : f32 to vector<2x1xf32>
    %455 = arith.addf %454, %453 : vector<2x1xf32>
    %456 = vector.shape_cast %403 : vector<2x16xf32> to vector<2x1x16xf32>
    %457 = vector.broadcast %456 : vector<2x1x16xf32> to vector<2x8x16xf32>
    %458 = arith.mulf %457, %6 : vector<2x8x16xf32>
    %cst_115 = arith.constant dense<0.000000e+00> : vector<2x8xf32>
    %459 = vector.multi_reduction <add>, %458, %cst_115 [2] : vector<2x8x16xf32> to vector<2x8xf32>
    %460 = arith.mulf %403, %403 : vector<2x16xf32>
    %cst_116 = arith.constant dense<0.000000e+00> : vector<2xf32>
    %461 = vector.multi_reduction <add>, %460, %cst_116 [1] : vector<2x16xf32> to vector<2xf32>
    %462 = vector.shape_cast %461 : vector<2xf32> to vector<2x1xf32>
    %463 = math.sqrt %462 : vector<2x1xf32>
    %464 = vector.broadcast %463 : vector<2x1xf32> to vector<2x8xf32>
    %465 = arith.mulf %464, %9 : vector<2x8xf32>
    %cst_117 = arith.constant 9.99999993E-9 : f32
    %466 = vector.broadcast %cst_117 : f32 to vector<2x8xf32>
    %467 = arith.addf %465, %466 : vector<2x8xf32>
    %468 = arith.divf %459, %467 : vector<2x8xf32>
    %469 = vector.broadcast %414 : vector<2x1xf32> to vector<2x8xf32>
    %470 = arith.mulf %469, %468 : vector<2x8xf32>
    %cst_118 = arith.constant dense<0xFF800000> : vector<2xf32>
    %471 = vector.multi_reduction <maximumf>, %470, %cst_118 [1] : vector<2x8xf32> to vector<2xf32>
    %472 = vector.shape_cast %471 : vector<2xf32> to vector<2x1xf32>
    %473 = vector.broadcast %472 : vector<2x1xf32> to vector<2x8xf32>
    %474 = arith.subf %470, %473 : vector<2x8xf32>
    %475 = math.exp %474 : vector<2x8xf32>
    %cst_119 = arith.constant dense<0.000000e+00> : vector<2xf32>
    %476 = vector.multi_reduction <add>, %475, %cst_119 [1] : vector<2x8xf32> to vector<2xf32>
    %477 = vector.shape_cast %476 : vector<2xf32> to vector<2x1xf32>
    %478 = vector.broadcast %477 : vector<2x1xf32> to vector<2x8xf32>
    %479 = arith.divf %475, %478 : vector<2x8xf32>
    %480 = vector.broadcast %422 : vector<2x1xf32> to vector<2x8xf32>
    %481 = arith.mulf %480, %479 : vector<2x8xf32>
    %cst_120 = arith.constant 1.000000e+00 : f32
    %482 = vector.broadcast %cst_120 : f32 to vector<2x1xf32>
    %483 = arith.subf %482, %422 : vector<2x1xf32>
    %484 = vector.broadcast %483 : vector<2x1xf32> to vector<2x8xf32>
    %485 = arith.mulf %484, %397 : vector<2x8xf32>
    %486 = arith.addf %481, %485 : vector<2x8xf32>
    %487 = vector.shape_cast %486 : vector<2x8xf32> to vector<2x8x1xf32>
    %488 = vector.shape_cast %20 : vector<8x8xf32> to vector<1x8x8xf32>
    %489 = vector.broadcast %487 : vector<2x8x1xf32> to vector<2x8x8xf32>
    %490 = vector.broadcast %488 : vector<1x8x8xf32> to vector<2x8x8xf32>
    %491 = arith.mulf %489, %490 : vector<2x8x8xf32>
    %cst_121 = arith.constant dense<0.000000e+00> : vector<2x8xf32>
    %492 = vector.multi_reduction <add>, %491, %cst_121 [1] : vector<2x8x8xf32> to vector<2x8xf32>
    %493 = vector.shape_cast %486 : vector<2x8xf32> to vector<2x8x1xf32>
    %494 = vector.shape_cast %28 : vector<8x8xf32> to vector<1x8x8xf32>
    %495 = vector.broadcast %493 : vector<2x8x1xf32> to vector<2x8x8xf32>
    %496 = vector.broadcast %494 : vector<1x8x8xf32> to vector<2x8x8xf32>
    %497 = arith.mulf %495, %496 : vector<2x8x8xf32>
    %cst_122 = arith.constant dense<0.000000e+00> : vector<2x8xf32>
    %498 = vector.multi_reduction <add>, %497, %cst_122 [1] : vector<2x8x8xf32> to vector<2x8xf32>
    %499 = vector.extract_strided_slice %442 {offsets = [0, 0], sizes = [2, 1], strides = [1, 1]} : vector<2x3xf32> to vector<2x1xf32>
    %500 = vector.broadcast %499 : vector<2x1xf32> to vector<2x8xf32>
    %501 = arith.mulf %500, %492 : vector<2x8xf32>
    %502 = vector.extract_strided_slice %442 {offsets = [0, 1], sizes = [2, 1], strides = [1, 1]} : vector<2x3xf32> to vector<2x1xf32>
    %503 = vector.broadcast %502 : vector<2x1xf32> to vector<2x8xf32>
    %504 = arith.mulf %503, %486 : vector<2x8xf32>
    %505 = arith.addf %501, %504 : vector<2x8xf32>
    %506 = vector.extract_strided_slice %442 {offsets = [0, 2], sizes = [2, 1], strides = [1, 1]} : vector<2x3xf32> to vector<2x1xf32>
    %507 = vector.broadcast %506 : vector<2x1xf32> to vector<2x8xf32>
    %508 = arith.mulf %507, %498 : vector<2x8xf32>
    %509 = arith.addf %505, %508 : vector<2x8xf32>
    %cst_123 = arith.constant 9.99999993E-9 : f32
    %510 = vector.broadcast %cst_123 : f32 to vector<2x8xf32>
    %511 = arith.maximumf %509, %510 : vector<2x8xf32>
    %512 = math.log %511 : vector<2x8xf32>
    %513 = vector.broadcast %455 : vector<2x1xf32> to vector<2x8xf32>
    %514 = arith.mulf %513, %512 : vector<2x8xf32>
    %515 = math.exp %514 : vector<2x8xf32>
    %cst_124 = arith.constant dense<0.000000e+00> : vector<2xf32>
    %516 = vector.multi_reduction <add>, %515, %cst_124 [1] : vector<2x8xf32> to vector<2xf32>
    %517 = vector.shape_cast %516 : vector<2xf32> to vector<2x1xf32>
    %cst_125 = arith.constant 9.99999993E-9 : f32
    %518 = vector.broadcast %cst_125 : f32 to vector<2x1xf32>
    %519 = arith.addf %517, %518 : vector<2x1xf32>
    %520 = vector.broadcast %519 : vector<2x1xf32> to vector<2x8xf32>
    %521 = arith.divf %515, %520 : vector<2x8xf32>
    %522 = vector.extract_strided_slice %521 {offsets = [0, 0], sizes = [1, 8], strides = [1, 1]} : vector<2x8xf32> to vector<1x8xf32>
    %c0_126 = arith.constant 0 : index
    %c48 = arith.constant 48 : index
    %523 = vector.load %arg6[%c0_126, %c48] : memref<1x128xf32, #tpu.memory_space<vmem>>, vector<1x8xf32>
    tpu.vector_store %arg6[%c0_126, %c48], %522 {strides = array<i32>} : memref<1x128xf32, #tpu.memory_space<vmem>>, vector<1x8xf32>,
    %524 = vector.extract_strided_slice %521 {offsets = [1, 0], sizes = [1, 8], strides = [1, 1]} : vector<2x8xf32> to vector<1x8xf32>
    %c0_127 = arith.constant 0 : index
    %c56 = arith.constant 56 : index
    %525 = vector.load %arg6[%c0_127, %c56] : memref<1x128xf32, #tpu.memory_space<vmem>>, vector<1x8xf32>
    tpu.vector_store %arg6[%c0_127, %c56], %524 {strides = array<i32>} : memref<1x128xf32, #tpu.memory_space<vmem>>, vector<1x8xf32>,
    %526 = vector.extract_strided_slice %5 {offsets = [8, 0], sizes = [2, 22], strides = [1, 1]} : vector<16x22xf32> to vector<2x22xf32>
    %527 = vector.extract_strided_slice %526 {offsets = [0, 0], sizes = [2, 16], strides = [1, 1]} : vector<2x22xf32> to vector<2x16xf32>
    %528 = vector.extract_strided_slice %526 {offsets = [0, 16], sizes = [2, 1], strides = [1, 1]} : vector<2x22xf32> to vector<2x1xf32>
    %cst_128 = arith.constant 0.000000e+00 : f32
    %529 = vector.broadcast %cst_128 : f32 to vector<2x1xf32>
    %530 = arith.maximumf %528, %529 : vector<2x1xf32>
    %531 = math.absf %528 : vector<2x1xf32>
    %cst_129 = arith.constant 0.000000e+00 : f32
    %532 = vector.broadcast %cst_129 : f32 to vector<2x1xf32>
    %533 = arith.subf %532, %531 : vector<2x1xf32>
    %534 = math.exp %533 : vector<2x1xf32>
    %cst_130 = arith.constant 1.000000e+00 : f32
    %535 = vector.broadcast %cst_130 : f32 to vector<2x1xf32>
    %536 = arith.addf %535, %534 : vector<2x1xf32>
    %537 = math.log %536 : vector<2x1xf32>
    %538 = arith.addf %530, %537 : vector<2x1xf32>
    %539 = vector.extract_strided_slice %526 {offsets = [0, 17], sizes = [2, 1], strides = [1, 1]} : vector<2x22xf32> to vector<2x1xf32>
    %cst_131 = arith.constant 0.000000e+00 : f32
    %540 = vector.broadcast %cst_131 : f32 to vector<2x1xf32>
    %541 = arith.subf %540, %539 : vector<2x1xf32>
    %542 = math.exp %541 : vector<2x1xf32>
    %cst_132 = arith.constant 1.000000e+00 : f32
    %543 = vector.broadcast %cst_132 : f32 to vector<2x1xf32>
    %544 = arith.addf %543, %542 : vector<2x1xf32>
    %cst_133 = arith.constant 1.000000e+00 : f32
    %545 = vector.broadcast %cst_133 : f32 to vector<2x1xf32>
    %546 = arith.divf %545, %544 : vector<2x1xf32>
    %547 = vector.extract_strided_slice %526 {offsets = [0, 18], sizes = [2, 3], strides = [1, 1]} : vector<2x22xf32> to vector<2x3xf32>
    %cst_134 = arith.constant 0.000000e+00 : f32
    %548 = vector.broadcast %cst_134 : f32 to vector<2x3xf32>
    %549 = arith.maximumf %547, %548 : vector<2x3xf32>
    %550 = math.absf %547 : vector<2x3xf32>
    %cst_135 = arith.constant 0.000000e+00 : f32
    %551 = vector.broadcast %cst_135 : f32 to vector<2x3xf32>
    %552 = arith.subf %551, %550 : vector<2x3xf32>
    %553 = math.exp %552 : vector<2x3xf32>
    %cst_136 = arith.constant 1.000000e+00 : f32
    %554 = vector.broadcast %cst_136 : f32 to vector<2x3xf32>
    %555 = arith.addf %554, %553 : vector<2x3xf32>
    %556 = math.log %555 : vector<2x3xf32>
    %557 = arith.addf %549, %556 : vector<2x3xf32>
    %cst_137 = arith.constant dense<0xFF800000> : vector<2xf32>
    %558 = vector.multi_reduction <maximumf>, %557, %cst_137 [1] : vector<2x3xf32> to vector<2xf32>
    %559 = vector.shape_cast %558 : vector<2xf32> to vector<2x1xf32>
    %560 = vector.broadcast %559 : vector<2x1xf32> to vector<2x3xf32>
    %561 = arith.subf %557, %560 : vector<2x3xf32>
    %562 = math.exp %561 : vector<2x3xf32>
    %cst_138 = arith.constant dense<0.000000e+00> : vector<2xf32>
    %563 = vector.multi_reduction <add>, %562, %cst_138 [1] : vector<2x3xf32> to vector<2xf32>
    %564 = vector.shape_cast %563 : vector<2xf32> to vector<2x1xf32>
    %565 = vector.broadcast %564 : vector<2x1xf32> to vector<2x3xf32>
    %566 = arith.divf %562, %565 : vector<2x3xf32>
    %567 = vector.extract_strided_slice %526 {offsets = [0, 21], sizes = [2, 1], strides = [1, 1]} : vector<2x22xf32> to vector<2x1xf32>
    %cst_139 = arith.constant 0.000000e+00 : f32
    %568 = vector.broadcast %cst_139 : f32 to vector<2x1xf32>
    %569 = arith.maximumf %567, %568 : vector<2x1xf32>
    %570 = math.absf %567 : vector<2x1xf32>
    %cst_140 = arith.constant 0.000000e+00 : f32
    %571 = vector.broadcast %cst_140 : f32 to vector<2x1xf32>
    %572 = arith.subf %571, %570 : vector<2x1xf32>
    %573 = math.exp %572 : vector<2x1xf32>
    %cst_141 = arith.constant 1.000000e+00 : f32
    %574 = vector.broadcast %cst_141 : f32 to vector<2x1xf32>
    %575 = arith.addf %574, %573 : vector<2x1xf32>
    %576 = math.log %575 : vector<2x1xf32>
    %577 = arith.addf %569, %576 : vector<2x1xf32>
    %cst_142 = arith.constant 1.000000e+00 : f32
    %578 = vector.broadcast %cst_142 : f32 to vector<2x1xf32>
    %579 = arith.addf %578, %577 : vector<2x1xf32>
    %580 = vector.shape_cast %527 : vector<2x16xf32> to vector<2x1x16xf32>
    %581 = vector.broadcast %580 : vector<2x1x16xf32> to vector<2x8x16xf32>
    %582 = arith.mulf %581, %6 : vector<2x8x16xf32>
    %cst_143 = arith.constant dense<0.000000e+00> : vector<2x8xf32>
    %583 = vector.multi_reduction <add>, %582, %cst_143 [2] : vector<2x8x16xf32> to vector<2x8xf32>
    %584 = arith.mulf %527, %527 : vector<2x16xf32>
    %cst_144 = arith.constant dense<0.000000e+00> : vector<2xf32>
    %585 = vector.multi_reduction <add>, %584, %cst_144 [1] : vector<2x16xf32> to vector<2xf32>
    %586 = vector.shape_cast %585 : vector<2xf32> to vector<2x1xf32>
    %587 = math.sqrt %586 : vector<2x1xf32>
    %588 = vector.broadcast %587 : vector<2x1xf32> to vector<2x8xf32>
    %589 = arith.mulf %588, %9 : vector<2x8xf32>
    %cst_145 = arith.constant 9.99999993E-9 : f32
    %590 = vector.broadcast %cst_145 : f32 to vector<2x8xf32>
    %591 = arith.addf %589, %590 : vector<2x8xf32>
    %592 = arith.divf %583, %591 : vector<2x8xf32>
    %593 = vector.broadcast %538 : vector<2x1xf32> to vector<2x8xf32>
    %594 = arith.mulf %593, %592 : vector<2x8xf32>
    %cst_146 = arith.constant dense<0xFF800000> : vector<2xf32>
    %595 = vector.multi_reduction <maximumf>, %594, %cst_146 [1] : vector<2x8xf32> to vector<2xf32>
    %596 = vector.shape_cast %595 : vector<2xf32> to vector<2x1xf32>
    %597 = vector.broadcast %596 : vector<2x1xf32> to vector<2x8xf32>
    %598 = arith.subf %594, %597 : vector<2x8xf32>
    %599 = math.exp %598 : vector<2x8xf32>
    %cst_147 = arith.constant dense<0.000000e+00> : vector<2xf32>
    %600 = vector.multi_reduction <add>, %599, %cst_147 [1] : vector<2x8xf32> to vector<2xf32>
    %601 = vector.shape_cast %600 : vector<2xf32> to vector<2x1xf32>
    %602 = vector.broadcast %601 : vector<2x1xf32> to vector<2x8xf32>
    %603 = arith.divf %599, %602 : vector<2x8xf32>
    %604 = vector.broadcast %546 : vector<2x1xf32> to vector<2x8xf32>
    %605 = arith.mulf %604, %603 : vector<2x8xf32>
    %cst_148 = arith.constant 1.000000e+00 : f32
    %606 = vector.broadcast %cst_148 : f32 to vector<2x1xf32>
    %607 = arith.subf %606, %546 : vector<2x1xf32>
    %608 = vector.broadcast %607 : vector<2x1xf32> to vector<2x8xf32>
    %609 = arith.mulf %608, %521 : vector<2x8xf32>
    %610 = arith.addf %605, %609 : vector<2x8xf32>
    %611 = vector.shape_cast %610 : vector<2x8xf32> to vector<2x8x1xf32>
    %612 = vector.shape_cast %20 : vector<8x8xf32> to vector<1x8x8xf32>
    %613 = vector.broadcast %611 : vector<2x8x1xf32> to vector<2x8x8xf32>
    %614 = vector.broadcast %612 : vector<1x8x8xf32> to vector<2x8x8xf32>
    %615 = arith.mulf %613, %614 : vector<2x8x8xf32>
    %cst_149 = arith.constant dense<0.000000e+00> : vector<2x8xf32>
    %616 = vector.multi_reduction <add>, %615, %cst_149 [1] : vector<2x8x8xf32> to vector<2x8xf32>
    %617 = vector.shape_cast %610 : vector<2x8xf32> to vector<2x8x1xf32>
    %618 = vector.shape_cast %28 : vector<8x8xf32> to vector<1x8x8xf32>
    %619 = vector.broadcast %617 : vector<2x8x1xf32> to vector<2x8x8xf32>
    %620 = vector.broadcast %618 : vector<1x8x8xf32> to vector<2x8x8xf32>
    %621 = arith.mulf %619, %620 : vector<2x8x8xf32>
    %cst_150 = arith.constant dense<0.000000e+00> : vector<2x8xf32>
    %622 = vector.multi_reduction <add>, %621, %cst_150 [1] : vector<2x8x8xf32> to vector<2x8xf32>
    %623 = vector.extract_strided_slice %566 {offsets = [0, 0], sizes = [2, 1], strides = [1, 1]} : vector<2x3xf32> to vector<2x1xf32>
    %624 = vector.broadcast %623 : vector<2x1xf32> to vector<2x8xf32>
    %625 = arith.mulf %624, %616 : vector<2x8xf32>
    %626 = vector.extract_strided_slice %566 {offsets = [0, 1], sizes = [2, 1], strides = [1, 1]} : vector<2x3xf32> to vector<2x1xf32>
    %627 = vector.broadcast %626 : vector<2x1xf32> to vector<2x8xf32>
    %628 = arith.mulf %627, %610 : vector<2x8xf32>
    %629 = arith.addf %625, %628 : vector<2x8xf32>
    %630 = vector.extract_strided_slice %566 {offsets = [0, 2], sizes = [2, 1], strides = [1, 1]} : vector<2x3xf32> to vector<2x1xf32>
    %631 = vector.broadcast %630 : vector<2x1xf32> to vector<2x8xf32>
    %632 = arith.mulf %631, %622 : vector<2x8xf32>
    %633 = arith.addf %629, %632 : vector<2x8xf32>
    %cst_151 = arith.constant 9.99999993E-9 : f32
    %634 = vector.broadcast %cst_151 : f32 to vector<2x8xf32>
    %635 = arith.maximumf %633, %634 : vector<2x8xf32>
    %636 = math.log %635 : vector<2x8xf32>
    %637 = vector.broadcast %579 : vector<2x1xf32> to vector<2x8xf32>
    %638 = arith.mulf %637, %636 : vector<2x8xf32>
    %639 = math.exp %638 : vector<2x8xf32>
    %cst_152 = arith.constant dense<0.000000e+00> : vector<2xf32>
    %640 = vector.multi_reduction <add>, %639, %cst_152 [1] : vector<2x8xf32> to vector<2xf32>
    %641 = vector.shape_cast %640 : vector<2xf32> to vector<2x1xf32>
    %cst_153 = arith.constant 9.99999993E-9 : f32
    %642 = vector.broadcast %cst_153 : f32 to vector<2x1xf32>
    %643 = arith.addf %641, %642 : vector<2x1xf32>
    %644 = vector.broadcast %643 : vector<2x1xf32> to vector<2x8xf32>
    %645 = arith.divf %639, %644 : vector<2x8xf32>
    %646 = vector.extract_strided_slice %645 {offsets = [0, 0], sizes = [1, 8], strides = [1, 1]} : vector<2x8xf32> to vector<1x8xf32>
    %c0_154 = arith.constant 0 : index
    %c64 = arith.constant 64 : index
    %647 = vector.load %arg6[%c0_154, %c64] : memref<1x128xf32, #tpu.memory_space<vmem>>, vector<1x8xf32>
    tpu.vector_store %arg6[%c0_154, %c64], %646 {strides = array<i32>} : memref<1x128xf32, #tpu.memory_space<vmem>>, vector<1x8xf32>,
    %648 = vector.extract_strided_slice %645 {offsets = [1, 0], sizes = [1, 8], strides = [1, 1]} : vector<2x8xf32> to vector<1x8xf32>
    %c0_155 = arith.constant 0 : index
    %c72 = arith.constant 72 : index
    %649 = vector.load %arg6[%c0_155, %c72] : memref<1x128xf32, #tpu.memory_space<vmem>>, vector<1x8xf32>
    tpu.vector_store %arg6[%c0_155, %c72], %648 {strides = array<i32>} : memref<1x128xf32, #tpu.memory_space<vmem>>, vector<1x8xf32>,
    %650 = vector.extract_strided_slice %5 {offsets = [10, 0], sizes = [2, 22], strides = [1, 1]} : vector<16x22xf32> to vector<2x22xf32>
    %651 = vector.extract_strided_slice %650 {offsets = [0, 0], sizes = [2, 16], strides = [1, 1]} : vector<2x22xf32> to vector<2x16xf32>
    %652 = vector.extract_strided_slice %650 {offsets = [0, 16], sizes = [2, 1], strides = [1, 1]} : vector<2x22xf32> to vector<2x1xf32>
    %cst_156 = arith.constant 0.000000e+00 : f32
    %653 = vector.broadcast %cst_156 : f32 to vector<2x1xf32>
    %654 = arith.maximumf %652, %653 : vector<2x1xf32>
    %655 = math.absf %652 : vector<2x1xf32>
    %cst_157 = arith.constant 0.000000e+00 : f32
    %656 = vector.broadcast %cst_157 : f32 to vector<2x1xf32>
    %657 = arith.subf %656, %655 : vector<2x1xf32>
    %658 = math.exp %657 : vector<2x1xf32>
    %cst_158 = arith.constant 1.000000e+00 : f32
    %659 = vector.broadcast %cst_158 : f32 to vector<2x1xf32>
    %660 = arith.addf %659, %658 : vector<2x1xf32>
    %661 = math.log %660 : vector<2x1xf32>
    %662 = arith.addf %654, %661 : vector<2x1xf32>
    %663 = vector.extract_strided_slice %650 {offsets = [0, 17], sizes = [2, 1], strides = [1, 1]} : vector<2x22xf32> to vector<2x1xf32>
    %cst_159 = arith.constant 0.000000e+00 : f32
    %664 = vector.broadcast %cst_159 : f32 to vector<2x1xf32>
    %665 = arith.subf %664, %663 : vector<2x1xf32>
    %666 = math.exp %665 : vector<2x1xf32>
    %cst_160 = arith.constant 1.000000e+00 : f32
    %667 = vector.broadcast %cst_160 : f32 to vector<2x1xf32>
    %668 = arith.addf %667, %666 : vector<2x1xf32>
    %cst_161 = arith.constant 1.000000e+00 : f32
    %669 = vector.broadcast %cst_161 : f32 to vector<2x1xf32>
    %670 = arith.divf %669, %668 : vector<2x1xf32>
    %671 = vector.extract_strided_slice %650 {offsets = [0, 18], sizes = [2, 3], strides = [1, 1]} : vector<2x22xf32> to vector<2x3xf32>
    %cst_162 = arith.constant 0.000000e+00 : f32
    %672 = vector.broadcast %cst_162 : f32 to vector<2x3xf32>
    %673 = arith.maximumf %671, %672 : vector<2x3xf32>
    %674 = math.absf %671 : vector<2x3xf32>
    %cst_163 = arith.constant 0.000000e+00 : f32
    %675 = vector.broadcast %cst_163 : f32 to vector<2x3xf32>
    %676 = arith.subf %675, %674 : vector<2x3xf32>
    %677 = math.exp %676 : vector<2x3xf32>
    %cst_164 = arith.constant 1.000000e+00 : f32
    %678 = vector.broadcast %cst_164 : f32 to vector<2x3xf32>
    %679 = arith.addf %678, %677 : vector<2x3xf32>
    %680 = math.log %679 : vector<2x3xf32>
    %681 = arith.addf %673, %680 : vector<2x3xf32>
    %cst_165 = arith.constant dense<0xFF800000> : vector<2xf32>
    %682 = vector.multi_reduction <maximumf>, %681, %cst_165 [1] : vector<2x3xf32> to vector<2xf32>
    %683 = vector.shape_cast %682 : vector<2xf32> to vector<2x1xf32>
    %684 = vector.broadcast %683 : vector<2x1xf32> to vector<2x3xf32>
    %685 = arith.subf %681, %684 : vector<2x3xf32>
    %686 = math.exp %685 : vector<2x3xf32>
    %cst_166 = arith.constant dense<0.000000e+00> : vector<2xf32>
    %687 = vector.multi_reduction <add>, %686, %cst_166 [1] : vector<2x3xf32> to vector<2xf32>
    %688 = vector.shape_cast %687 : vector<2xf32> to vector<2x1xf32>
    %689 = vector.broadcast %688 : vector<2x1xf32> to vector<2x3xf32>
    %690 = arith.divf %686, %689 : vector<2x3xf32>
    %691 = vector.extract_strided_slice %650 {offsets = [0, 21], sizes = [2, 1], strides = [1, 1]} : vector<2x22xf32> to vector<2x1xf32>
    %cst_167 = arith.constant 0.000000e+00 : f32
    %692 = vector.broadcast %cst_167 : f32 to vector<2x1xf32>
    %693 = arith.maximumf %691, %692 : vector<2x1xf32>
    %694 = math.absf %691 : vector<2x1xf32>
    %cst_168 = arith.constant 0.000000e+00 : f32
    %695 = vector.broadcast %cst_168 : f32 to vector<2x1xf32>
    %696 = arith.subf %695, %694 : vector<2x1xf32>
    %697 = math.exp %696 : vector<2x1xf32>
    %cst_169 = arith.constant 1.000000e+00 : f32
    %698 = vector.broadcast %cst_169 : f32 to vector<2x1xf32>
    %699 = arith.addf %698, %697 : vector<2x1xf32>
    %700 = math.log %699 : vector<2x1xf32>
    %701 = arith.addf %693, %700 : vector<2x1xf32>
    %cst_170 = arith.constant 1.000000e+00 : f32
    %702 = vector.broadcast %cst_170 : f32 to vector<2x1xf32>
    %703 = arith.addf %702, %701 : vector<2x1xf32>
    %704 = vector.shape_cast %651 : vector<2x16xf32> to vector<2x1x16xf32>
    %705 = vector.broadcast %704 : vector<2x1x16xf32> to vector<2x8x16xf32>
    %706 = arith.mulf %705, %6 : vector<2x8x16xf32>
    %cst_171 = arith.constant dense<0.000000e+00> : vector<2x8xf32>
    %707 = vector.multi_reduction <add>, %706, %cst_171 [2] : vector<2x8x16xf32> to vector<2x8xf32>
    %708 = arith.mulf %651, %651 : vector<2x16xf32>
    %cst_172 = arith.constant dense<0.000000e+00> : vector<2xf32>
    %709 = vector.multi_reduction <add>, %708, %cst_172 [1] : vector<2x16xf32> to vector<2xf32>
    %710 = vector.shape_cast %709 : vector<2xf32> to vector<2x1xf32>
    %711 = math.sqrt %710 : vector<2x1xf32>
    %712 = vector.broadcast %711 : vector<2x1xf32> to vector<2x8xf32>
    %713 = arith.mulf %712, %9 : vector<2x8xf32>
    %cst_173 = arith.constant 9.99999993E-9 : f32
    %714 = vector.broadcast %cst_173 : f32 to vector<2x8xf32>
    %715 = arith.addf %713, %714 : vector<2x8xf32>
    %716 = arith.divf %707, %715 : vector<2x8xf32>
    %717 = vector.broadcast %662 : vector<2x1xf32> to vector<2x8xf32>
    %718 = arith.mulf %717, %716 : vector<2x8xf32>
    %cst_174 = arith.constant dense<0xFF800000> : vector<2xf32>
    %719 = vector.multi_reduction <maximumf>, %718, %cst_174 [1] : vector<2x8xf32> to vector<2xf32>
    %720 = vector.shape_cast %719 : vector<2xf32> to vector<2x1xf32>
    %721 = vector.broadcast %720 : vector<2x1xf32> to vector<2x8xf32>
    %722 = arith.subf %718, %721 : vector<2x8xf32>
    %723 = math.exp %722 : vector<2x8xf32>
    %cst_175 = arith.constant dense<0.000000e+00> : vector<2xf32>
    %724 = vector.multi_reduction <add>, %723, %cst_175 [1] : vector<2x8xf32> to vector<2xf32>
    %725 = vector.shape_cast %724 : vector<2xf32> to vector<2x1xf32>
    %726 = vector.broadcast %725 : vector<2x1xf32> to vector<2x8xf32>
    %727 = arith.divf %723, %726 : vector<2x8xf32>
    %728 = vector.broadcast %670 : vector<2x1xf32> to vector<2x8xf32>
    %729 = arith.mulf %728, %727 : vector<2x8xf32>
    %cst_176 = arith.constant 1.000000e+00 : f32
    %730 = vector.broadcast %cst_176 : f32 to vector<2x1xf32>
    %731 = arith.subf %730, %670 : vector<2x1xf32>
    %732 = vector.broadcast %731 : vector<2x1xf32> to vector<2x8xf32>
    %733 = arith.mulf %732, %645 : vector<2x8xf32>
    %734 = arith.addf %729, %733 : vector<2x8xf32>
    %735 = vector.shape_cast %734 : vector<2x8xf32> to vector<2x8x1xf32>
    %736 = vector.shape_cast %20 : vector<8x8xf32> to vector<1x8x8xf32>
    %737 = vector.broadcast %735 : vector<2x8x1xf32> to vector<2x8x8xf32>
    %738 = vector.broadcast %736 : vector<1x8x8xf32> to vector<2x8x8xf32>
    %739 = arith.mulf %737, %738 : vector<2x8x8xf32>
    %cst_177 = arith.constant dense<0.000000e+00> : vector<2x8xf32>
    %740 = vector.multi_reduction <add>, %739, %cst_177 [1] : vector<2x8x8xf32> to vector<2x8xf32>
    %741 = vector.shape_cast %734 : vector<2x8xf32> to vector<2x8x1xf32>
    %742 = vector.shape_cast %28 : vector<8x8xf32> to vector<1x8x8xf32>
    %743 = vector.broadcast %741 : vector<2x8x1xf32> to vector<2x8x8xf32>
    %744 = vector.broadcast %742 : vector<1x8x8xf32> to vector<2x8x8xf32>
    %745 = arith.mulf %743, %744 : vector<2x8x8xf32>
    %cst_178 = arith.constant dense<0.000000e+00> : vector<2x8xf32>
    %746 = vector.multi_reduction <add>, %745, %cst_178 [1] : vector<2x8x8xf32> to vector<2x8xf32>
    %747 = vector.extract_strided_slice %690 {offsets = [0, 0], sizes = [2, 1], strides = [1, 1]} : vector<2x3xf32> to vector<2x1xf32>
    %748 = vector.broadcast %747 : vector<2x1xf32> to vector<2x8xf32>
    %749 = arith.mulf %748, %740 : vector<2x8xf32>
    %750 = vector.extract_strided_slice %690 {offsets = [0, 1], sizes = [2, 1], strides = [1, 1]} : vector<2x3xf32> to vector<2x1xf32>
    %751 = vector.broadcast %750 : vector<2x1xf32> to vector<2x8xf32>
    %752 = arith.mulf %751, %734 : vector<2x8xf32>
    %753 = arith.addf %749, %752 : vector<2x8xf32>
    %754 = vector.extract_strided_slice %690 {offsets = [0, 2], sizes = [2, 1], strides = [1, 1]} : vector<2x3xf32> to vector<2x1xf32>
    %755 = vector.broadcast %754 : vector<2x1xf32> to vector<2x8xf32>
    %756 = arith.mulf %755, %746 : vector<2x8xf32>
    %757 = arith.addf %753, %756 : vector<2x8xf32>
    %cst_179 = arith.constant 9.99999993E-9 : f32
    %758 = vector.broadcast %cst_179 : f32 to vector<2x8xf32>
    %759 = arith.maximumf %757, %758 : vector<2x8xf32>
    %760 = math.log %759 : vector<2x8xf32>
    %761 = vector.broadcast %703 : vector<2x1xf32> to vector<2x8xf32>
    %762 = arith.mulf %761, %760 : vector<2x8xf32>
    %763 = math.exp %762 : vector<2x8xf32>
    %cst_180 = arith.constant dense<0.000000e+00> : vector<2xf32>
    %764 = vector.multi_reduction <add>, %763, %cst_180 [1] : vector<2x8xf32> to vector<2xf32>
    %765 = vector.shape_cast %764 : vector<2xf32> to vector<2x1xf32>
    %cst_181 = arith.constant 9.99999993E-9 : f32
    %766 = vector.broadcast %cst_181 : f32 to vector<2x1xf32>
    %767 = arith.addf %765, %766 : vector<2x1xf32>
    %768 = vector.broadcast %767 : vector<2x1xf32> to vector<2x8xf32>
    %769 = arith.divf %763, %768 : vector<2x8xf32>
    %770 = vector.extract_strided_slice %769 {offsets = [0, 0], sizes = [1, 8], strides = [1, 1]} : vector<2x8xf32> to vector<1x8xf32>
    %c0_182 = arith.constant 0 : index
    %c80 = arith.constant 80 : index
    %771 = vector.load %arg6[%c0_182, %c80] : memref<1x128xf32, #tpu.memory_space<vmem>>, vector<1x8xf32>
    tpu.vector_store %arg6[%c0_182, %c80], %770 {strides = array<i32>} : memref<1x128xf32, #tpu.memory_space<vmem>>, vector<1x8xf32>,
    %772 = vector.extract_strided_slice %769 {offsets = [1, 0], sizes = [1, 8], strides = [1, 1]} : vector<2x8xf32> to vector<1x8xf32>
    %c0_183 = arith.constant 0 : index
    %c88 = arith.constant 88 : index
    %773 = vector.load %arg6[%c0_183, %c88] : memref<1x128xf32, #tpu.memory_space<vmem>>, vector<1x8xf32>
    tpu.vector_store %arg6[%c0_183, %c88], %772 {strides = array<i32>} : memref<1x128xf32, #tpu.memory_space<vmem>>, vector<1x8xf32>,
    %774 = vector.extract_strided_slice %5 {offsets = [12, 0], sizes = [2, 22], strides = [1, 1]} : vector<16x22xf32> to vector<2x22xf32>
    %775 = vector.extract_strided_slice %774 {offsets = [0, 0], sizes = [2, 16], strides = [1, 1]} : vector<2x22xf32> to vector<2x16xf32>
    %776 = vector.extract_strided_slice %774 {offsets = [0, 16], sizes = [2, 1], strides = [1, 1]} : vector<2x22xf32> to vector<2x1xf32>
    %cst_184 = arith.constant 0.000000e+00 : f32
    %777 = vector.broadcast %cst_184 : f32 to vector<2x1xf32>
    %778 = arith.maximumf %776, %777 : vector<2x1xf32>
    %779 = math.absf %776 : vector<2x1xf32>
    %cst_185 = arith.constant 0.000000e+00 : f32
    %780 = vector.broadcast %cst_185 : f32 to vector<2x1xf32>
    %781 = arith.subf %780, %779 : vector<2x1xf32>
    %782 = math.exp %781 : vector<2x1xf32>
    %cst_186 = arith.constant 1.000000e+00 : f32
    %783 = vector.broadcast %cst_186 : f32 to vector<2x1xf32>
    %784 = arith.addf %783, %782 : vector<2x1xf32>
    %785 = math.log %784 : vector<2x1xf32>
    %786 = arith.addf %778, %785 : vector<2x1xf32>
    %787 = vector.extract_strided_slice %774 {offsets = [0, 17], sizes = [2, 1], strides = [1, 1]} : vector<2x22xf32> to vector<2x1xf32>
    %cst_187 = arith.constant 0.000000e+00 : f32
    %788 = vector.broadcast %cst_187 : f32 to vector<2x1xf32>
    %789 = arith.subf %788, %787 : vector<2x1xf32>
    %790 = math.exp %789 : vector<2x1xf32>
    %cst_188 = arith.constant 1.000000e+00 : f32
    %791 = vector.broadcast %cst_188 : f32 to vector<2x1xf32>
    %792 = arith.addf %791, %790 : vector<2x1xf32>
    %cst_189 = arith.constant 1.000000e+00 : f32
    %793 = vector.broadcast %cst_189 : f32 to vector<2x1xf32>
    %794 = arith.divf %793, %792 : vector<2x1xf32>
    %795 = vector.extract_strided_slice %774 {offsets = [0, 18], sizes = [2, 3], strides = [1, 1]} : vector<2x22xf32> to vector<2x3xf32>
    %cst_190 = arith.constant 0.000000e+00 : f32
    %796 = vector.broadcast %cst_190 : f32 to vector<2x3xf32>
    %797 = arith.maximumf %795, %796 : vector<2x3xf32>
    %798 = math.absf %795 : vector<2x3xf32>
    %cst_191 = arith.constant 0.000000e+00 : f32
    %799 = vector.broadcast %cst_191 : f32 to vector<2x3xf32>
    %800 = arith.subf %799, %798 : vector<2x3xf32>
    %801 = math.exp %800 : vector<2x3xf32>
    %cst_192 = arith.constant 1.000000e+00 : f32
    %802 = vector.broadcast %cst_192 : f32 to vector<2x3xf32>
    %803 = arith.addf %802, %801 : vector<2x3xf32>
    %804 = math.log %803 : vector<2x3xf32>
    %805 = arith.addf %797, %804 : vector<2x3xf32>
    %cst_193 = arith.constant dense<0xFF800000> : vector<2xf32>
    %806 = vector.multi_reduction <maximumf>, %805, %cst_193 [1] : vector<2x3xf32> to vector<2xf32>
    %807 = vector.shape_cast %806 : vector<2xf32> to vector<2x1xf32>
    %808 = vector.broadcast %807 : vector<2x1xf32> to vector<2x3xf32>
    %809 = arith.subf %805, %808 : vector<2x3xf32>
    %810 = math.exp %809 : vector<2x3xf32>
    %cst_194 = arith.constant dense<0.000000e+00> : vector<2xf32>
    %811 = vector.multi_reduction <add>, %810, %cst_194 [1] : vector<2x3xf32> to vector<2xf32>
    %812 = vector.shape_cast %811 : vector<2xf32> to vector<2x1xf32>
    %813 = vector.broadcast %812 : vector<2x1xf32> to vector<2x3xf32>
    %814 = arith.divf %810, %813 : vector<2x3xf32>
    %815 = vector.extract_strided_slice %774 {offsets = [0, 21], sizes = [2, 1], strides = [1, 1]} : vector<2x22xf32> to vector<2x1xf32>
    %cst_195 = arith.constant 0.000000e+00 : f32
    %816 = vector.broadcast %cst_195 : f32 to vector<2x1xf32>
    %817 = arith.maximumf %815, %816 : vector<2x1xf32>
    %818 = math.absf %815 : vector<2x1xf32>
    %cst_196 = arith.constant 0.000000e+00 : f32
    %819 = vector.broadcast %cst_196 : f32 to vector<2x1xf32>
    %820 = arith.subf %819, %818 : vector<2x1xf32>
    %821 = math.exp %820 : vector<2x1xf32>
    %cst_197 = arith.constant 1.000000e+00 : f32
    %822 = vector.broadcast %cst_197 : f32 to vector<2x1xf32>
    %823 = arith.addf %822, %821 : vector<2x1xf32>
    %824 = math.log %823 : vector<2x1xf32>
    %825 = arith.addf %817, %824 : vector<2x1xf32>
    %cst_198 = arith.constant 1.000000e+00 : f32
    %826 = vector.broadcast %cst_198 : f32 to vector<2x1xf32>
    %827 = arith.addf %826, %825 : vector<2x1xf32>
    %828 = vector.shape_cast %775 : vector<2x16xf32> to vector<2x1x16xf32>
    %829 = vector.broadcast %828 : vector<2x1x16xf32> to vector<2x8x16xf32>
    %830 = arith.mulf %829, %6 : vector<2x8x16xf32>
    %cst_199 = arith.constant dense<0.000000e+00> : vector<2x8xf32>
    %831 = vector.multi_reduction <add>, %830, %cst_199 [2] : vector<2x8x16xf32> to vector<2x8xf32>
    %832 = arith.mulf %775, %775 : vector<2x16xf32>
    %cst_200 = arith.constant dense<0.000000e+00> : vector<2xf32>
    %833 = vector.multi_reduction <add>, %832, %cst_200 [1] : vector<2x16xf32> to vector<2xf32>
    %834 = vector.shape_cast %833 : vector<2xf32> to vector<2x1xf32>
    %835 = math.sqrt %834 : vector<2x1xf32>
    %836 = vector.broadcast %835 : vector<2x1xf32> to vector<2x8xf32>
    %837 = arith.mulf %836, %9 : vector<2x8xf32>
    %cst_201 = arith.constant 9.99999993E-9 : f32
    %838 = vector.broadcast %cst_201 : f32 to vector<2x8xf32>
    %839 = arith.addf %837, %838 : vector<2x8xf32>
    %840 = arith.divf %831, %839 : vector<2x8xf32>
    %841 = vector.broadcast %786 : vector<2x1xf32> to vector<2x8xf32>
    %842 = arith.mulf %841, %840 : vector<2x8xf32>
    %cst_202 = arith.constant dense<0xFF800000> : vector<2xf32>
    %843 = vector.multi_reduction <maximumf>, %842, %cst_202 [1] : vector<2x8xf32> to vector<2xf32>
    %844 = vector.shape_cast %843 : vector<2xf32> to vector<2x1xf32>
    %845 = vector.broadcast %844 : vector<2x1xf32> to vector<2x8xf32>
    %846 = arith.subf %842, %845 : vector<2x8xf32>
    %847 = math.exp %846 : vector<2x8xf32>
    %cst_203 = arith.constant dense<0.000000e+00> : vector<2xf32>
    %848 = vector.multi_reduction <add>, %847, %cst_203 [1] : vector<2x8xf32> to vector<2xf32>
    %849 = vector.shape_cast %848 : vector<2xf32> to vector<2x1xf32>
    %850 = vector.broadcast %849 : vector<2x1xf32> to vector<2x8xf32>
    %851 = arith.divf %847, %850 : vector<2x8xf32>
    %852 = vector.broadcast %794 : vector<2x1xf32> to vector<2x8xf32>
    %853 = arith.mulf %852, %851 : vector<2x8xf32>
    %cst_204 = arith.constant 1.000000e+00 : f32
    %854 = vector.broadcast %cst_204 : f32 to vector<2x1xf32>
    %855 = arith.subf %854, %794 : vector<2x1xf32>
    %856 = vector.broadcast %855 : vector<2x1xf32> to vector<2x8xf32>
    %857 = arith.mulf %856, %769 : vector<2x8xf32>
    %858 = arith.addf %853, %857 : vector<2x8xf32>
    %859 = vector.shape_cast %858 : vector<2x8xf32> to vector<2x8x1xf32>
    %860 = vector.shape_cast %20 : vector<8x8xf32> to vector<1x8x8xf32>
    %861 = vector.broadcast %859 : vector<2x8x1xf32> to vector<2x8x8xf32>
    %862 = vector.broadcast %860 : vector<1x8x8xf32> to vector<2x8x8xf32>
    %863 = arith.mulf %861, %862 : vector<2x8x8xf32>
    %cst_205 = arith.constant dense<0.000000e+00> : vector<2x8xf32>
    %864 = vector.multi_reduction <add>, %863, %cst_205 [1] : vector<2x8x8xf32> to vector<2x8xf32>
    %865 = vector.shape_cast %858 : vector<2x8xf32> to vector<2x8x1xf32>
    %866 = vector.shape_cast %28 : vector<8x8xf32> to vector<1x8x8xf32>
    %867 = vector.broadcast %865 : vector<2x8x1xf32> to vector<2x8x8xf32>
    %868 = vector.broadcast %866 : vector<1x8x8xf32> to vector<2x8x8xf32>
    %869 = arith.mulf %867, %868 : vector<2x8x8xf32>
    %cst_206 = arith.constant dense<0.000000e+00> : vector<2x8xf32>
    %870 = vector.multi_reduction <add>, %869, %cst_206 [1] : vector<2x8x8xf32> to vector<2x8xf32>
    %871 = vector.extract_strided_slice %814 {offsets = [0, 0], sizes = [2, 1], strides = [1, 1]} : vector<2x3xf32> to vector<2x1xf32>
    %872 = vector.broadcast %871 : vector<2x1xf32> to vector<2x8xf32>
    %873 = arith.mulf %872, %864 : vector<2x8xf32>
    %874 = vector.extract_strided_slice %814 {offsets = [0, 1], sizes = [2, 1], strides = [1, 1]} : vector<2x3xf32> to vector<2x1xf32>
    %875 = vector.broadcast %874 : vector<2x1xf32> to vector<2x8xf32>
    %876 = arith.mulf %875, %858 : vector<2x8xf32>
    %877 = arith.addf %873, %876 : vector<2x8xf32>
    %878 = vector.extract_strided_slice %814 {offsets = [0, 2], sizes = [2, 1], strides = [1, 1]} : vector<2x3xf32> to vector<2x1xf32>
    %879 = vector.broadcast %878 : vector<2x1xf32> to vector<2x8xf32>
    %880 = arith.mulf %879, %870 : vector<2x8xf32>
    %881 = arith.addf %877, %880 : vector<2x8xf32>
    %cst_207 = arith.constant 9.99999993E-9 : f32
    %882 = vector.broadcast %cst_207 : f32 to vector<2x8xf32>
    %883 = arith.maximumf %881, %882 : vector<2x8xf32>
    %884 = math.log %883 : vector<2x8xf32>
    %885 = vector.broadcast %827 : vector<2x1xf32> to vector<2x8xf32>
    %886 = arith.mulf %885, %884 : vector<2x8xf32>
    %887 = math.exp %886 : vector<2x8xf32>
    %cst_208 = arith.constant dense<0.000000e+00> : vector<2xf32>
    %888 = vector.multi_reduction <add>, %887, %cst_208 [1] : vector<2x8xf32> to vector<2xf32>
    %889 = vector.shape_cast %888 : vector<2xf32> to vector<2x1xf32>
    %cst_209 = arith.constant 9.99999993E-9 : f32
    %890 = vector.broadcast %cst_209 : f32 to vector<2x1xf32>
    %891 = arith.addf %889, %890 : vector<2x1xf32>
    %892 = vector.broadcast %891 : vector<2x1xf32> to vector<2x8xf32>
    %893 = arith.divf %887, %892 : vector<2x8xf32>
    %894 = vector.extract_strided_slice %893 {offsets = [0, 0], sizes = [1, 8], strides = [1, 1]} : vector<2x8xf32> to vector<1x8xf32>
    %c0_210 = arith.constant 0 : index
    %c96 = arith.constant 96 : index
    %895 = vector.load %arg6[%c0_210, %c96] : memref<1x128xf32, #tpu.memory_space<vmem>>, vector<1x8xf32>
    tpu.vector_store %arg6[%c0_210, %c96], %894 {strides = array<i32>} : memref<1x128xf32, #tpu.memory_space<vmem>>, vector<1x8xf32>,
    %896 = vector.extract_strided_slice %893 {offsets = [1, 0], sizes = [1, 8], strides = [1, 1]} : vector<2x8xf32> to vector<1x8xf32>
    %c0_211 = arith.constant 0 : index
    %c104 = arith.constant 104 : index
    %897 = vector.load %arg6[%c0_211, %c104] : memref<1x128xf32, #tpu.memory_space<vmem>>, vector<1x8xf32>
    tpu.vector_store %arg6[%c0_211, %c104], %896 {strides = array<i32>} : memref<1x128xf32, #tpu.memory_space<vmem>>, vector<1x8xf32>,
    %898 = vector.extract_strided_slice %5 {offsets = [14, 0], sizes = [2, 22], strides = [1, 1]} : vector<16x22xf32> to vector<2x22xf32>
    %899 = vector.extract_strided_slice %898 {offsets = [0, 0], sizes = [2, 16], strides = [1, 1]} : vector<2x22xf32> to vector<2x16xf32>
    %900 = vector.extract_strided_slice %898 {offsets = [0, 16], sizes = [2, 1], strides = [1, 1]} : vector<2x22xf32> to vector<2x1xf32>
    %cst_212 = arith.constant 0.000000e+00 : f32
    %901 = vector.broadcast %cst_212 : f32 to vector<2x1xf32>
    %902 = arith.maximumf %900, %901 : vector<2x1xf32>
    %903 = math.absf %900 : vector<2x1xf32>
    %cst_213 = arith.constant 0.000000e+00 : f32
    %904 = vector.broadcast %cst_213 : f32 to vector<2x1xf32>
    %905 = arith.subf %904, %903 : vector<2x1xf32>
    %906 = math.exp %905 : vector<2x1xf32>
    %cst_214 = arith.constant 1.000000e+00 : f32
    %907 = vector.broadcast %cst_214 : f32 to vector<2x1xf32>
    %908 = arith.addf %907, %906 : vector<2x1xf32>
    %909 = math.log %908 : vector<2x1xf32>
    %910 = arith.addf %902, %909 : vector<2x1xf32>
    %911 = vector.extract_strided_slice %898 {offsets = [0, 17], sizes = [2, 1], strides = [1, 1]} : vector<2x22xf32> to vector<2x1xf32>
    %cst_215 = arith.constant 0.000000e+00 : f32
    %912 = vector.broadcast %cst_215 : f32 to vector<2x1xf32>
    %913 = arith.subf %912, %911 : vector<2x1xf32>
    %914 = math.exp %913 : vector<2x1xf32>
    %cst_216 = arith.constant 1.000000e+00 : f32
    %915 = vector.broadcast %cst_216 : f32 to vector<2x1xf32>
    %916 = arith.addf %915, %914 : vector<2x1xf32>
    %cst_217 = arith.constant 1.000000e+00 : f32
    %917 = vector.broadcast %cst_217 : f32 to vector<2x1xf32>
    %918 = arith.divf %917, %916 : vector<2x1xf32>
    %919 = vector.extract_strided_slice %898 {offsets = [0, 18], sizes = [2, 3], strides = [1, 1]} : vector<2x22xf32> to vector<2x3xf32>
    %cst_218 = arith.constant 0.000000e+00 : f32
    %920 = vector.broadcast %cst_218 : f32 to vector<2x3xf32>
    %921 = arith.maximumf %919, %920 : vector<2x3xf32>
    %922 = math.absf %919 : vector<2x3xf32>
    %cst_219 = arith.constant 0.000000e+00 : f32
    %923 = vector.broadcast %cst_219 : f32 to vector<2x3xf32>
    %924 = arith.subf %923, %922 : vector<2x3xf32>
    %925 = math.exp %924 : vector<2x3xf32>
    %cst_220 = arith.constant 1.000000e+00 : f32
    %926 = vector.broadcast %cst_220 : f32 to vector<2x3xf32>
    %927 = arith.addf %926, %925 : vector<2x3xf32>
    %928 = math.log %927 : vector<2x3xf32>
    %929 = arith.addf %921, %928 : vector<2x3xf32>
    %cst_221 = arith.constant dense<0xFF800000> : vector<2xf32>
    %930 = vector.multi_reduction <maximumf>, %929, %cst_221 [1] : vector<2x3xf32> to vector<2xf32>
    %931 = vector.shape_cast %930 : vector<2xf32> to vector<2x1xf32>
    %932 = vector.broadcast %931 : vector<2x1xf32> to vector<2x3xf32>
    %933 = arith.subf %929, %932 : vector<2x3xf32>
    %934 = math.exp %933 : vector<2x3xf32>
    %cst_222 = arith.constant dense<0.000000e+00> : vector<2xf32>
    %935 = vector.multi_reduction <add>, %934, %cst_222 [1] : vector<2x3xf32> to vector<2xf32>
    %936 = vector.shape_cast %935 : vector<2xf32> to vector<2x1xf32>
    %937 = vector.broadcast %936 : vector<2x1xf32> to vector<2x3xf32>
    %938 = arith.divf %934, %937 : vector<2x3xf32>
    %939 = vector.extract_strided_slice %898 {offsets = [0, 21], sizes = [2, 1], strides = [1, 1]} : vector<2x22xf32> to vector<2x1xf32>
    %cst_223 = arith.constant 0.000000e+00 : f32
    %940 = vector.broadcast %cst_223 : f32 to vector<2x1xf32>
    %941 = arith.maximumf %939, %940 : vector<2x1xf32>
    %942 = math.absf %939 : vector<2x1xf32>
    %cst_224 = arith.constant 0.000000e+00 : f32
    %943 = vector.broadcast %cst_224 : f32 to vector<2x1xf32>
    %944 = arith.subf %943, %942 : vector<2x1xf32>
    %945 = math.exp %944 : vector<2x1xf32>
    %cst_225 = arith.constant 1.000000e+00 : f32
    %946 = vector.broadcast %cst_225 : f32 to vector<2x1xf32>
    %947 = arith.addf %946, %945 : vector<2x1xf32>
    %948 = math.log %947 : vector<2x1xf32>
    %949 = arith.addf %941, %948 : vector<2x1xf32>
    %cst_226 = arith.constant 1.000000e+00 : f32
    %950 = vector.broadcast %cst_226 : f32 to vector<2x1xf32>
    %951 = arith.addf %950, %949 : vector<2x1xf32>
    %952 = vector.shape_cast %899 : vector<2x16xf32> to vector<2x1x16xf32>
    %953 = vector.broadcast %952 : vector<2x1x16xf32> to vector<2x8x16xf32>
    %954 = arith.mulf %953, %6 : vector<2x8x16xf32>
    %cst_227 = arith.constant dense<0.000000e+00> : vector<2x8xf32>
    %955 = vector.multi_reduction <add>, %954, %cst_227 [2] : vector<2x8x16xf32> to vector<2x8xf32>
    %956 = arith.mulf %899, %899 : vector<2x16xf32>
    %cst_228 = arith.constant dense<0.000000e+00> : vector<2xf32>
    %957 = vector.multi_reduction <add>, %956, %cst_228 [1] : vector<2x16xf32> to vector<2xf32>
    %958 = vector.shape_cast %957 : vector<2xf32> to vector<2x1xf32>
    %959 = math.sqrt %958 : vector<2x1xf32>
    %960 = vector.broadcast %959 : vector<2x1xf32> to vector<2x8xf32>
    %961 = arith.mulf %960, %9 : vector<2x8xf32>
    %cst_229 = arith.constant 9.99999993E-9 : f32
    %962 = vector.broadcast %cst_229 : f32 to vector<2x8xf32>
    %963 = arith.addf %961, %962 : vector<2x8xf32>
    %964 = arith.divf %955, %963 : vector<2x8xf32>
    %965 = vector.broadcast %910 : vector<2x1xf32> to vector<2x8xf32>
    %966 = arith.mulf %965, %964 : vector<2x8xf32>
    %cst_230 = arith.constant dense<0xFF800000> : vector<2xf32>
    %967 = vector.multi_reduction <maximumf>, %966, %cst_230 [1] : vector<2x8xf32> to vector<2xf32>
    %968 = vector.shape_cast %967 : vector<2xf32> to vector<2x1xf32>
    %969 = vector.broadcast %968 : vector<2x1xf32> to vector<2x8xf32>
    %970 = arith.subf %966, %969 : vector<2x8xf32>
    %971 = math.exp %970 : vector<2x8xf32>
    %cst_231 = arith.constant dense<0.000000e+00> : vector<2xf32>
    %972 = vector.multi_reduction <add>, %971, %cst_231 [1] : vector<2x8xf32> to vector<2xf32>
    %973 = vector.shape_cast %972 : vector<2xf32> to vector<2x1xf32>
    %974 = vector.broadcast %973 : vector<2x1xf32> to vector<2x8xf32>
    %975 = arith.divf %971, %974 : vector<2x8xf32>
    %976 = vector.broadcast %918 : vector<2x1xf32> to vector<2x8xf32>
    %977 = arith.mulf %976, %975 : vector<2x8xf32>
    %cst_232 = arith.constant 1.000000e+00 : f32
    %978 = vector.broadcast %cst_232 : f32 to vector<2x1xf32>
    %979 = arith.subf %978, %918 : vector<2x1xf32>
    %980 = vector.broadcast %979 : vector<2x1xf32> to vector<2x8xf32>
    %981 = arith.mulf %980, %893 : vector<2x8xf32>
    %982 = arith.addf %977, %981 : vector<2x8xf32>
    %983 = vector.shape_cast %982 : vector<2x8xf32> to vector<2x8x1xf32>
    %984 = vector.shape_cast %20 : vector<8x8xf32> to vector<1x8x8xf32>
    %985 = vector.broadcast %983 : vector<2x8x1xf32> to vector<2x8x8xf32>
    %986 = vector.broadcast %984 : vector<1x8x8xf32> to vector<2x8x8xf32>
    %987 = arith.mulf %985, %986 : vector<2x8x8xf32>
    %cst_233 = arith.constant dense<0.000000e+00> : vector<2x8xf32>
    %988 = vector.multi_reduction <add>, %987, %cst_233 [1] : vector<2x8x8xf32> to vector<2x8xf32>
    %989 = vector.shape_cast %982 : vector<2x8xf32> to vector<2x8x1xf32>
    %990 = vector.shape_cast %28 : vector<8x8xf32> to vector<1x8x8xf32>
    %991 = vector.broadcast %989 : vector<2x8x1xf32> to vector<2x8x8xf32>
    %992 = vector.broadcast %990 : vector<1x8x8xf32> to vector<2x8x8xf32>
    %993 = arith.mulf %991, %992 : vector<2x8x8xf32>
    %cst_234 = arith.constant dense<0.000000e+00> : vector<2x8xf32>
    %994 = vector.multi_reduction <add>, %993, %cst_234 [1] : vector<2x8x8xf32> to vector<2x8xf32>
    %995 = vector.extract_strided_slice %938 {offsets = [0, 0], sizes = [2, 1], strides = [1, 1]} : vector<2x3xf32> to vector<2x1xf32>
    %996 = vector.broadcast %995 : vector<2x1xf32> to vector<2x8xf32>
    %997 = arith.mulf %996, %988 : vector<2x8xf32>
    %998 = vector.extract_strided_slice %938 {offsets = [0, 1], sizes = [2, 1], strides = [1, 1]} : vector<2x3xf32> to vector<2x1xf32>
    %999 = vector.broadcast %998 : vector<2x1xf32> to vector<2x8xf32>
    %1000 = arith.mulf %999, %982 : vector<2x8xf32>
    %1001 = arith.addf %997, %1000 : vector<2x8xf32>
    %1002 = vector.extract_strided_slice %938 {offsets = [0, 2], sizes = [2, 1], strides = [1, 1]} : vector<2x3xf32> to vector<2x1xf32>
    %1003 = vector.broadcast %1002 : vector<2x1xf32> to vector<2x8xf32>
    %1004 = arith.mulf %1003, %994 : vector<2x8xf32>
    %1005 = arith.addf %1001, %1004 : vector<2x8xf32>
    %cst_235 = arith.constant 9.99999993E-9 : f32
    %1006 = vector.broadcast %cst_235 : f32 to vector<2x8xf32>
    %1007 = arith.maximumf %1005, %1006 : vector<2x8xf32>
    %1008 = math.log %1007 : vector<2x8xf32>
    %1009 = vector.broadcast %951 : vector<2x1xf32> to vector<2x8xf32>
    %1010 = arith.mulf %1009, %1008 : vector<2x8xf32>
    %1011 = math.exp %1010 : vector<2x8xf32>
    %cst_236 = arith.constant dense<0.000000e+00> : vector<2xf32>
    %1012 = vector.multi_reduction <add>, %1011, %cst_236 [1] : vector<2x8xf32> to vector<2xf32>
    %1013 = vector.shape_cast %1012 : vector<2xf32> to vector<2x1xf32>
    %cst_237 = arith.constant 9.99999993E-9 : f32
    %1014 = vector.broadcast %cst_237 : f32 to vector<2x1xf32>
    %1015 = arith.addf %1013, %1014 : vector<2x1xf32>
    %1016 = vector.broadcast %1015 : vector<2x1xf32> to vector<2x8xf32>
    %1017 = arith.divf %1011, %1016 : vector<2x8xf32>
    %1018 = vector.extract_strided_slice %1017 {offsets = [0, 0], sizes = [1, 8], strides = [1, 1]} : vector<2x8xf32> to vector<1x8xf32>
    %c0_238 = arith.constant 0 : index
    %c112 = arith.constant 112 : index
    %1019 = vector.load %arg6[%c0_238, %c112] : memref<1x128xf32, #tpu.memory_space<vmem>>, vector<1x8xf32>
    tpu.vector_store %arg6[%c0_238, %c112], %1018 {strides = array<i32>} : memref<1x128xf32, #tpu.memory_space<vmem>>, vector<1x8xf32>,
    %1020 = vector.extract_strided_slice %1017 {offsets = [1, 0], sizes = [1, 8], strides = [1, 1]} : vector<2x8xf32> to vector<1x8xf32>
    %c0_239 = arith.constant 0 : index
    %c120 = arith.constant 120 : index
    %1021 = vector.load %arg6[%c0_239, %c120] : memref<1x128xf32, #tpu.memory_space<vmem>>, vector<1x8xf32>
    tpu.vector_store %arg6[%c0_239, %c120], %1020 {strides = array<i32>} : memref<1x128xf32, #tpu.memory_space<vmem>>, vector<1x8xf32>,
    return
  }
  func.func @transform_0(%arg0: i32) -> (i32, i32) {
    %c0_i32 = arith.constant 0 : i32
    %c0_i32_0 = arith.constant 0 : i32
    %c0_i32_1 = arith.constant 0 : i32
    return %c0_i32, %c0_i32_0 : i32, i32
  }
  func.func @transform_1(%arg0: i32) -> (i32, i32) {
    %c0_i32 = arith.constant 0 : i32
    %c0_i32_0 = arith.constant 0 : i32
    %c0_i32_1 = arith.constant 0 : i32
    return %c0_i32, %c0_i32_0 : i32, i32
  }
  func.func @transform_2(%arg0: i32) -> (i32, i32) {
    %c0_i32 = arith.constant 0 : i32
    %c0_i32_0 = arith.constant 0 : i32
    %c0_i32_1 = arith.constant 0 : i32
    return %c0_i32, %c0_i32_0 : i32, i32
  }
  func.func @transform_3(%arg0: i32) -> (i32, i32, i32) {
    %c0_i32 = arith.constant 0 : i32
    %c0_i32_0 = arith.constant 0 : i32
    %c0_i32_1 = arith.constant 0 : i32
    %c0_i32_2 = arith.constant 0 : i32
    return %c0_i32, %c0_i32_0, %c0_i32_1 : i32, i32, i32
  }
  func.func @transform_4(%arg0: i32) -> (i32, i32) {
    %c0_i32 = arith.constant 0 : i32
    %c0_i32_0 = arith.constant 0 : i32
    %c0_i32_1 = arith.constant 0 : i32
    return %c0_i32, %c0_i32_0 : i32, i32
  }
  func.func @transform_5(%arg0: i32) -> (i32, i32) {
    %c0_i32 = arith.constant 0 : i32
    %c0_i32_0 = arith.constant 0 : i32
    %c0_i32_1 = arith.constant 0 : i32
    return %c0_i32, %c0_i32_0 : i32, i32
  }
}

</mosaic_0001>

<llo_original>
// kernel: basic_heads_forward_seq.1
$region0: #{basic_heads_forward_seq.1}
  #allocation0 [shape = 'u32[]', space=smem, size = 0x4, offset = 0x4, fixed_abs, tag = 'smem constant byte address 0x4 - core index']
  #allocation1 [shape = 'u32[72,128]{1,0:T(1,128)}', space=vmem, size = 0x9000, scoped, tag = 'internal scratch']
  %s0 = inlined_call_operand.hbm [shape: f32[16,32], index: 0, kind: input, shape index: {}]
  %s1 = inlined_call_operand.hbm [shape: f32[22,32], index: 1, kind: input, shape index: {}]
  %s2 = inlined_call_operand.vmem [shape: f32[1,22], index: 2, kind: input, shape index: {}]
  %s3 = inlined_call_operand.hbm [shape: f32[2,8,16], index: 3, kind: input, shape index: {}]
  %s4 = inlined_call_operand.vmem [shape: f32[2,8], index: 4, kind: input, shape index: {}]
  %s5 = inlined_call_operand.vmem [shape: f32[1,128], index: 5, kind: output, shape index: {}]
  %s6 = sld [smem:[#allocation0]]
  $region42: #{basic_heads_forward_seq.1} parent=0
    _
  %s8 = ssub.s32 1, %s6
  %s9 = scalar_select 0, %s8, %s6
  $region1: #{basic_heads_forward_seq.1} parent=0
    #allocation2 [shape = 'u8[8192]{0}', space=vmem, size = 0x2000, scoped, tag = 'input window, operand 0, single buffered']
    #allocation3 [shape = 's32[1]{0}', space=sflag, size = 0x4, scoped, tag = 'scoped memory for basic_heads_forward_seq.1']
    #allocation4 [shape = 'u8[12288]{0}', space=vmem, size = 0x3000, scoped, tag = 'input window, operand 1, single buffered']
    #allocation5 [shape = 's32[1]{0}', space=sflag, size = 0x4, scoped, tag = 'scoped memory for basic_heads_forward_seq.1']
    #allocation6 [shape = 'u8[8192]{0}', space=vmem, size = 0x2000, scoped, tag = 'input window, operand 3, single buffered']
    %10 = vsyncpa [#allocation3], 0
    %11 = vsyncpa [#allocation5], 0
    // Predicated region
    $region2: #{basic_heads_forward_seq.1} parent=1 // pred_check
      _
    $region3: #{basic_heads_forward_seq.1} parent=1 // pred_check_branch
      %13 = sbr.rel (0) target = $region5
    $region4: #{basic_heads_forward_seq.1} parent=1 // pred_region
      %15 = vsyncadd [#allocation3], 0
      %s16 = sshll.u32 %s0, 4
      %s17 = int_to_ptr.hbm [resolvable:$true] %s16
      %s18 = sshll.u32 [#allocation2], 4
      %s19 = int_to_ptr.vmem [resolvable:$true] %s18
      %24 = dma.hbm_to_vmem [thread:$0]  %s17, 256, %s19, [#allocation3], 128, 128, 8
    $region5: #{basic_heads_forward_seq.1} parent=1 // pred_fallthru
      _
    // Predicated region
    $region6: #{basic_heads_forward_seq.1} parent=1 // pred_check
      _
    $region7: #{basic_heads_forward_seq.1} parent=1 // pred_check_branch
      %26 = sbr.rel (0) target = $region9
    $region8: #{basic_heads_forward_seq.1} parent=1 // pred_region
      %28 = vsyncadd [#allocation5], 0
      %s29 = sshll.u32 %s1, 4
      %s30 = int_to_ptr.hbm [resolvable:$true] %s29
      %s31 = sshll.u32 [#allocation4], 4
      %s32 = int_to_ptr.vmem [resolvable:$true] %s31
      %37 = dma.hbm_to_vmem [thread:$0]  %s30, 384, %s32, [#allocation5], 128, 128, 8
    $region9: #{basic_heads_forward_seq.1} parent=1 // pred_fallthru
      _
    // Predicated region
    $region10: #{basic_heads_forward_seq.1} parent=1 // pred_check
      _
    $region11: #{basic_heads_forward_seq.1} parent=1 // pred_check_branch
      %39 = sbr.rel (0) target = $region13
    $region12: #{basic_heads_forward_seq.1} parent=1 // pred_region
      _
    $region13: #{basic_heads_forward_seq.1} parent=1 // pred_fallthru
      _
    // Predicated region
    $region14: #{basic_heads_forward_seq.1} parent=1 // pred_check
      _
    $region15: #{basic_heads_forward_seq.1} parent=1 // pred_check_branch
      %41 = sbr.rel (0) target = $region17
    $region16: #{basic_heads_forward_seq.1} parent=1 // pred_region
      %43 = vsyncadd [#allocation5], 0
      %s44 = sshll.u32 %s3, 4
      %s45 = int_to_ptr.hbm [resolvable:$true] %s44
      %s46 = sshll.u32 [#allocation6], 4
      %s47 = int_to_ptr.vmem [resolvable:$true] %s46
      %52 = dma.hbm_to_vmem [thread:$0]  %s45, 256, %s47, [#allocation5], 128, 128, 8
    $region17: #{basic_heads_forward_seq.1} parent=1 // pred_fallthru
      _
    // Predicated region
    $region18: #{basic_heads_forward_seq.1} parent=1 // pred_check
      _
    $region19: #{basic_heads_forward_seq.1} parent=1 // pred_check_branch
      %54 = sbr.rel (0) target = $region21
    $region20: #{basic_heads_forward_seq.1} parent=1 // pred_region
      _
    $region21: #{basic_heads_forward_seq.1} parent=1 // pred_fallthru
      _
    // Predicated region
    $region22: #{basic_heads_forward_seq.1} parent=1 // pred_check
      _
    $region23: #{basic_heads_forward_seq.1} parent=1 // pred_check_branch
      %56 = sbr.rel (0) target = $region25
    $region24: #{basic_heads_forward_seq.1} parent=1 // pred_region
      %58 = dma.done [#allocation3], 256
    $region25: #{basic_heads_forward_seq.1} parent=1 // pred_fallthru
      _
    // Predicated region
    $region26: #{basic_heads_forward_seq.1} parent=1 // pred_check
      _
    $region27: #{basic_heads_forward_seq.1} parent=1 // pred_check_branch
      %60 = sbr.rel (0) target = $region29
    $region28: #{basic_heads_forward_seq.1} parent=1 // pred_region
      %62 = dma.done [#allocation5], 384
    $region29: #{basic_heads_forward_seq.1} parent=1 // pred_fallthru
      _
    // Predicated region
    $region30: #{basic_heads_forward_seq.1} parent=1 // pred_check
      _
    $region31: #{basic_heads_forward_seq.1} parent=1 // pred_check_branch
      %64 = sbr.rel (0) target = $region33
    $region32: #{basic_heads_forward_seq.1} parent=1 // pred_region
      %66 = dma.done [#allocation5], 256
    $region33: #{basic_heads_forward_seq.1} parent=1 // pred_fallthru
      _
    %v67 = vld [vmem:[#allocation2] sm:$0xff]
    %v68 = vld [vmem:[#allocation2 + $0x8] sm:$0xff]
    %v69 = vld [vmem:[#allocation4] sm:$0xff]
    %v70 = vld [vmem:[#allocation4 + $0x8] sm:$0xff]
    %v71 = vld [vmem:[#allocation4 + $0x10] sm:$0x3f]
    %v72 = vld [vmem:[%s2] sm:$0x1]
    %v74 = vperm.slane %v72, 0
    %vm76 = vcmask 261120
    %v78 = vsel %vm76, %v67, 0
    %v81 = vsel %vm76, %v68, 0
    %v84 = vsel %vm76, %v69, 0
    %v87 = vsel %vm76, %v70, 0
    %v90 = vsel %vm76, %v71, 0
    %92 = vmatpush.xpose.msra.mxu0 0.0
    %93 = vmatpush.xpose.msra.mxu0 0.0
    %94 = vmatpush.xpose.msra.mxu0 0.0
    %95 = vmatpush.xpose.msra.mxu0 0.0
    %96 = vmatpush.xpose.msra.mxu0 0.0
    %97 = vmatpush.xpose.msra.mxu0 0.0
    %98 = vmatpush.xpose.msra.mxu0 0.0
    %99 = vmatpush.xpose.msra.mxu0 0.0
    %100 = vmatpush.xpose.msra.mxu0 0.0
    %101 = vmatpush.xpose.msra.mxu0 0.0
    %102 = vmatpush.xpose.msra.mxu0 0.0
    %103 = vmatpush.xpose.msra.mxu0 0.0
    %104 = vmatpush.xpose.msra.mxu0 0.0
    %105 = vmatpush.xpose.msra.mxu0 %v90
    %106 = vmatpush.xpose.msra.mxu0 %v87
    %107 = vmatpush.xpose.msra.mxu0 %v84
    %108 = vmatmul.f32.gmra.mxu0 %v78
    %v109 = vpop.f32.mrf.mxu0
    %v110 = vadd.f32 %v74, %v109
    %111 = vmatmul.f32.gmra.mxu0 %v81
    %v112 = vpop.f32.mrf.mxu0
    %v113 = vadd.f32 %v74, %v112
    %114 = vdwg.mxu0
    %v115 = vld [vmem:[#allocation6] sm:$0xff]
    %v116 = vld [vmem:[#allocation6 + $0x8] sm:$0xff]
    %v117 = vmul.f32 %v115, %v115
    %v118 = vmul.f32 %v116, %v116
    %vm119 = vcmask 130048
    %v120 = vsel %vm119, %v117, 0.0
    %121 = vadd.xlane.f32.xlu0 %v120
    %v122 = vpop.xlane.xlu0 %121
    %v123 = vsel %vm119, %v118, 0.0
    %124 = vadd.xlane.f32.xlu0 %v123
    %v125 = vpop.xlane.xlu0 %124
    %v126 = vrsqrt.pop %v122
    %v127 = vmul.f32 %v126, %v122
    %v128 = vmul.f32 %v127, %v126
    %v129 = vmul.f32 0.5, %v128
    %v130 = vsub.f32 1.5, %v129
    %v131 = vmul.f32 %v126, %v130
    %v132 = vmul.f32 %v122, %v131
    %vm133 = vcmp.eq.f32.partialorder %v122, inf
    %v134 = vsel %vm133, %v122, %v132
    %vm135 = vcmp.eq.f32.partialorder %v122, 0.0
    %v136 = vand.u32 %v122, 2147483648
    %v137 = vsel %vm135, %v136, %v134
    %v138 = vrsqrt.pop %v125
    %v139 = vmul.f32 %v138, %v125
    %v140 = vmul.f32 %v139, %v138
    %v141 = vmul.f32 0.5, %v140
    %v142 = vsub.f32 1.5, %v141
    %v143 = vmul.f32 %v138, %v142
    %v144 = vmul.f32 %v125, %v143
    %vm145 = vcmp.eq.f32.partialorder %v125, inf
    %v146 = vsel %vm145, %v125, %v144
    %vm147 = vcmp.eq.f32.partialorder %v125, 0.0
    %v148 = vand.u32 %v125, 2147483648
    %v149 = vsel %vm147, %v148, %v146
    %v150 = vlaneseq
    %v151 = vshrl.u32 %v150, 7
    %v152 = vlaneseq
    %v153 = vand.u32 %v152, 127
    %v154 = vsub.s32 %v151, %v153
    %vm155 = vcmp.eq.s32.totalorder %v154, 1
    %vm156 = vcmp.eq.s32.totalorder %v154, 4294967289
    %vm157 = vmor %vm155, %vm156
    %v158 = vsel %vm157, 1.0, 0.0
    %vm159 = vcmp.eq.s32.totalorder %v154, 4294967295
    %vm160 = vcmp.eq.s32.totalorder %v154, 7
    %vm161 = vmor %vm159, %vm160
    %v162 = vsel %vm161, 1.0, 0.0
    %v163 = vld [vmem:[%s4] sm:$0x3]
    %v164 = vmax.f32 %v110, 0.0
    %v165 = vand.u32 2147483647, %v110
    %v166 = vsub.f32 0.0, %v165
    %v167 = vmul.f32 %v166, 1.442695
    %v168 = vpow.pop %v167
    %v169 = vadd.f32 %v168, 1.0
    %v170 = vlog2.pop %v169
    %v171 = vmul.f32 %v170, 0.6931472
    %v172 = vadd.f32 %v164, %v171
    %v173 = vsub.f32 0.0, %v110
    %v174 = vmul.f32 %v173, 1.442695
    %v175 = vpow.pop %v174
    %v176 = vadd.f32 %v175, 1.0
    %v177 = vrcp.pop %v176
    %v178 = vmul.f32 %v176, %v177
    %v179 = vsub.f32 1.0, %v178
    %v180 = vmul.f32 %v177, %v179
    %v181 = vadd.f32 %v177, %v180
    %vm182 = vweird.f32 %v176
    %vm183 = vweird.f32 %v177
    %vm184 = vmor %vm182, %vm183
    %v185 = vsel %vm184, %v177, %v181
    %v186 = vand.u32 2147483647, %v176
    %vm187 = vcmp.eq.f32.partialorder %v186, 8.507059e+37
    %v188 = vand.u32 %v176, 2147483648
    %v189 = vor.u32 1.1754944e-38, %v188
    %v190 = vsel %vm187, %v189, %v185
    %v191 = vmul.f32 1.0, %v190
    %vm192 = vcmask 165008
    %v193 = vsel %vm192, %v172, -inf
    %194 = vmax.xlane.f32.xlu0 %v193
    %v195 = vpop.xlane.xlu0 %194
    %v196 = vsub.f32 %v172, %v195
    %v197 = vmul.f32 %v196, 1.442695
    %v198 = vpow.pop %v197
    %200 = vrot.lane.b32.xlu0 %v198, 110
    %v201 = vpop.permute.xlu0 %200
    %vm203 = vcmask 17408
    %v204 = vsel %vm203, %v201, 0.0
    %205 = vadd.xlane.f32.xlu0 %v204
    %v206 = vpop.xlane.xlu0 %205
    %v207 = vrcp.pop %v206
    %v208 = vmul.f32 %v206, %v207
    %v209 = vsub.f32 1.0, %v208
    %v210 = vmul.f32 %v207, %v209
    %v211 = vadd.f32 %v207, %v210
    %vm212 = vweird.f32 %v206
    %vm213 = vweird.f32 %v207
    %vm214 = vmor %vm212, %vm213
    %v215 = vsel %vm214, %v207, %v211
    %v216 = vand.u32 2147483647, %v206
    %vm217 = vcmp.eq.f32.partialorder %v216, 8.507059e+37
    %v218 = vand.u32 %v206, 2147483648
    %v219 = vor.u32 1.1754944e-38, %v218
    %v220 = vsel %vm217, %v219, %v215
    %v221 = vmul.f32 %v198, %v220
    %v222 = vadd.f32 %v172, 1.0
    %v224 = vrot.slane %v110, 1
    %v225 = vperm.slane %v110, 0
    %v226 = vperm.slane %v224, 0
    %v229 = vmul.f32 %v225, %v115
    %v230 = vmul.f32 %v226, %v116
    %v231 = vsel %vm119, %v229, 0.0
    %232 = vadd.xlane.f32.xlu0 %v231
    %v233 = vpop.xlane.xlu0 %232
    %v234 = vsel %vm119, %v230, 0.0
    %235 = vadd.xlane.f32.xlu0 %v234
    %v236 = vpop.xlane.xlu0 %235
    %v237 = vmul.f32 %v110, %v110
    %vm238 = vcmask 123904
    %v239 = vsel %vm238, %v237, 0.0
    %240 = vadd.xlane.f32.xlu0 %v239
    %v241 = vpop.xlane.xlu0 %240
    %v242 = vrsqrt.pop %v241
    %v243 = vmul.f32 %v242, %v241
    %v244 = vmul.f32 %v243, %v242
    %v245 = vmul.f32 0.5, %v244
    %v246 = vsub.f32 1.5, %v245
    %v247 = vmul.f32 %v242, %v246
    %v248 = vmul.f32 %v241, %v247
    %vm249 = vcmp.eq.f32.partialorder %v241, inf
    %v250 = vsel %vm249, %v241, %v248
    %vm251 = vcmp.eq.f32.partialorder %v241, 0.0
    %v252 = vand.u32 %v241, 2147483648
    %v253 = vsel %vm251, %v252, %v250
    %v256 = vperm.slane %v137, %v153
    %v257 = vperm.slane %v149, %v153
    %vm258 = vcmask 1041409
    %v259 = vsel %vm258, %v257, %v256
    %v261 = vmul.f32 %v253, %v259
    %v262 = vadd.f32 %v261, 1e-08
    %v264 = vperm.slane %v262, 0
    %v265 = vlaneseq
    %v266 = vshrl.u32 %v265, 7
    %268 = vset.pattern.permute.xlu0 %v266
    %269 = vperm.xlu0 %268, %v264
    %v270 = vpop.permute.xlu0 %269
    %v271 = vperm.slane %v262, 1
    %v272 = vlaneseq
    %v273 = vshrl.u32 %v272, 7
    %275 = vset.pattern.permute.xlu0 %v273
    %276 = vperm.xlu0 %275, %v271
    %v277 = vpop.permute.xlu0 %276
    %v280 = vrcp.pop %v270
    %v281 = vmul.f32 %v270, %v280
    %v282 = vsub.f32 1.0, %v281
    %v283 = vmul.f32 %v280, %v282
    %v284 = vadd.f32 %v280, %v283
    %vm285 = vweird.f32 %v270
    %vm286 = vweird.f32 %v280
    %vm287 = vmor %vm285, %vm286
    %v288 = vsel %vm287, %v280, %v284
    %v289 = vand.u32 2147483647, %v270
    %vm290 = vcmp.eq.f32.partialorder %v289, 8.507059e+37
    %v291 = vand.u32 %v270, 2147483648
    %v292 = vor.u32 1.1754944e-38, %v291
    %v293 = vsel %vm290, %v292, %v288
    %v294 = vmul.f32 %v233, %v293
    %v295 = vrcp.pop %v277
    %v296 = vmul.f32 %v277, %v295
    %v297 = vsub.f32 1.0, %v296
    %v298 = vmul.f32 %v295, %v297
    %v299 = vadd.f32 %v295, %v298
    %vm300 = vweird.f32 %v277
    %vm301 = vweird.f32 %v295
    %vm302 = vmor %vm300, %vm301
    %v303 = vsel %vm302, %v295, %v299
    %v304 = vand.u32 2147483647, %v277
    %vm305 = vcmp.eq.f32.partialorder %v304, 8.507059e+37
    %v306 = vand.u32 %v277, 2147483648
    %v307 = vor.u32 1.1754944e-38, %v306
    %v308 = vsel %vm305, %v307, %v303
    %v309 = vmul.f32 %v236, %v308
    %311 = vset.pattern.permute.xlu0 16
    %312 = vperm.xlu0 %311, %v172
    %v313 = vpop.permute.xlu0 %312
    %317 = vset.pattern.permute.xlu0 0
    %318 = vperm.xlu0 %317, %v294
    %v319 = vpop.permute.xlu0 %318
    %320 = vset.pattern.permute.xlu0 0
    %321 = vperm.xlu0 %320, %v309
    %v322 = vpop.permute.xlu0 %321
    %v323 = vperm.slane %v319, %v153
    %v324 = vperm.slane %v322, %v153
    %v325 = vsel %vm258, %v324, %v323
    %v327 = vmul.f32 %v313, %v325
    %vm328 = vcmask 58368
    %v329 = vsel %vm328, %v327, -inf
    %330 = vmax.xlane.f32.xlu0 %v329
    %v331 = vpop.xlane.xlu0 %330
    %v332 = vsub.f32 %v327, %v331
    %v333 = vmul.f32 %v332, 1.442695
    %v334 = vpow.pop %v333
    %v335 = vsel %vm328, %v334, 0.0
    %336 = vadd.xlane.f32.xlu0 %v335
    %v337 = vpop.xlane.xlu0 %336
    %v338 = vrcp.pop %v337
    %v339 = vmul.f32 %v337, %v338
    %v340 = vsub.f32 1.0, %v339
    %v341 = vmul.f32 %v338, %v340
    %v342 = vadd.f32 %v338, %v341
    %vm343 = vweird.f32 %v337
    %vm344 = vweird.f32 %v338
    %vm345 = vmor %vm343, %vm344
    %v346 = vsel %vm345, %v338, %v342
    %v347 = vand.u32 2147483647, %v337
    %vm348 = vcmp.eq.f32.partialorder %v347, 8.507059e+37
    %v349 = vand.u32 %v337, 2147483648
    %v350 = vor.u32 1.1754944e-38, %v349
    %v351 = vsel %vm348, %v350, %v346
    %v352 = vmul.f32 %v334, %v351
    %354 = vset.pattern.permute.xlu0 17
    %355 = vperm.xlu0 %354, %v191
    %v356 = vpop.permute.xlu0 %355
    %v358 = vmul.f32 %v356, %v352
    %v359 = vsub.f32 1.0, %v191
    %361 = vset.pattern.permute.xlu0 17
    %362 = vperm.xlu0 %361, %v359
    %v363 = vpop.permute.xlu0 %362
    %v365 = vmul.f32 %v363, %v163
    %v366 = vadd.f32 %v358, %v365
    %v367 = vperm.slane %v366, 0
    %v368 = vlaneseq
    %v369 = vshrl.u32 %v368, 7
    %371 = vset.pattern.permute.xlu0 %v369
    %372 = vperm.xlu0 %371, %v367
    %v373 = vpop.permute.xlu0 %372
    %v374 = vperm.slane %v366, 1
    %v375 = vlaneseq
    %v376 = vshrl.u32 %v375, 7
    %378 = vset.pattern.permute.xlu0 %v376
    %379 = vperm.xlu0 %378, %v374
    %v380 = vpop.permute.xlu0 %379
    %v381 = vmul.f32 %v373, %v158
    %v382 = vmul.f32 %v380, %v158
    %vm383 = vcmask 64512
    %v384 = vsel %vm383, %v381, 0.0
    %v385 = vrot.slane %v384, 4
    %v386 = vadd.f32 %v384, %v385
    %v387 = vrot.slane %v386, 2
    %v388 = vadd.f32 %v386, %v387
    %v389 = vrot.slane %v388, 1
    %v390 = vadd.f32 %v388, %v389
    %v391 = vsel %vm383, %v382, 0.0
    %v392 = vrot.slane %v391, 4
    %v393 = vadd.f32 %v391, %v392
    %v394 = vrot.slane %v393, 2
    %v395 = vadd.f32 %v393, %v394
    %v396 = vrot.slane %v395, 1
    %v397 = vadd.f32 %v395, %v396
    %v398 = vmul.f32 %v373, %v162
    %v399 = vmul.f32 %v380, %v162
    %v400 = vsel %vm383, %v398, 0.0
    %v401 = vrot.slane %v400, 4
    %v402 = vadd.f32 %v400, %v401
    %v403 = vrot.slane %v402, 2
    %v404 = vadd.f32 %v402, %v403
    %v405 = vrot.slane %v404, 1
    %v406 = vadd.f32 %v404, %v405
    %v407 = vsel %vm383, %v399, 0.0
    %v408 = vrot.slane %v407, 4
    %v409 = vadd.f32 %v407, %v408
    %v410 = vrot.slane %v409, 2
    %v411 = vadd.f32 %v409, %v410
    %v412 = vrot.slane %v411, 1
    %v413 = vadd.f32 %v411, %v412
    %415 = vset.pattern.permute.xlu0 18
    %416 = vperm.xlu0 %415, %v221
    %v417 = vpop.permute.xlu0 %416
    %v421 = vsel %vm258, %v397, %v390
    %v423 = vmul.f32 %v417, %v421
    %424 = vset.pattern.permute.xlu0 19
    %425 = vperm.xlu0 %424, %v221
    %v426 = vpop.permute.xlu0 %425
    %v428 = vmul.f32 %v426, %v366
    %v429 = vadd.f32 %v423, %v428
    %430 = vset.pattern.permute.xlu0 20
    %431 = vperm.xlu0 %430, %v221
    %v432 = vpop.permute.xlu0 %431
    %v436 = vsel %vm258, %v413, %v406
    %v438 = vmul.f32 %v432, %v436
    %v439 = vadd.f32 %v429, %v438
    %v440 = vmax.f32 %v439, 1e-08
    %v441 = vlog2.pop %v440
    %v442 = vmul.f32 %v441, 0.6931472
    %444 = vset.pattern.permute.xlu0 21
    %445 = vperm.xlu0 %444, %v222
    %v446 = vpop.permute.xlu0 %445
    %v448 = vmul.f32 %v446, %v442
    %v449 = vmul.f32 %v448, 1.442695
    %v450 = vpow.pop %v449
    %v451 = vsel %vm328, %v450, 0.0
    %452 = vadd.xlane.f32.xlu0 %v451
    %v453 = vpop.xlane.xlu0 %452
    %v454 = vadd.f32 %v453, 1e-08
    %v455 = vrcp.pop %v454
    %v456 = vmul.f32 %v454, %v455
    %v457 = vsub.f32 1.0, %v456
    %v458 = vmul.f32 %v455, %v457
    %v459 = vadd.f32 %v455, %v458
    %vm460 = vweird.f32 %v454
    %vm461 = vweird.f32 %v455
    %vm462 = vmor %vm460, %vm461
    %v463 = vsel %vm462, %v455, %v459
    %v464 = vand.u32 2147483647, %v454
    %vm465 = vcmp.eq.f32.partialorder %v464, 8.507059e+37
    %v466 = vand.u32 %v454, 2147483648
    %v467 = vor.u32 1.1754944e-38, %v466
    %v468 = vsel %vm465, %v467, %v463
    %v469 = vmul.f32 %v450, %v468
    %vm470 = vcmask 57344
    %471 = vst.msk [vmem:[%s5] sm:$0x1] %vm470, %v469
    %473 = vrot.lane.b32.xlu0 %v469, 8
    %v474 = vpop.permute.xlu0 %473
    %vm476 = vcmask 123969
    %477 = vst.msk [vmem:[%s5 - $0x1] sm:$0x2] %vm476, %v474
    %vm478 = vcmask 167058
    %v479 = vsel %vm478, %v172, -inf
    %480 = vmax.xlane.f32.xlu0 %v479
    %v481 = vpop.xlane.xlu0 %480
    %v482 = vsub.f32 %v172, %v481
    %v483 = vmul.f32 %v482, 1.442695
    %v484 = vpow.pop %v483
    %486 = vrot.lane.b32.xlu0 %v484, 110
    %v487 = vpop.permute.xlu0 %486
    %vm489 = vcmask 19458
    %v490 = vsel %vm489, %v487, 0.0
    %491 = vadd.xlane.f32.xlu0 %v490
    %v492 = vpop.xlane.xlu0 %491
    %v493 = vrcp.pop %v492
    %v494 = vmul.f32 %v492, %v493
    %v495 = vsub.f32 1.0, %v494
    %v496 = vmul.f32 %v493, %v495
    %v497 = vadd.f32 %v493, %v496
    %vm498 = vweird.f32 %v492
    %vm499 = vweird.f32 %v493
    %vm500 = vmor %vm498, %vm499
    %v501 = vsel %vm500, %v493, %v497
    %v502 = vand.u32 2147483647, %v492
    %vm503 = vcmp.eq.f32.partialorder %v502, 8.507059e+37
    %v504 = vand.u32 %v492, 2147483648
    %v505 = vor.u32 1.1754944e-38, %v504
    %v506 = vsel %vm503, %v505, %v501
    %v507 = vmul.f32 %v484, %v506
    %508 = vst [vmem:[#allocation1] sm:$0xff] %v110
    %s509 = scalar_lea.vmem [#allocation1], 2
    %v510 = vld [vmem:[%s509] ss:$9 sm:$0xff]
    %s511 = scalar_lea.vmem [#allocation1], 3
    %v512 = vld [vmem:[%s511] ss:$9 sm:$0xff]
    %v513 = vperm.slane %v510, 0
    %v514 = vperm.slane %v512, 0
    %v517 = vmul.f32 %v513, %v115
    %v518 = vmul.f32 %v514, %v116
    %v519 = vsel %vm119, %v517, 0.0
    %520 = vadd.xlane.f32.xlu0 %v519
    %v521 = vpop.xlane.xlu0 %520
    %v522 = vsel %vm119, %v518, 0.0
    %523 = vadd.xlane.f32.xlu0 %v522
    %v524 = vpop.xlane.xlu0 %523
    %vm525 = vcmask 125954
    %v526 = vsel %vm525, %v237, 0.0
    %527 = vadd.xlane.f32.xlu0 %v526
    %v528 = vpop.xlane.xlu0 %527
    %v529 = vrsqrt.pop %v528
    %v530 = vmul.f32 %v529, %v528
    %v531 = vmul.f32 %v530, %v529
    %v532 = vmul.f32 0.5, %v531
    %v533 = vsub.f32 1.5, %v532
    %v534 = vmul.f32 %v529, %v533
    %v535 = vmul.f32 %v528, %v534
    %vm536 = vcmp.eq.f32.partialorder %v528, inf
    %v537 = vsel %vm536, %v528, %v535
    %vm538 = vcmp.eq.f32.partialorder %v528, 0.0
    %v539 = vand.u32 %v528, 2147483648
    %v540 = vsel %vm538, %v539, %v537
    %vm541 = vcmask 1043459
    %v542 = vsel %vm541, %v257, %v256
    %v544 = vmul.f32 %v540, %v542
    %v545 = vadd.f32 %v544, 1e-08
    %v547 = vperm.slane %v545, 2
    %v548 = vlaneseq
    %v549 = vshrl.u32 %v548, 7
    %551 = vset.pattern.permute.xlu0 %v549
    %552 = vperm.xlu0 %551, %v547
    %v553 = vpop.permute.xlu0 %552
    %v554 = vperm.slane %v545, 3
    %v555 = vlaneseq
    %v556 = vshrl.u32 %v555, 7
    %558 = vset.pattern.permute.xlu0 %v556
    %559 = vperm.xlu0 %558, %v554
    %v560 = vpop.permute.xlu0 %559
    %v563 = vrcp.pop %v553
    %v564 = vmul.f32 %v553, %v563
    %v565 = vsub.f32 1.0, %v564
    %v566 = vmul.f32 %v563, %v565
    %v567 = vadd.f32 %v563, %v566
    %vm568 = vweird.f32 %v553
    %vm569 = vweird.f32 %v563
    %vm570 = vmor %vm568, %vm569
    %v571 = vsel %vm570, %v563, %v567
    %v572 = vand.u32 2147483647, %v553
    %vm573 = vcmp.eq.f32.partialorder %v572, 8.507059e+37
    %v574 = vand.u32 %v553, 2147483648
    %v575 = vor.u32 1.1754944e-38, %v574
    %v576 = vsel %vm573, %v575, %v571
    %v577 = vmul.f32 %v521, %v576
    %v578 = vrcp.pop %v560
    %v579 = vmul.f32 %v560, %v578
    %v580 = vsub.f32 1.0, %v579
    %v581 = vmul.f32 %v578, %v580
    %v582 = vadd.f32 %v578, %v581
    %vm583 = vweird.f32 %v560
    %vm584 = vweird.f32 %v578
    %vm585 = vmor %vm583, %vm584
    %v586 = vsel %vm585, %v578, %v582
    %v587 = vand.u32 2147483647, %v560
    %vm588 = vcmp.eq.f32.partialorder %v587, 8.507059e+37
    %v589 = vand.u32 %v560, 2147483648
    %v590 = vor.u32 1.1754944e-38, %v589
    %v591 = vsel %vm588, %v590, %v586
    %v592 = vmul.f32 %v524, %v591
    %595 = vset.pattern.permute.xlu0 0
    %596 = vperm.xlu0 %595, %v577
    %v597 = vpop.permute.xlu0 %596
    %598 = vset.pattern.permute.xlu0 0
    %599 = vperm.xlu0 %598, %v592
    %v600 = vpop.permute.xlu0 %599
    %v601 = vperm.slane %v597, %v153
    %v602 = vperm.slane %v600, %v153
    %v603 = vsel %vm541, %v602, %v601
    %v605 = vmul.f32 %v313, %v603
    %vm606 = vcmask 60418
    %v607 = vsel %vm606, %v605, -inf
    %608 = vmax.xlane.f32.xlu0 %v607
    %v609 = vpop.xlane.xlu0 %608
    %v610 = vsub.f32 %v605, %v609
    %v611 = vmul.f32 %v610, 1.442695
    %v612 = vpow.pop %v611
    %v613 = vsel %vm606, %v612, 0.0
    %614 = vadd.xlane.f32.xlu0 %v613
    %v615 = vpop.xlane.xlu0 %614
    %v616 = vrcp.pop %v615
    %v617 = vmul.f32 %v615, %v616
    %v618 = vsub.f32 1.0, %v617
    %v619 = vmul.f32 %v616, %v618
    %v620 = vadd.f32 %v616, %v619
    %vm621 = vweird.f32 %v615
    %vm622 = vweird.f32 %v616
    %vm623 = vmor %vm621, %vm622
    %v624 = vsel %vm623, %v616, %v620
    %v625 = vand.u32 2147483647, %v615
    %vm626 = vcmp.eq.f32.partialorder %v625, 8.507059e+37
    %v627 = vand.u32 %v615, 2147483648
    %v628 = vor.u32 1.1754944e-38, %v627
    %v629 = vsel %vm626, %v628, %v624
    %v630 = vmul.f32 %v612, %v629
    %v631 = vmul.f32 %v356, %v630
    %v632 = vrot.slane %v469, 6
    %v634 = vmul.f32 %v363, %v632
    %v635 = vadd.f32 %v631, %v634
    %v636 = vperm.slane %v635, 2
    %v637 = vlaneseq
    %v638 = vshrl.u32 %v637, 7
    %640 = vset.pattern.permute.xlu0 %v638
    %641 = vperm.xlu0 %640, %v636
    %v642 = vpop.permute.xlu0 %641
    %v643 = vperm.slane %v635, 3
    %v644 = vlaneseq
    %v645 = vshrl.u32 %v644, 7
    %647 = vset.pattern.permute.xlu0 %v645
    %648 = vperm.xlu0 %647, %v643
    %v649 = vpop.permute.xlu0 %648
    %v650 = vmul.f32 %v642, %v158
    %v651 = vmul.f32 %v649, %v158
    %v652 = vsel %vm383, %v650, 0.0
    %v653 = vrot.slane %v652, 4
    %v654 = vadd.f32 %v652, %v653
    %v655 = vrot.slane %v654, 2
    %v656 = vadd.f32 %v654, %v655
    %v657 = vrot.slane %v656, 1
    %v658 = vadd.f32 %v656, %v657
    %v659 = vsel %vm383, %v651, 0.0
    %v660 = vrot.slane %v659, 4
    %v661 = vadd.f32 %v659, %v660
    %v662 = vrot.slane %v661, 2
    %v663 = vadd.f32 %v661, %v662
    %v664 = vrot.slane %v663, 1
    %v665 = vadd.f32 %v663, %v664
    %v666 = vmul.f32 %v642, %v162
    %v667 = vmul.f32 %v649, %v162
    %v668 = vsel %vm383, %v666, 0.0
    %v669 = vrot.slane %v668, 4
    %v670 = vadd.f32 %v668, %v669
    %v671 = vrot.slane %v670, 2
    %v672 = vadd.f32 %v670, %v671
    %v673 = vrot.slane %v672, 1
    %v674 = vadd.f32 %v672, %v673
    %v675 = vsel %vm383, %v667, 0.0
    %v676 = vrot.slane %v675, 4
    %v677 = vadd.f32 %v675, %v676
    %v678 = vrot.slane %v677, 2
    %v679 = vadd.f32 %v677, %v678
    %v680 = vrot.slane %v679, 1
    %v681 = vadd.f32 %v679, %v680
    %683 = vset.pattern.permute.xlu0 18
    %684 = vperm.xlu0 %683, %v507
    %v685 = vpop.permute.xlu0 %684
    %v689 = vsel %vm541, %v665, %v658
    %v691 = vmul.f32 %v685, %v689
    %692 = vset.pattern.permute.xlu0 19
    %693 = vperm.xlu0 %692, %v507
    %v694 = vpop.permute.xlu0 %693
    %v696 = vmul.f32 %v694, %v635
    %v697 = vadd.f32 %v691, %v696
    %698 = vset.pattern.permute.xlu0 20
    %699 = vperm.xlu0 %698, %v507
    %v700 = vpop.permute.xlu0 %699
    %v704 = vsel %vm541, %v681, %v674
    %v706 = vmul.f32 %v700, %v704
    %v707 = vadd.f32 %v697, %v706
    %v708 = vmax.f32 %v707, 1e-08
    %v709 = vlog2.pop %v708
    %v710 = vmul.f32 %v709, 0.6931472
    %v711 = vmul.f32 %v446, %v710
    %v712 = vmul.f32 %v711, 1.442695
    %v713 = vpow.pop %v712
    %v714 = vsel %vm606, %v713, 0.0
    %715 = vadd.xlane.f32.xlu0 %v714
    %v716 = vpop.xlane.xlu0 %715
    %v717 = vadd.f32 %v716, 1e-08
    %v718 = vrcp.pop %v717
    %v719 = vmul.f32 %v717, %v718
    %v720 = vsub.f32 1.0, %v719
    %v721 = vmul.f32 %v718, %v720
    %v722 = vadd.f32 %v718, %v721
    %vm723 = vweird.f32 %v717
    %vm724 = vweird.f32 %v718
    %vm725 = vmor %vm723, %vm724
    %v726 = vsel %vm725, %v718, %v722
    %v727 = vand.u32 2147483647, %v717
    %vm728 = vcmp.eq.f32.partialorder %v727, 8.507059e+37
    %v729 = vand.u32 %v717, 2147483648
    %v730 = vor.u32 1.1754944e-38, %v729
    %v731 = vsel %vm728, %v730, %v726
    %v732 = vmul.f32 %v713, %v731
    %734 = vrot.lane.b32.xlu0 %v732, 16
    %v735 = vpop.permute.xlu0 %734
    %vm737 = vcmask 190594
    %738 = vst.msk [vmem:[%s5 - $0x2] sm:$0x4] %vm737, %v735
    %739 = vrot.lane.b32.xlu0 %v732, 24
    %v740 = vpop.permute.xlu0 %739
    %vm742 = vcmask 257219
    %743 = vst.msk [vmem:[%s5 - $0x3] sm:$0x8] %vm742, %v740
    %vm744 = vcmask 169108
    %v745 = vsel %vm744, %v172, -inf
    %746 = vmax.xlane.f32.xlu0 %v745
    %v747 = vpop.xlane.xlu0 %746
    %v748 = vsub.f32 %v172, %v747
    %v749 = vmul.f32 %v748, 1.442695
    %v750 = vpow.pop %v749
    %752 = vrot.lane.b32.xlu0 %v750, 110
    %v753 = vpop.permute.xlu0 %752
    %vm755 = vcmask 21508
    %v756 = vsel %vm755, %v753, 0.0
    %757 = vadd.xlane.f32.xlu0 %v756
    %v758 = vpop.xlane.xlu0 %757
    %v759 = vrcp.pop %v758
    %v760 = vmul.f32 %v758, %v759
    %v761 = vsub.f32 1.0, %v760
    %v762 = vmul.f32 %v759, %v761
    %v763 = vadd.f32 %v759, %v762
    %vm764 = vweird.f32 %v758
    %vm765 = vweird.f32 %v759
    %vm766 = vmor %vm764, %vm765
    %v767 = vsel %vm766, %v759, %v763
    %v768 = vand.u32 2147483647, %v758
    %vm769 = vcmp.eq.f32.partialorder %v768, 8.507059e+37
    %v770 = vand.u32 %v758, 2147483648
    %v771 = vor.u32 1.1754944e-38, %v770
    %v772 = vsel %vm769, %v771, %v767
    %v773 = vmul.f32 %v750, %v772
    %774 = vst [vmem:[#allocation1] sm:$0xff] %v110
    %s775 = scalar_lea.vmem [#allocation1], 4
    %v776 = vld [vmem:[%s775] ss:$9 sm:$0xff]
    %s777 = scalar_lea.vmem [#allocation1], 5
    %v778 = vld [vmem:[%s777] ss:$9 sm:$0xff]
    %v779 = vperm.slane %v776, 0
    %v780 = vperm.slane %v778, 0
    %v783 = vmul.f32 %v779, %v115
    %v784 = vmul.f32 %v780, %v116
    %v785 = vsel %vm119, %v783, 0.0
    %786 = vadd.xlane.f32.xlu0 %v785
    %v787 = vpop.xlane.xlu0 %786
    %v788 = vsel %vm119, %v784, 0.0
    %789 = vadd.xlane.f32.xlu0 %v788
    %v790 = vpop.xlane.xlu0 %789
    %vm791 = vcmask 128004
    %v792 = vsel %vm791, %v237, 0.0
    %793 = vadd.xlane.f32.xlu0 %v792
    %v794 = vpop.xlane.xlu0 %793
    %v795 = vrsqrt.pop %v794
    %v796 = vmul.f32 %v795, %v794
    %v797 = vmul.f32 %v796, %v795
    %v798 = vmul.f32 0.5, %v797
    %v799 = vsub.f32 1.5, %v798
    %v800 = vmul.f32 %v795, %v799
    %v801 = vmul.f32 %v794, %v800
    %vm802 = vcmp.eq.f32.partialorder %v794, inf
    %v803 = vsel %vm802, %v794, %v801
    %vm804 = vcmp.eq.f32.partialorder %v794, 0.0
    %v805 = vand.u32 %v794, 2147483648
    %v806 = vsel %vm804, %v805, %v803
    %vm807 = vcmask 1045509
    %v808 = vsel %vm807, %v257, %v256
    %v810 = vmul.f32 %v806, %v808
    %v811 = vadd.f32 %v810, 1e-08
    %v813 = vperm.slane %v811, 4
    %v814 = vlaneseq
    %v815 = vshrl.u32 %v814, 7
    %817 = vset.pattern.permute.xlu0 %v815
    %818 = vperm.xlu0 %817, %v813
    %v819 = vpop.permute.xlu0 %818
    %v820 = vperm.slane %v811, 5
    %v821 = vlaneseq
    %v822 = vshrl.u32 %v821, 7
    %824 = vset.pattern.permute.xlu0 %v822
    %825 = vperm.xlu0 %824, %v820
    %v826 = vpop.permute.xlu0 %825
    %v829 = vrcp.pop %v819
    %v830 = vmul.f32 %v819, %v829
    %v831 = vsub.f32 1.0, %v830
    %v832 = vmul.f32 %v829, %v831
    %v833 = vadd.f32 %v829, %v832
    %vm834 = vweird.f32 %v819
    %vm835 = vweird.f32 %v829
    %vm836 = vmor %vm834, %vm835
    %v837 = vsel %vm836, %v829, %v833
    %v838 = vand.u32 2147483647, %v819
    %vm839 = vcmp.eq.f32.partialorder %v838, 8.507059e+37
    %v840 = vand.u32 %v819, 2147483648
    %v841 = vor.u32 1.1754944e-38, %v840
    %v842 = vsel %vm839, %v841, %v837
    %v843 = vmul.f32 %v787, %v842
    %v844 = vrcp.pop %v826
    %v845 = vmul.f32 %v826, %v844
    %v846 = vsub.f32 1.0, %v845
    %v847 = vmul.f32 %v844, %v846
    %v848 = vadd.f32 %v844, %v847
    %vm849 = vweird.f32 %v826
    %vm850 = vweird.f32 %v844
    %vm851 = vmor %vm849, %vm850
    %v852 = vsel %vm851, %v844, %v848
    %v853 = vand.u32 2147483647, %v826
    %vm854 = vcmp.eq.f32.partialorder %v853, 8.507059e+37
    %v855 = vand.u32 %v826, 2147483648
    %v856 = vor.u32 1.1754944e-38, %v855
    %v857 = vsel %vm854, %v856, %v852
    %v858 = vmul.f32 %v790, %v857
    %861 = vset.pattern.permute.xlu0 0
    %862 = vperm.xlu0 %861, %v843
    %v863 = vpop.permute.xlu0 %862
    %864 = vset.pattern.permute.xlu0 0
    %865 = vperm.xlu0 %864, %v858
    %v866 = vpop.permute.xlu0 %865
    %v867 = vperm.slane %v863, %v153
    %v868 = vperm.slane %v866, %v153
    %v869 = vsel %vm807, %v868, %v867
    %v871 = vmul.f32 %v313, %v869
    %vm872 = vcmask 62468
    %v873 = vsel %vm872, %v871, -inf
    %874 = vmax.xlane.f32.xlu0 %v873
    %v875 = vpop.xlane.xlu0 %874
    %v876 = vsub.f32 %v871, %v875
    %v877 = vmul.f32 %v876, 1.442695
    %v878 = vpow.pop %v877
    %v879 = vsel %vm872, %v878, 0.0
    %880 = vadd.xlane.f32.xlu0 %v879
    %v881 = vpop.xlane.xlu0 %880
    %v882 = vrcp.pop %v881
    %v883 = vmul.f32 %v881, %v882
    %v884 = vsub.f32 1.0, %v883
    %v885 = vmul.f32 %v882, %v884
    %v886 = vadd.f32 %v882, %v885
    %vm887 = vweird.f32 %v881
    %vm888 = vweird.f32 %v882
    %vm889 = vmor %vm887, %vm888
    %v890 = vsel %vm889, %v882, %v886
    %v891 = vand.u32 2147483647, %v881
    %vm892 = vcmp.eq.f32.partialorder %v891, 8.507059e+37
    %v893 = vand.u32 %v881, 2147483648
    %v894 = vor.u32 1.1754944e-38, %v893
    %v895 = vsel %vm892, %v894, %v890
    %v896 = vmul.f32 %v878, %v895
    %v897 = vmul.f32 %v356, %v896
    %v898 = vrot.slane %v732, 6
    %v900 = vmul.f32 %v363, %v898
    %v901 = vadd.f32 %v897, %v900
    %v902 = vperm.slane %v901, 4
    %v903 = vlaneseq
    %v904 = vshrl.u32 %v903, 7
    %906 = vset.pattern.permute.xlu0 %v904
    %907 = vperm.xlu0 %906, %v902
    %v908 = vpop.permute.xlu0 %907
    %v909 = vperm.slane %v901, 5
    %v910 = vlaneseq
    %v911 = vshrl.u32 %v910, 7
    %913 = vset.pattern.permute.xlu0 %v911
    %914 = vperm.xlu0 %913, %v909
    %v915 = vpop.permute.xlu0 %914
    %v916 = vmul.f32 %v908, %v158
    %v917 = vmul.f32 %v915, %v158
    %v918 = vsel %vm383, %v916, 0.0
    %v919 = vrot.slane %v918, 4
    %v920 = vadd.f32 %v918, %v919
    %v921 = vrot.slane %v920, 2
    %v922 = vadd.f32 %v920, %v921
    %v923 = vrot.slane %v922, 1
    %v924 = vadd.f32 %v922, %v923
    %v925 = vsel %vm383, %v917, 0.0
    %v926 = vrot.slane %v925, 4
    %v927 = vadd.f32 %v925, %v926
    %v928 = vrot.slane %v927, 2
    %v929 = vadd.f32 %v927, %v928
    %v930 = vrot.slane %v929, 1
    %v931 = vadd.f32 %v929, %v930
    %v932 = vmul.f32 %v908, %v162
    %v933 = vmul.f32 %v915, %v162
    %v934 = vsel %vm383, %v932, 0.0
    %v935 = vrot.slane %v934, 4
    %v936 = vadd.f32 %v934, %v935
    %v937 = vrot.slane %v936, 2
    %v938 = vadd.f32 %v936, %v937
    %v939 = vrot.slane %v938, 1
    %v940 = vadd.f32 %v938, %v939
    %v941 = vsel %vm383, %v933, 0.0
    %v942 = vrot.slane %v941, 4
    %v943 = vadd.f32 %v941, %v942
    %v944 = vrot.slane %v943, 2
    %v945 = vadd.f32 %v943, %v944
    %v946 = vrot.slane %v945, 1
    %v947 = vadd.f32 %v945, %v946
    %949 = vset.pattern.permute.xlu0 18
    %950 = vperm.xlu0 %949, %v773
    %v951 = vpop.permute.xlu0 %950
    %v955 = vsel %vm807, %v931, %v924
    %v957 = vmul.f32 %v951, %v955
    %958 = vset.pattern.permute.xlu0 19
    %959 = vperm.xlu0 %958, %v773
    %v960 = vpop.permute.xlu0 %959
    %v962 = vmul.f32 %v960, %v901
    %v963 = vadd.f32 %v957, %v962
    %964 = vset.pattern.permute.xlu0 20
    %965 = vperm.xlu0 %964, %v773
    %v966 = vpop.permute.xlu0 %965
    %v970 = vsel %vm807, %v947, %v940
    %v972 = vmul.f32 %v966, %v970
    %v973 = vadd.f32 %v963, %v972
    %v974 = vmax.f32 %v973, 1e-08
    %v975 = vlog2.pop %v974
    %v976 = vmul.f32 %v975, 0.6931472
    %v977 = vmul.f32 %v446, %v976
    %v978 = vmul.f32 %v977, 1.442695
    %v979 = vpow.pop %v978
    %v980 = vsel %vm872, %v979, 0.0
    %981 = vadd.xlane.f32.xlu0 %v980
    %v982 = vpop.xlane.xlu0 %981
    %v983 = vadd.f32 %v982, 1e-08
    %v984 = vrcp.pop %v983
    %v985 = vmul.f32 %v983, %v984
    %v986 = vsub.f32 1.0, %v985
    %v987 = vmul.f32 %v984, %v986
    %v988 = vadd.f32 %v984, %v987
    %vm989 = vweird.f32 %v983
    %vm990 = vweird.f32 %v984
    %vm991 = vmor %vm989, %vm990
    %v992 = vsel %vm991, %v984, %v988
    %v993 = vand.u32 2147483647, %v983
    %vm994 = vcmp.eq.f32.partialorder %v993, 8.507059e+37
    %v995 = vand.u32 %v983, 2147483648
    %v996 = vor.u32 1.1754944e-38, %v995
    %v997 = vsel %vm994, %v996, %v992
    %v998 = vmul.f32 %v979, %v997
    %1000 = vrot.lane.b32.xlu0 %v998, 32
    %v1001 = vpop.permute.xlu0 %1000
    %vm1003 = vcmask 323844
    %1004 = vst.msk [vmem:[%s5 - $0x4] sm:$0x10] %vm1003, %v1001
    %1005 = vrot.lane.b32.xlu0 %v998, 40
    %v1006 = vpop.permute.xlu0 %1005
    %vm1008 = vcmask 390469
    %1009 = vst.msk [vmem:[%s5 - $0x5] sm:$0x20] %vm1008, %v1006
    %vm1010 = vcmask 171158
    %v1011 = vsel %vm1010, %v172, -inf
    %1012 = vmax.xlane.f32.xlu0 %v1011
    %v1013 = vpop.xlane.xlu0 %1012
    %v1014 = vsub.f32 %v172, %v1013
    %v1015 = vmul.f32 %v1014, 1.442695
    %v1016 = vpow.pop %v1015
    %1018 = vrot.lane.b32.xlu0 %v1016, 110
    %v1019 = vpop.permute.xlu0 %1018
    %vm1021 = vcmask 23558
    %v1022 = vsel %vm1021, %v1019, 0.0
    %1023 = vadd.xlane.f32.xlu0 %v1022
    %v1024 = vpop.xlane.xlu0 %1023
    %v1025 = vrcp.pop %v1024
    %v1026 = vmul.f32 %v1024, %v1025
    %v1027 = vsub.f32 1.0, %v1026
    %v1028 = vmul.f32 %v1025, %v1027
    %v1029 = vadd.f32 %v1025, %v1028
    %vm1030 = vweird.f32 %v1024
    %vm1031 = vweird.f32 %v1025
    %vm1032 = vmor %vm1030, %vm1031
    %v1033 = vsel %vm1032, %v1025, %v1029
    %v1034 = vand.u32 2147483647, %v1024
    %vm1035 = vcmp.eq.f32.partialorder %v1034, 8.507059e+37
    %v1036 = vand.u32 %v1024, 2147483648
    %v1037 = vor.u32 1.1754944e-38, %v1036
    %v1038 = vsel %vm1035, %v1037, %v1033
    %v1039 = vmul.f32 %v1016, %v1038
    %1040 = vst [vmem:[#allocation1] sm:$0xff] %v110
    %s1041 = scalar_lea.vmem [#allocation1], 6
    %v1042 = vld [vmem:[%s1041] ss:$9 sm:$0xff]
    %s1043 = scalar_lea.vmem [#allocation1], 7
    %v1044 = vld [vmem:[%s1043] ss:$9 sm:$0xff]
    %v1045 = vperm.slane %v1042, 0
    %v1046 = vperm.slane %v1044, 0
    %v1049 = vmul.f32 %v1045, %v115
    %v1050 = vmul.f32 %v1046, %v116
    %v1051 = vsel %vm119, %v1049, 0.0
    %1052 = vadd.xlane.f32.xlu0 %v1051
    %v1053 = vpop.xlane.xlu0 %1052
    %v1054 = vsel %vm119, %v1050, 0.0
    %1055 = vadd.xlane.f32.xlu0 %v1054
    %v1056 = vpop.xlane.xlu0 %1055
    %vm1057 = vcmask 130054
    %v1058 = vsel %vm1057, %v237, 0.0
    %1059 = vadd.xlane.f32.xlu0 %v1058
    %v1060 = vpop.xlane.xlu0 %1059
    %v1061 = vrsqrt.pop %v1060
    %v1062 = vmul.f32 %v1061, %v1060
    %v1063 = vmul.f32 %v1062, %v1061
    %v1064 = vmul.f32 0.5, %v1063
    %v1065 = vsub.f32 1.5, %v1064
    %v1066 = vmul.f32 %v1061, %v1065
    %v1067 = vmul.f32 %v1060, %v1066
    %vm1068 = vcmp.eq.f32.partialorder %v1060, inf
    %v1069 = vsel %vm1068, %v1060, %v1067
    %vm1070 = vcmp.eq.f32.partialorder %v1060, 0.0
    %v1071 = vand.u32 %v1060, 2147483648
    %v1072 = vsel %vm1070, %v1071, %v1069
    %vm1073 = vcmask 1047559
    %v1074 = vsel %vm1073, %v257, %v256
    %v1076 = vmul.f32 %v1072, %v1074
    %v1077 = vadd.f32 %v1076, 1e-08
    %v1079 = vperm.slane %v1077, 6
    %v1080 = vlaneseq
    %v1081 = vshrl.u32 %v1080, 7
    %1083 = vset.pattern.permute.xlu0 %v1081
    %1084 = vperm.xlu0 %1083, %v1079
    %v1085 = vpop.permute.xlu0 %1084
    %v1086 = vperm.slane %v1077, 7
    %v1087 = vlaneseq
    %v1088 = vshrl.u32 %v1087, 7
    %1090 = vset.pattern.permute.xlu0 %v1088
    %1091 = vperm.xlu0 %1090, %v1086
    %v1092 = vpop.permute.xlu0 %1091
    %v1095 = vrcp.pop %v1085
    %v1096 = vmul.f32 %v1085, %v1095
    %v1097 = vsub.f32 1.0, %v1096
    %v1098 = vmul.f32 %v1095, %v1097
    %v1099 = vadd.f32 %v1095, %v1098
    %vm1100 = vweird.f32 %v1085
    %vm1101 = vweird.f32 %v1095
    %vm1102 = vmor %vm1100, %vm1101
    %v1103 = vsel %vm1102, %v1095, %v1099
    %v1104 = vand.u32 2147483647, %v1085
    %vm1105 = vcmp.eq.f32.partialorder %v1104, 8.507059e+37
    %v1106 = vand.u32 %v1085, 2147483648
    %v1107 = vor.u32 1.1754944e-38, %v1106
    %v1108 = vsel %vm1105, %v1107, %v1103
    %v1109 = vmul.f32 %v1053, %v1108
    %v1110 = vrcp.pop %v1092
    %v1111 = vmul.f32 %v1092, %v1110
    %v1112 = vsub.f32 1.0, %v1111
    %v1113 = vmul.f32 %v1110, %v1112
    %v1114 = vadd.f32 %v1110, %v1113
    %vm1115 = vweird.f32 %v1092
    %vm1116 = vweird.f32 %v1110
    %vm1117 = vmor %vm1115, %vm1116
    %v1118 = vsel %vm1117, %v1110, %v1114
    %v1119 = vand.u32 2147483647, %v1092
    %vm1120 = vcmp.eq.f32.partialorder %v1119, 8.507059e+37
    %v1121 = vand.u32 %v1092, 2147483648
    %v1122 = vor.u32 1.1754944e-38, %v1121
    %v1123 = vsel %vm1120, %v1122, %v1118
    %v1124 = vmul.f32 %v1056, %v1123
    %1127 = vset.pattern.permute.xlu0 0
    %1128 = vperm.xlu0 %1127, %v1109
    %v1129 = vpop.permute.xlu0 %1128
    %1130 = vset.pattern.permute.xlu0 0
    %1131 = vperm.xlu0 %1130, %v1124
    %v1132 = vpop.permute.xlu0 %1131
    %v1133 = vperm.slane %v1129, %v153
    %v1134 = vperm.slane %v1132, %v153
    %v1135 = vsel %vm1073, %v1134, %v1133
    %v1137 = vmul.f32 %v313, %v1135
    %vm1138 = vcmask 64518
    %v1139 = vsel %vm1138, %v1137, -inf
    %1140 = vmax.xlane.f32.xlu0 %v1139
    %v1141 = vpop.xlane.xlu0 %1140
    %v1142 = vsub.f32 %v1137, %v1141
    %v1143 = vmul.f32 %v1142, 1.442695
    %v1144 = vpow.pop %v1143
    %v1145 = vsel %vm1138, %v1144, 0.0
    %1146 = vadd.xlane.f32.xlu0 %v1145
    %v1147 = vpop.xlane.xlu0 %1146
    %v1148 = vrcp.pop %v1147
    %v1149 = vmul.f32 %v1147, %v1148
    %v1150 = vsub.f32 1.0, %v1149
    %v1151 = vmul.f32 %v1148, %v1150
    %v1152 = vadd.f32 %v1148, %v1151
    %vm1153 = vweird.f32 %v1147
    %vm1154 = vweird.f32 %v1148
    %vm1155 = vmor %vm1153, %vm1154
    %v1156 = vsel %vm1155, %v1148, %v1152
    %v1157 = vand.u32 2147483647, %v1147
    %vm1158 = vcmp.eq.f32.partialorder %v1157, 8.507059e+37
    %v1159 = vand.u32 %v1147, 2147483648
    %v1160 = vor.u32 1.1754944e-38, %v1159
    %v1161 = vsel %vm1158, %v1160, %v1156
    %v1162 = vmul.f32 %v1144, %v1161
    %v1163 = vmul.f32 %v356, %v1162
    %v1164 = vrot.slane %v998, 6
    %v1166 = vmul.f32 %v363, %v1164
    %v1167 = vadd.f32 %v1163, %v1166
    %v1168 = vperm.slane %v1167, 6
    %v1169 = vlaneseq
    %v1170 = vshrl.u32 %v1169, 7
    %1172 = vset.pattern.permute.xlu0 %v1170
    %1173 = vperm.xlu0 %1172, %v1168
    %v1174 = vpop.permute.xlu0 %1173
    %v1175 = vperm.slane %v1167, 7
    %v1176 = vlaneseq
    %v1177 = vshrl.u32 %v1176, 7
    %1179 = vset.pattern.permute.xlu0 %v1177
    %1180 = vperm.xlu0 %1179, %v1175
    %v1181 = vpop.permute.xlu0 %1180
    %v1182 = vmul.f32 %v1174, %v158
    %v1183 = vmul.f32 %v1181, %v158
    %v1184 = vsel %vm383, %v1182, 0.0
    %v1185 = vrot.slane %v1184, 4
    %v1186 = vadd.f32 %v1184, %v1185
    %v1187 = vrot.slane %v1186, 2
    %v1188 = vadd.f32 %v1186, %v1187
    %v1189 = vrot.slane %v1188, 1
    %v1190 = vadd.f32 %v1188, %v1189
    %v1191 = vsel %vm383, %v1183, 0.0
    %v1192 = vrot.slane %v1191, 4
    %v1193 = vadd.f32 %v1191, %v1192
    %v1194 = vrot.slane %v1193, 2
    %v1195 = vadd.f32 %v1193, %v1194
    %v1196 = vrot.slane %v1195, 1
    %v1197 = vadd.f32 %v1195, %v1196
    %v1198 = vmul.f32 %v1174, %v162
    %v1199 = vmul.f32 %v1181, %v162
    %v1200 = vsel %vm383, %v1198, 0.0
    %v1201 = vrot.slane %v1200, 4
    %v1202 = vadd.f32 %v1200, %v1201
    %v1203 = vrot.slane %v1202, 2
    %v1204 = vadd.f32 %v1202, %v1203
    %v1205 = vrot.slane %v1204, 1
    %v1206 = vadd.f32 %v1204, %v1205
    %v1207 = vsel %vm383, %v1199, 0.0
    %v1208 = vrot.slane %v1207, 4
    %v1209 = vadd.f32 %v1207, %v1208
    %v1210 = vrot.slane %v1209, 2
    %v1211 = vadd.f32 %v1209, %v1210
    %v1212 = vrot.slane %v1211, 1
    %v1213 = vadd.f32 %v1211, %v1212
    %1215 = vset.pattern.permute.xlu0 18
    %1216 = vperm.xlu0 %1215, %v1039
    %v1217 = vpop.permute.xlu0 %1216
    %v1221 = vsel %vm1073, %v1197, %v1190
    %v1223 = vmul.f32 %v1217, %v1221
    %1224 = vset.pattern.permute.xlu0 19
    %1225 = vperm.xlu0 %1224, %v1039
    %v1226 = vpop.permute.xlu0 %1225
    %v1228 = vmul.f32 %v1226, %v1167
    %v1229 = vadd.f32 %v1223, %v1228
    %1230 = vset.pattern.permute.xlu0 20
    %1231 = vperm.xlu0 %1230, %v1039
    %v1232 = vpop.permute.xlu0 %1231
    %v1236 = vsel %vm1073, %v1213, %v1206
    %v1238 = vmul.f32 %v1232, %v1236
    %v1239 = vadd.f32 %v1229, %v1238
    %v1240 = vmax.f32 %v1239, 1e-08
    %v1241 = vlog2.pop %v1240
    %v1242 = vmul.f32 %v1241, 0.6931472
    %v1243 = vmul.f32 %v446, %v1242
    %v1244 = vmul.f32 %v1243, 1.442695
    %v1245 = vpow.pop %v1244
    %v1246 = vsel %vm1138, %v1245, 0.0
    %1247 = vadd.xlane.f32.xlu0 %v1246
    %v1248 = vpop.xlane.xlu0 %1247
    %v1249 = vadd.f32 %v1248, 1e-08
    %v1250 = vrcp.pop %v1249
    %v1251 = vmul.f32 %v1249, %v1250
    %v1252 = vsub.f32 1.0, %v1251
    %v1253 = vmul.f32 %v1250, %v1252
    %v1254 = vadd.f32 %v1250, %v1253
    %vm1255 = vweird.f32 %v1249
    %vm1256 = vweird.f32 %v1250
    %vm1257 = vmor %vm1255, %vm1256
    %v1258 = vsel %vm1257, %v1250, %v1254
    %v1259 = vand.u32 2147483647, %v1249
    %vm1260 = vcmp.eq.f32.partialorder %v1259, 8.507059e+37
    %v1261 = vand.u32 %v1249, 2147483648
    %v1262 = vor.u32 1.1754944e-38, %v1261
    %v1263 = vsel %vm1260, %v1262, %v1258
    %v1264 = vmul.f32 %v1245, %v1263
    %1266 = vrot.lane.b32.xlu0 %v1264, 48
    %v1267 = vpop.permute.xlu0 %1266
    %vm1269 = vcmask 457094
    %1270 = vst.msk [vmem:[%s5 - $0x6] sm:$0x40] %vm1269, %v1267
    %1271 = vrot.lane.b32.xlu0 %v1264, 56
    %v1272 = vpop.permute.xlu0 %1271
    %vm1274 = vcmask 523719
    %1275 = vst.msk [vmem:[%s5 - $0x7] sm:$0x80] %vm1274, %v1272
    %v1276 = vmax.f32 %v113, 0.0
    %v1277 = vand.u32 2147483647, %v113
    %v1278 = vsub.f32 0.0, %v1277
    %v1279 = vmul.f32 %v1278, 1.442695
    %v1280 = vpow.pop %v1279
    %v1281 = vadd.f32 %v1280, 1.0
    %v1282 = vlog2.pop %v1281
    %v1283 = vmul.f32 %v1282, 0.6931472
    %v1284 = vadd.f32 %v1276, %v1283
    %v1285 = vsub.f32 0.0, %v113
    %v1286 = vmul.f32 %v1285, 1.442695
    %v1287 = vpow.pop %v1286
    %v1288 = vadd.f32 %v1287, 1.0
    %v1289 = vrcp.pop %v1288
    %v1290 = vmul.f32 %v1288, %v1289
    %v1291 = vsub.f32 1.0, %v1290
    %v1292 = vmul.f32 %v1289, %v1291
    %v1293 = vadd.f32 %v1289, %v1292
    %vm1294 = vweird.f32 %v1288
    %vm1295 = vweird.f32 %v1289
    %vm1296 = vmor %vm1294, %vm1295
    %v1297 = vsel %vm1296, %v1289, %v1293
    %v1298 = vand.u32 2147483647, %v1288
    %vm1299 = vcmp.eq.f32.partialorder %v1298, 8.507059e+37
    %v1300 = vand.u32 %v1288, 2147483648
    %v1301 = vor.u32 1.1754944e-38, %v1300
    %v1302 = vsel %vm1299, %v1301, %v1297
    %v1303 = vmul.f32 1.0, %v1302
    %v1304 = vsel %vm192, %v1284, -inf
    %1305 = vmax.xlane.f32.xlu0 %v1304
    %v1306 = vpop.xlane.xlu0 %1305
    %v1307 = vsub.f32 %v1284, %v1306
    %v1308 = vmul.f32 %v1307, 1.442695
    %v1309 = vpow.pop %v1308
    %1311 = vrot.lane.b32.xlu0 %v1309, 110
    %v1312 = vpop.permute.xlu0 %1311
    %v1314 = vsel %vm203, %v1312, 0.0
    %1315 = vadd.xlane.f32.xlu0 %v1314
    %v1316 = vpop.xlane.xlu0 %1315
    %v1317 = vrcp.pop %v1316
    %v1318 = vmul.f32 %v1316, %v1317
    %v1319 = vsub.f32 1.0, %v1318
    %v1320 = vmul.f32 %v1317, %v1319
    %v1321 = vadd.f32 %v1317, %v1320
    %vm1322 = vweird.f32 %v1316
    %vm1323 = vweird.f32 %v1317
    %vm1324 = vmor %vm1322, %vm1323
    %v1325 = vsel %vm1324, %v1317, %v1321
    %v1326 = vand.u32 2147483647, %v1316
    %vm1327 = vcmp.eq.f32.partialorder %v1326, 8.507059e+37
    %v1328 = vand.u32 %v1316, 2147483648
    %v1329 = vor.u32 1.1754944e-38, %v1328
    %v1330 = vsel %vm1327, %v1329, %v1325
    %v1331 = vmul.f32 %v1309, %v1330
    %v1332 = vadd.f32 %v1284, 1.0
    %v1334 = vrot.slane %v113, 1
    %v1335 = vperm.slane %v113, 0
    %v1336 = vperm.slane %v1334, 0
    %v1339 = vmul.f32 %v1335, %v115
    %v1340 = vmul.f32 %v1336, %v116
    %v1341 = vsel %vm119, %v1339, 0.0
    %1342 = vadd.xlane.f32.xlu0 %v1341
    %v1343 = vpop.xlane.xlu0 %1342
    %v1344 = vsel %vm119, %v1340, 0.0
    %1345 = vadd.xlane.f32.xlu0 %v1344
    %v1346 = vpop.xlane.xlu0 %1345
    %v1347 = vmul.f32 %v113, %v113
    %v1348 = vsel %vm238, %v1347, 0.0
    %1349 = vadd.xlane.f32.xlu0 %v1348
    %v1350 = vpop.xlane.xlu0 %1349
    %v1351 = vrsqrt.pop %v1350
    %v1352 = vmul.f32 %v1351, %v1350
    %v1353 = vmul.f32 %v1352, %v1351
    %v1354 = vmul.f32 0.5, %v1353
    %v1355 = vsub.f32 1.5, %v1354
    %v1356 = vmul.f32 %v1351, %v1355
    %v1357 = vmul.f32 %v1350, %v1356
    %vm1358 = vcmp.eq.f32.partialorder %v1350, inf
    %v1359 = vsel %vm1358, %v1350, %v1357
    %vm1360 = vcmp.eq.f32.partialorder %v1350, 0.0
    %v1361 = vand.u32 %v1350, 2147483648
    %v1362 = vsel %vm1360, %v1361, %v1359
    %v1363 = vmul.f32 %v1362, %v259
    %v1364 = vadd.f32 %v1363, 1e-08
    %v1366 = vperm.slane %v1364, 0
    %v1367 = vlaneseq
    %v1368 = vshrl.u32 %v1367, 7
    %1370 = vset.pattern.permute.xlu0 %v1368
    %1371 = vperm.xlu0 %1370, %v1366
    %v1372 = vpop.permute.xlu0 %1371
    %v1373 = vperm.slane %v1364, 1
    %v1374 = vlaneseq
    %v1375 = vshrl.u32 %v1374, 7
    %1377 = vset.pattern.permute.xlu0 %v1375
    %1378 = vperm.xlu0 %1377, %v1373
    %v1379 = vpop.permute.xlu0 %1378
    %v1382 = vrcp.pop %v1372
    %v1383 = vmul.f32 %v1372, %v1382
    %v1384 = vsub.f32 1.0, %v1383
    %v1385 = vmul.f32 %v1382, %v1384
    %v1386 = vadd.f32 %v1382, %v1385
    %vm1387 = vweird.f32 %v1372
    %vm1388 = vweird.f32 %v1382
    %vm1389 = vmor %vm1387, %vm1388
    %v1390 = vsel %vm1389, %v1382, %v1386
    %v1391 = vand.u32 2147483647, %v1372
    %vm1392 = vcmp.eq.f32.partialorder %v1391, 8.507059e+37
    %v1393 = vand.u32 %v1372, 2147483648
    %v1394 = vor.u32 1.1754944e-38, %v1393
    %v1395 = vsel %vm1392, %v1394, %v1390
    %v1396 = vmul.f32 %v1343, %v1395
    %v1397 = vrcp.pop %v1379
    %v1398 = vmul.f32 %v1379, %v1397
    %v1399 = vsub.f32 1.0, %v1398
    %v1400 = vmul.f32 %v1397, %v1399
    %v1401 = vadd.f32 %v1397, %v1400
    %vm1402 = vweird.f32 %v1379
    %vm1403 = vweird.f32 %v1397
    %vm1404 = vmor %vm1402, %vm1403
    %v1405 = vsel %vm1404, %v1397, %v1401
    %v1406 = vand.u32 2147483647, %v1379
    %vm1407 = vcmp.eq.f32.partialorder %v1406, 8.507059e+37
    %v1408 = vand.u32 %v1379, 2147483648
    %v1409 = vor.u32 1.1754944e-38, %v1408
    %v1410 = vsel %vm1407, %v1409, %v1405
    %v1411 = vmul.f32 %v1346, %v1410
    %1413 = vset.pattern.permute.xlu0 16
    %1414 = vperm.xlu0 %1413, %v1284
    %v1415 = vpop.permute.xlu0 %1414
    %1419 = vset.pattern.permute.xlu0 0
    %1420 = vperm.xlu0 %1419, %v1396
    %v1421 = vpop.permute.xlu0 %1420
    %1422 = vset.pattern.permute.xlu0 0
    %1423 = vperm.xlu0 %1422, %v1411
    %v1424 = vpop.permute.xlu0 %1423
    %v1425 = vperm.slane %v1421, %v153
    %v1426 = vperm.slane %v1424, %v153
    %v1427 = vsel %vm258, %v1426, %v1425
    %v1429 = vmul.f32 %v1415, %v1427
    %v1430 = vsel %vm328, %v1429, -inf
    %1431 = vmax.xlane.f32.xlu0 %v1430
    %v1432 = vpop.xlane.xlu0 %1431
    %v1433 = vsub.f32 %v1429, %v1432
    %v1434 = vmul.f32 %v1433, 1.442695
    %v1435 = vpow.pop %v1434
    %v1436 = vsel %vm328, %v1435, 0.0
    %1437 = vadd.xlane.f32.xlu0 %v1436
    %v1438 = vpop.xlane.xlu0 %1437
    %v1439 = vrcp.pop %v1438
    %v1440 = vmul.f32 %v1438, %v1439
    %v1441 = vsub.f32 1.0, %v1440
    %v1442 = vmul.f32 %v1439, %v1441
    %v1443 = vadd.f32 %v1439, %v1442
    %vm1444 = vweird.f32 %v1438
    %vm1445 = vweird.f32 %v1439
    %vm1446 = vmor %vm1444, %vm1445
    %v1447 = vsel %vm1446, %v1439, %v1443
    %v1448 = vand.u32 2147483647, %v1438
    %vm1449 = vcmp.eq.f32.partialorder %v1448, 8.507059e+37
    %v1450 = vand.u32 %v1438, 2147483648
    %v1451 = vor.u32 1.1754944e-38, %v1450
    %v1452 = vsel %vm1449, %v1451, %v1447
    %v1453 = vmul.f32 %v1435, %v1452
    %1455 = vset.pattern.permute.xlu0 17
    %1456 = vperm.xlu0 %1455, %v1303
    %v1457 = vpop.permute.xlu0 %1456
    %v1459 = vmul.f32 %v1457, %v1453
    %v1460 = vsub.f32 1.0, %v1303
    %1462 = vset.pattern.permute.xlu0 17
    %1463 = vperm.xlu0 %1462, %v1460
    %v1464 = vpop.permute.xlu0 %1463
    %v1466 = vrot.slane %v1264, 6
    %v1468 = vmul.f32 %v1464, %v1466
    %v1469 = vadd.f32 %v1459, %v1468
    %v1470 = vperm.slane %v1469, 0
    %v1471 = vlaneseq
    %v1472 = vshrl.u32 %v1471, 7
    %1474 = vset.pattern.permute.xlu0 %v1472
    %1475 = vperm.xlu0 %1474, %v1470
    %v1476 = vpop.permute.xlu0 %1475
    %v1477 = vperm.slane %v1469, 1
    %v1478 = vlaneseq
    %v1479 = vshrl.u32 %v1478, 7
    %1481 = vset.pattern.permute.xlu0 %v1479
    %1482 = vperm.xlu0 %1481, %v1477
    %v1483 = vpop.permute.xlu0 %1482
    %v1484 = vmul.f32 %v1476, %v158
    %v1485 = vmul.f32 %v1483, %v158
    %v1486 = vsel %vm383, %v1484, 0.0
    %v1487 = vrot.slane %v1486, 4
    %v1488 = vadd.f32 %v1486, %v1487
    %v1489 = vrot.slane %v1488, 2
    %v1490 = vadd.f32 %v1488, %v1489
    %v1491 = vrot.slane %v1490, 1
    %v1492 = vadd.f32 %v1490, %v1491
    %v1493 = vsel %vm383, %v1485, 0.0
    %v1494 = vrot.slane %v1493, 4
    %v1495 = vadd.f32 %v1493, %v1494
    %v1496 = vrot.slane %v1495, 2
    %v1497 = vadd.f32 %v1495, %v1496
    %v1498 = vrot.slane %v1497, 1
    %v1499 = vadd.f32 %v1497, %v1498
    %v1500 = vmul.f32 %v1476, %v162
    %v1501 = vmul.f32 %v1483, %v162
    %v1502 = vsel %vm383, %v1500, 0.0
    %v1503 = vrot.slane %v1502, 4
    %v1504 = vadd.f32 %v1502, %v1503
    %v1505 = vrot.slane %v1504, 2
    %v1506 = vadd.f32 %v1504, %v1505
    %v1507 = vrot.slane %v1506, 1
    %v1508 = vadd.f32 %v1506, %v1507
    %v1509 = vsel %vm383, %v1501, 0.0
    %v1510 = vrot.slane %v1509, 4
    %v1511 = vadd.f32 %v1509, %v1510
    %v1512 = vrot.slane %v1511, 2
    %v1513 = vadd.f32 %v1511, %v1512
    %v1514 = vrot.slane %v1513, 1
    %v1515 = vadd.f32 %v1513, %v1514
    %1517 = vset.pattern.permute.xlu0 18
    %1518 = vperm.xlu0 %1517, %v1331
    %v1519 = vpop.permute.xlu0 %1518
    %v1523 = vsel %vm258, %v1499, %v1492
    %v1525 = vmul.f32 %v1519, %v1523
    %1526 = vset.pattern.permute.xlu0 19
    %1527 = vperm.xlu0 %1526, %v1331
    %v1528 = vpop.permute.xlu0 %1527
    %v1530 = vmul.f32 %v1528, %v1469
    %v1531 = vadd.f32 %v1525, %v1530
    %1532 = vset.pattern.permute.xlu0 20
    %1533 = vperm.xlu0 %1532, %v1331
    %v1534 = vpop.permute.xlu0 %1533
    %v1538 = vsel %vm258, %v1515, %v1508
    %v1540 = vmul.f32 %v1534, %v1538
    %v1541 = vadd.f32 %v1531, %v1540
    %v1542 = vmax.f32 %v1541, 1e-08
    %v1543 = vlog2.pop %v1542
    %v1544 = vmul.f32 %v1543, 0.6931472
    %1546 = vset.pattern.permute.xlu0 21
    %1547 = vperm.xlu0 %1546, %v1332
    %v1548 = vpop.permute.xlu0 %1547
    %v1550 = vmul.f32 %v1548, %v1544
    %v1551 = vmul.f32 %v1550, 1.442695
    %v1552 = vpow.pop %v1551
    %v1553 = vsel %vm328, %v1552, 0.0
    %1554 = vadd.xlane.f32.xlu0 %v1553
    %v1555 = vpop.xlane.xlu0 %1554
    %v1556 = vadd.f32 %v1555, 1e-08
    %v1557 = vrcp.pop %v1556
    %v1558 = vmul.f32 %v1556, %v1557
    %v1559 = vsub.f32 1.0, %v1558
    %v1560 = vmul.f32 %v1557, %v1559
    %v1561 = vadd.f32 %v1557, %v1560
    %vm1562 = vweird.f32 %v1556
    %vm1563 = vweird.f32 %v1557
    %vm1564 = vmor %vm1562, %vm1563
    %v1565 = vsel %vm1564, %v1557, %v1561
    %v1566 = vand.u32 2147483647, %v1556
    %vm1567 = vcmp.eq.f32.partialorder %v1566, 8.507059e+37
    %v1568 = vand.u32 %v1556, 2147483648
    %v1569 = vor.u32 1.1754944e-38, %v1568
    %v1570 = vsel %vm1567, %v1569, %v1565
    %v1571 = vmul.f32 %v1552, %v1570
    %1573 = vrot.lane.b32.xlu0 %v1571, 64
    %v1574 = vpop.permute.xlu0 %1573
    %vm1576 = vcmask 582144
    %1577 = vst.msk [vmem:[%s5] sm:$0x1] %vm1576, %v1574
    %1578 = vrot.lane.b32.xlu0 %v1571, 72
    %v1579 = vpop.permute.xlu0 %1578
    %vm1581 = vcmask 648769
    %1582 = vst.msk [vmem:[%s5 - $0x1] sm:$0x2] %vm1581, %v1579
    %v1583 = vsel %vm478, %v1284, -inf
    %1584 = vmax.xlane.f32.xlu0 %v1583
    %v1585 = vpop.xlane.xlu0 %1584
    %v1586 = vsub.f32 %v1284, %v1585
    %v1587 = vmul.f32 %v1586, 1.442695
    %v1588 = vpow.pop %v1587
    %1590 = vrot.lane.b32.xlu0 %v1588, 110
    %v1591 = vpop.permute.xlu0 %1590
    %v1593 = vsel %vm489, %v1591, 0.0
    %1594 = vadd.xlane.f32.xlu0 %v1593
    %v1595 = vpop.xlane.xlu0 %1594
    %v1596 = vrcp.pop %v1595
    %v1597 = vmul.f32 %v1595, %v1596
    %v1598 = vsub.f32 1.0, %v1597
    %v1599 = vmul.f32 %v1596, %v1598
    %v1600 = vadd.f32 %v1596, %v1599
    %vm1601 = vweird.f32 %v1595
    %vm1602 = vweird.f32 %v1596
    %vm1603 = vmor %vm1601, %vm1602
    %v1604 = vsel %vm1603, %v1596, %v1600
    %v1605 = vand.u32 2147483647, %v1595
    %vm1606 = vcmp.eq.f32.partialorder %v1605, 8.507059e+37
    %v1607 = vand.u32 %v1595, 2147483648
    %v1608 = vor.u32 1.1754944e-38, %v1607
    %v1609 = vsel %vm1606, %v1608, %v1604
    %v1610 = vmul.f32 %v1588, %v1609
    %1611 = vst [vmem:[#allocation1] sm:$0xff] %v113
    %s1612 = scalar_lea.vmem [#allocation1], 2
    %v1613 = vld [vmem:[%s1612] ss:$9 sm:$0xff]
    %s1614 = scalar_lea.vmem [#allocation1], 3
    %v1615 = vld [vmem:[%s1614] ss:$9 sm:$0xff]
    %v1616 = vperm.slane %v1613, 0
    %v1617 = vperm.slane %v1615, 0
    %v1620 = vmul.f32 %v1616, %v115
    %v1621 = vmul.f32 %v1617, %v116
    %v1622 = vsel %vm119, %v1620, 0.0
    %1623 = vadd.xlane.f32.xlu0 %v1622
    %v1624 = vpop.xlane.xlu0 %1623
    %v1625 = vsel %vm119, %v1621, 0.0
    %1626 = vadd.xlane.f32.xlu0 %v1625
    %v1627 = vpop.xlane.xlu0 %1626
    %v1628 = vsel %vm525, %v1347, 0.0
    %1629 = vadd.xlane.f32.xlu0 %v1628
    %v1630 = vpop.xlane.xlu0 %1629
    %v1631 = vrsqrt.pop %v1630
    %v1632 = vmul.f32 %v1631, %v1630
    %v1633 = vmul.f32 %v1632, %v1631
    %v1634 = vmul.f32 0.5, %v1633
    %v1635 = vsub.f32 1.5, %v1634
    %v1636 = vmul.f32 %v1631, %v1635
    %v1637 = vmul.f32 %v1630, %v1636
    %vm1638 = vcmp.eq.f32.partialorder %v1630, inf
    %v1639 = vsel %vm1638, %v1630, %v1637
    %vm1640 = vcmp.eq.f32.partialorder %v1630, 0.0
    %v1641 = vand.u32 %v1630, 2147483648
    %v1642 = vsel %vm1640, %v1641, %v1639
    %v1643 = vmul.f32 %v1642, %v542
    %v1644 = vadd.f32 %v1643, 1e-08
    %v1646 = vperm.slane %v1644, 2
    %v1647 = vlaneseq
    %v1648 = vshrl.u32 %v1647, 7
    %1650 = vset.pattern.permute.xlu0 %v1648
    %1651 = vperm.xlu0 %1650, %v1646
    %v1652 = vpop.permute.xlu0 %1651
    %v1653 = vperm.slane %v1644, 3
    %v1654 = vlaneseq
    %v1655 = vshrl.u32 %v1654, 7
    %1657 = vset.pattern.permute.xlu0 %v1655
    %1658 = vperm.xlu0 %1657, %v1653
    %v1659 = vpop.permute.xlu0 %1658
    %v1662 = vrcp.pop %v1652
    %v1663 = vmul.f32 %v1652, %v1662
    %v1664 = vsub.f32 1.0, %v1663
    %v1665 = vmul.f32 %v1662, %v1664
    %v1666 = vadd.f32 %v1662, %v1665
    %vm1667 = vweird.f32 %v1652
    %vm1668 = vweird.f32 %v1662
    %vm1669 = vmor %vm1667, %vm1668
    %v1670 = vsel %vm1669, %v1662, %v1666
    %v1671 = vand.u32 2147483647, %v1652
    %vm1672 = vcmp.eq.f32.partialorder %v1671, 8.507059e+37
    %v1673 = vand.u32 %v1652, 2147483648
    %v1674 = vor.u32 1.1754944e-38, %v1673
    %v1675 = vsel %vm1672, %v1674, %v1670
    %v1676 = vmul.f32 %v1624, %v1675
    %v1677 = vrcp.pop %v1659
    %v1678 = vmul.f32 %v1659, %v1677
    %v1679 = vsub.f32 1.0, %v1678
    %v1680 = vmul.f32 %v1677, %v1679
    %v1681 = vadd.f32 %v1677, %v1680
    %vm1682 = vweird.f32 %v1659
    %vm1683 = vweird.f32 %v1677
    %vm1684 = vmor %vm1682, %vm1683
    %v1685 = vsel %vm1684, %v1677, %v1681
    %v1686 = vand.u32 2147483647, %v1659
    %vm1687 = vcmp.eq.f32.partialorder %v1686, 8.507059e+37
    %v1688 = vand.u32 %v1659, 2147483648
    %v1689 = vor.u32 1.1754944e-38, %v1688
    %v1690 = vsel %vm1687, %v1689, %v1685
    %v1691 = vmul.f32 %v1627, %v1690
    %1694 = vset.pattern.permute.xlu0 0
    %1695 = vperm.xlu0 %1694, %v1676
    %v1696 = vpop.permute.xlu0 %1695
    %1697 = vset.pattern.permute.xlu0 0
    %1698 = vperm.xlu0 %1697, %v1691
    %v1699 = vpop.permute.xlu0 %1698
    %v1700 = vperm.slane %v1696, %v153
    %v1701 = vperm.slane %v1699, %v153
    %v1702 = vsel %vm541, %v1701, %v1700
    %v1704 = vmul.f32 %v1415, %v1702
    %v1705 = vsel %vm606, %v1704, -inf
    %1706 = vmax.xlane.f32.xlu0 %v1705
    %v1707 = vpop.xlane.xlu0 %1706
    %v1708 = vsub.f32 %v1704, %v1707
    %v1709 = vmul.f32 %v1708, 1.442695
    %v1710 = vpow.pop %v1709
    %v1711 = vsel %vm606, %v1710, 0.0
    %1712 = vadd.xlane.f32.xlu0 %v1711
    %v1713 = vpop.xlane.xlu0 %1712
    %v1714 = vrcp.pop %v1713
    %v1715 = vmul.f32 %v1713, %v1714
    %v1716 = vsub.f32 1.0, %v1715
    %v1717 = vmul.f32 %v1714, %v1716
    %v1718 = vadd.f32 %v1714, %v1717
    %vm1719 = vweird.f32 %v1713
    %vm1720 = vweird.f32 %v1714
    %vm1721 = vmor %vm1719, %vm1720
    %v1722 = vsel %vm1721, %v1714, %v1718
    %v1723 = vand.u32 2147483647, %v1713
    %vm1724 = vcmp.eq.f32.partialorder %v1723, 8.507059e+37
    %v1725 = vand.u32 %v1713, 2147483648
    %v1726 = vor.u32 1.1754944e-38, %v1725
    %v1727 = vsel %vm1724, %v1726, %v1722
    %v1728 = vmul.f32 %v1710, %v1727
    %v1729 = vmul.f32 %v1457, %v1728
    %v1730 = vrot.slane %v1571, 6
    %v1732 = vmul.f32 %v1464, %v1730
    %v1733 = vadd.f32 %v1729, %v1732
    %v1734 = vperm.slane %v1733, 2
    %v1735 = vlaneseq
    %v1736 = vshrl.u32 %v1735, 7
    %1738 = vset.pattern.permute.xlu0 %v1736
    %1739 = vperm.xlu0 %1738, %v1734
    %v1740 = vpop.permute.xlu0 %1739
    %v1741 = vperm.slane %v1733, 3
    %v1742 = vlaneseq
    %v1743 = vshrl.u32 %v1742, 7
    %1745 = vset.pattern.permute.xlu0 %v1743
    %1746 = vperm.xlu0 %1745, %v1741
    %v1747 = vpop.permute.xlu0 %1746
    %v1748 = vmul.f32 %v1740, %v158
    %v1749 = vmul.f32 %v1747, %v158
    %v1750 = vsel %vm383, %v1748, 0.0
    %v1751 = vrot.slane %v1750, 4
    %v1752 = vadd.f32 %v1750, %v1751
    %v1753 = vrot.slane %v1752, 2
    %v1754 = vadd.f32 %v1752, %v1753
    %v1755 = vrot.slane %v1754, 1
    %v1756 = vadd.f32 %v1754, %v1755
    %v1757 = vsel %vm383, %v1749, 0.0
    %v1758 = vrot.slane %v1757, 4
    %v1759 = vadd.f32 %v1757, %v1758
    %v1760 = vrot.slane %v1759, 2
    %v1761 = vadd.f32 %v1759, %v1760
    %v1762 = vrot.slane %v1761, 1
    %v1763 = vadd.f32 %v1761, %v1762
    %v1764 = vmul.f32 %v1740, %v162
    %v1765 = vmul.f32 %v1747, %v162
    %v1766 = vsel %vm383, %v1764, 0.0
    %v1767 = vrot.slane %v1766, 4
    %v1768 = vadd.f32 %v1766, %v1767
    %v1769 = vrot.slane %v1768, 2
    %v1770 = vadd.f32 %v1768, %v1769
    %v1771 = vrot.slane %v1770, 1
    %v1772 = vadd.f32 %v1770, %v1771
    %v1773 = vsel %vm383, %v1765, 0.0
    %v1774 = vrot.slane %v1773, 4
    %v1775 = vadd.f32 %v1773, %v1774
    %v1776 = vrot.slane %v1775, 2
    %v1777 = vadd.f32 %v1775, %v1776
    %v1778 = vrot.slane %v1777, 1
    %v1779 = vadd.f32 %v1777, %v1778
    %1781 = vset.pattern.permute.xlu0 18
    %1782 = vperm.xlu0 %1781, %v1610
    %v1783 = vpop.permute.xlu0 %1782
    %v1787 = vsel %vm541, %v1763, %v1756
    %v1789 = vmul.f32 %v1783, %v1787
    %1790 = vset.pattern.permute.xlu0 19
    %1791 = vperm.xlu0 %1790, %v1610
    %v1792 = vpop.permute.xlu0 %1791
    %v1794 = vmul.f32 %v1792, %v1733
    %v1795 = vadd.f32 %v1789, %v1794
    %1796 = vset.pattern.permute.xlu0 20
    %1797 = vperm.xlu0 %1796, %v1610
    %v1798 = vpop.permute.xlu0 %1797
    %v1802 = vsel %vm541, %v1779, %v1772
    %v1804 = vmul.f32 %v1798, %v1802
    %v1805 = vadd.f32 %v1795, %v1804
    %v1806 = vmax.f32 %v1805, 1e-08
    %v1807 = vlog2.pop %v1806
    %v1808 = vmul.f32 %v1807, 0.6931472
    %v1809 = vmul.f32 %v1548, %v1808
    %v1810 = vmul.f32 %v1809, 1.442695
    %v1811 = vpow.pop %v1810
    %v1812 = vsel %vm606, %v1811, 0.0
    %1813 = vadd.xlane.f32.xlu0 %v1812
    %v1814 = vpop.xlane.xlu0 %1813
    %v1815 = vadd.f32 %v1814, 1e-08
    %v1816 = vrcp.pop %v1815
    %v1817 = vmul.f32 %v1815, %v1816
    %v1818 = vsub.f32 1.0, %v1817
    %v1819 = vmul.f32 %v1816, %v1818
    %v1820 = vadd.f32 %v1816, %v1819
    %vm1821 = vweird.f32 %v1815
    %vm1822 = vweird.f32 %v1816
    %vm1823 = vmor %vm1821, %vm1822
    %v1824 = vsel %vm1823, %v1816, %v1820
    %v1825 = vand.u32 2147483647, %v1815
    %vm1826 = vcmp.eq.f32.partialorder %v1825, 8.507059e+37
    %v1827 = vand.u32 %v1815, 2147483648
    %v1828 = vor.u32 1.1754944e-38, %v1827
    %v1829 = vsel %vm1826, %v1828, %v1824
    %v1830 = vmul.f32 %v1811, %v1829
    %1832 = vrot.lane.b32.xlu0 %v1830, 80
    %v1833 = vpop.permute.xlu0 %1832
    %vm1835 = vcmask 715394
    %1836 = vst.msk [vmem:[%s5 - $0x2] sm:$0x4] %vm1835, %v1833
    %1837 = vrot.lane.b32.xlu0 %v1830, 88
    %v1838 = vpop.permute.xlu0 %1837
    %vm1840 = vcmask 782019
    %1841 = vst.msk [vmem:[%s5 - $0x3] sm:$0x8] %vm1840, %v1838
    %v1842 = vsel %vm744, %v1284, -inf
    %1843 = vmax.xlane.f32.xlu0 %v1842
    %v1844 = vpop.xlane.xlu0 %1843
    %v1845 = vsub.f32 %v1284, %v1844
    %v1846 = vmul.f32 %v1845, 1.442695
    %v1847 = vpow.pop %v1846
    %1849 = vrot.lane.b32.xlu0 %v1847, 110
    %v1850 = vpop.permute.xlu0 %1849
    %v1852 = vsel %vm755, %v1850, 0.0
    %1853 = vadd.xlane.f32.xlu0 %v1852
    %v1854 = vpop.xlane.xlu0 %1853
    %v1855 = vrcp.pop %v1854
    %v1856 = vmul.f32 %v1854, %v1855
    %v1857 = vsub.f32 1.0, %v1856
    %v1858 = vmul.f32 %v1855, %v1857
    %v1859 = vadd.f32 %v1855, %v1858
    %vm1860 = vweird.f32 %v1854
    %vm1861 = vweird.f32 %v1855
    %vm1862 = vmor %vm1860, %vm1861
    %v1863 = vsel %vm1862, %v1855, %v1859
    %v1864 = vand.u32 2147483647, %v1854
    %vm1865 = vcmp.eq.f32.partialorder %v1864, 8.507059e+37
    %v1866 = vand.u32 %v1854, 2147483648
    %v1867 = vor.u32 1.1754944e-38, %v1866
    %v1868 = vsel %vm1865, %v1867, %v1863
    %v1869 = vmul.f32 %v1847, %v1868
    %1870 = vst [vmem:[#allocation1] sm:$0xff] %v113
    %s1871 = scalar_lea.vmem [#allocation1], 4
    %v1872 = vld [vmem:[%s1871] ss:$9 sm:$0xff]
    %s1873 = scalar_lea.vmem [#allocation1], 5
    %v1874 = vld [vmem:[%s1873] ss:$9 sm:$0xff]
    %v1875 = vperm.slane %v1872, 0
    %v1876 = vperm.slane %v1874, 0
    %v1879 = vmul.f32 %v1875, %v115
    %v1880 = vmul.f32 %v1876, %v116
    %v1881 = vsel %vm119, %v1879, 0.0
    %1882 = vadd.xlane.f32.xlu0 %v1881
    %v1883 = vpop.xlane.xlu0 %1882
    %v1884 = vsel %vm119, %v1880, 0.0
    %1885 = vadd.xlane.f32.xlu0 %v1884
    %v1886 = vpop.xlane.xlu0 %1885
    %v1887 = vsel %vm791, %v1347, 0.0
    %1888 = vadd.xlane.f32.xlu0 %v1887
    %v1889 = vpop.xlane.xlu0 %1888
    %v1890 = vrsqrt.pop %v1889
    %v1891 = vmul.f32 %v1890, %v1889
    %v1892 = vmul.f32 %v1891, %v1890
    %v1893 = vmul.f32 0.5, %v1892
    %v1894 = vsub.f32 1.5, %v1893
    %v1895 = vmul.f32 %v1890, %v1894
    %v1896 = vmul.f32 %v1889, %v1895
    %vm1897 = vcmp.eq.f32.partialorder %v1889, inf
    %v1898 = vsel %vm1897, %v1889, %v1896
    %vm1899 = vcmp.eq.f32.partialorder %v1889, 0.0
    %v1900 = vand.u32 %v1889, 2147483648
    %v1901 = vsel %vm1899, %v1900, %v1898
    %v1902 = vmul.f32 %v1901, %v808
    %v1903 = vadd.f32 %v1902, 1e-08
    %v1905 = vperm.slane %v1903, 4
    %v1906 = vlaneseq
    %v1907 = vshrl.u32 %v1906, 7
    %1909 = vset.pattern.permute.xlu0 %v1907
    %1910 = vperm.xlu0 %1909, %v1905
    %v1911 = vpop.permute.xlu0 %1910
    %v1912 = vperm.slane %v1903, 5
    %v1913 = vlaneseq
    %v1914 = vshrl.u32 %v1913, 7
    %1916 = vset.pattern.permute.xlu0 %v1914
    %1917 = vperm.xlu0 %1916, %v1912
    %v1918 = vpop.permute.xlu0 %1917
    %v1921 = vrcp.pop %v1911
    %v1922 = vmul.f32 %v1911, %v1921
    %v1923 = vsub.f32 1.0, %v1922
    %v1924 = vmul.f32 %v1921, %v1923
    %v1925 = vadd.f32 %v1921, %v1924
    %vm1926 = vweird.f32 %v1911
    %vm1927 = vweird.f32 %v1921
    %vm1928 = vmor %vm1926, %vm1927
    %v1929 = vsel %vm1928, %v1921, %v1925
    %v1930 = vand.u32 2147483647, %v1911
    %vm1931 = vcmp.eq.f32.partialorder %v1930, 8.507059e+37
    %v1932 = vand.u32 %v1911, 2147483648
    %v1933 = vor.u32 1.1754944e-38, %v1932
    %v1934 = vsel %vm1931, %v1933, %v1929
    %v1935 = vmul.f32 %v1883, %v1934
    %v1936 = vrcp.pop %v1918
    %v1937 = vmul.f32 %v1918, %v1936
    %v1938 = vsub.f32 1.0, %v1937
    %v1939 = vmul.f32 %v1936, %v1938
    %v1940 = vadd.f32 %v1936, %v1939
    %vm1941 = vweird.f32 %v1918
    %vm1942 = vweird.f32 %v1936
    %vm1943 = vmor %vm1941, %vm1942
    %v1944 = vsel %vm1943, %v1936, %v1940
    %v1945 = vand.u32 2147483647, %v1918
    %vm1946 = vcmp.eq.f32.partialorder %v1945, 8.507059e+37
    %v1947 = vand.u32 %v1918, 2147483648
    %v1948 = vor.u32 1.1754944e-38, %v1947
    %v1949 = vsel %vm1946, %v1948, %v1944
    %v1950 = vmul.f32 %v1886, %v1949
    %1953 = vset.pattern.permute.xlu0 0
    %1954 = vperm.xlu0 %1953, %v1935
    %v1955 = vpop.permute.xlu0 %1954
    %1956 = vset.pattern.permute.xlu0 0
    %1957 = vperm.xlu0 %1956, %v1950
    %v1958 = vpop.permute.xlu0 %1957
    %v1959 = vperm.slane %v1955, %v153
    %v1960 = vperm.slane %v1958, %v153
    %v1961 = vsel %vm807, %v1960, %v1959
    %v1963 = vmul.f32 %v1415, %v1961
    %v1964 = vsel %vm872, %v1963, -inf
    %1965 = vmax.xlane.f32.xlu0 %v1964
    %v1966 = vpop.xlane.xlu0 %1965
    %v1967 = vsub.f32 %v1963, %v1966
    %v1968 = vmul.f32 %v1967, 1.442695
    %v1969 = vpow.pop %v1968
    %v1970 = vsel %vm872, %v1969, 0.0
    %1971 = vadd.xlane.f32.xlu0 %v1970
    %v1972 = vpop.xlane.xlu0 %1971
    %v1973 = vrcp.pop %v1972
    %v1974 = vmul.f32 %v1972, %v1973
    %v1975 = vsub.f32 1.0, %v1974
    %v1976 = vmul.f32 %v1973, %v1975
    %v1977 = vadd.f32 %v1973, %v1976
    %vm1978 = vweird.f32 %v1972
    %vm1979 = vweird.f32 %v1973
    %vm1980 = vmor %vm1978, %vm1979
    %v1981 = vsel %vm1980, %v1973, %v1977
    %v1982 = vand.u32 2147483647, %v1972
    %vm1983 = vcmp.eq.f32.partialorder %v1982, 8.507059e+37
    %v1984 = vand.u32 %v1972, 2147483648
    %v1985 = vor.u32 1.1754944e-38, %v1984
    %v1986 = vsel %vm1983, %v1985, %v1981
    %v1987 = vmul.f32 %v1969, %v1986
    %v1988 = vmul.f32 %v1457, %v1987
    %v1989 = vrot.slane %v1830, 6
    %v1991 = vmul.f32 %v1464, %v1989
    %v1992 = vadd.f32 %v1988, %v1991
    %v1993 = vperm.slane %v1992, 4
    %v1994 = vlaneseq
    %v1995 = vshrl.u32 %v1994, 7
    %1997 = vset.pattern.permute.xlu0 %v1995
    %1998 = vperm.xlu0 %1997, %v1993
    %v1999 = vpop.permute.xlu0 %1998
    %v2000 = vperm.slane %v1992, 5
    %v2001 = vlaneseq
    %v2002 = vshrl.u32 %v2001, 7
    %2004 = vset.pattern.permute.xlu0 %v2002
    %2005 = vperm.xlu0 %2004, %v2000
    %v2006 = vpop.permute.xlu0 %2005
    %v2007 = vmul.f32 %v1999, %v158
    %v2008 = vmul.f32 %v2006, %v158
    %v2009 = vsel %vm383, %v2007, 0.0
    %v2010 = vrot.slane %v2009, 4
    %v2011 = vadd.f32 %v2009, %v2010
    %v2012 = vrot.slane %v2011, 2
    %v2013 = vadd.f32 %v2011, %v2012
    %v2014 = vrot.slane %v2013, 1
    %v2015 = vadd.f32 %v2013, %v2014
    %v2016 = vsel %vm383, %v2008, 0.0
    %v2017 = vrot.slane %v2016, 4
    %v2018 = vadd.f32 %v2016, %v2017
    %v2019 = vrot.slane %v2018, 2
    %v2020 = vadd.f32 %v2018, %v2019
    %v2021 = vrot.slane %v2020, 1
    %v2022 = vadd.f32 %v2020, %v2021
    %v2023 = vmul.f32 %v1999, %v162
    %v2024 = vmul.f32 %v2006, %v162
    %v2025 = vsel %vm383, %v2023, 0.0
    %v2026 = vrot.slane %v2025, 4
    %v2027 = vadd.f32 %v2025, %v2026
    %v2028 = vrot.slane %v2027, 2
    %v2029 = vadd.f32 %v2027, %v2028
    %v2030 = vrot.slane %v2029, 1
    %v2031 = vadd.f32 %v2029, %v2030
    %v2032 = vsel %vm383, %v2024, 0.0
    %v2033 = vrot.slane %v2032, 4
    %v2034 = vadd.f32 %v2032, %v2033
    %v2035 = vrot.slane %v2034, 2
    %v2036 = vadd.f32 %v2034, %v2035
    %v2037 = vrot.slane %v2036, 1
    %v2038 = vadd.f32 %v2036, %v2037
    %2040 = vset.pattern.permute.xlu0 18
    %2041 = vperm.xlu0 %2040, %v1869
    %v2042 = vpop.permute.xlu0 %2041
    %v2046 = vsel %vm807, %v2022, %v2015
    %v2048 = vmul.f32 %v2042, %v2046
    %2049 = vset.pattern.permute.xlu0 19
    %2050 = vperm.xlu0 %2049, %v1869
    %v2051 = vpop.permute.xlu0 %2050
    %v2053 = vmul.f32 %v2051, %v1992
    %v2054 = vadd.f32 %v2048, %v2053
    %2055 = vset.pattern.permute.xlu0 20
    %2056 = vperm.xlu0 %2055, %v1869
    %v2057 = vpop.permute.xlu0 %2056
    %v2061 = vsel %vm807, %v2038, %v2031
    %v2063 = vmul.f32 %v2057, %v2061
    %v2064 = vadd.f32 %v2054, %v2063
    %v2065 = vmax.f32 %v2064, 1e-08
    %v2066 = vlog2.pop %v2065
    %v2067 = vmul.f32 %v2066, 0.6931472
    %v2068 = vmul.f32 %v1548, %v2067
    %v2069 = vmul.f32 %v2068, 1.442695
    %v2070 = vpow.pop %v2069
    %v2071 = vsel %vm872, %v2070, 0.0
    %2072 = vadd.xlane.f32.xlu0 %v2071
    %v2073 = vpop.xlane.xlu0 %2072
    %v2074 = vadd.f32 %v2073, 1e-08
    %v2075 = vrcp.pop %v2074
    %v2076 = vmul.f32 %v2074, %v2075
    %v2077 = vsub.f32 1.0, %v2076
    %v2078 = vmul.f32 %v2075, %v2077
    %v2079 = vadd.f32 %v2075, %v2078
    %vm2080 = vweird.f32 %v2074
    %vm2081 = vweird.f32 %v2075
    %vm2082 = vmor %vm2080, %vm2081
    %v2083 = vsel %vm2082, %v2075, %v2079
    %v2084 = vand.u32 2147483647, %v2074
    %vm2085 = vcmp.eq.f32.partialorder %v2084, 8.507059e+37
    %v2086 = vand.u32 %v2074, 2147483648
    %v2087 = vor.u32 1.1754944e-38, %v2086
    %v2088 = vsel %vm2085, %v2087, %v2083
    %v2089 = vmul.f32 %v2070, %v2088
    %2091 = vrot.lane.b32.xlu0 %v2089, 96
    %v2092 = vpop.permute.xlu0 %2091
    %vm2094 = vcmask 848644
    %2095 = vst.msk [vmem:[%s5 - $0x4] sm:$0x10] %vm2094, %v2092
    %2096 = vrot.lane.b32.xlu0 %v2089, 104
    %v2097 = vpop.permute.xlu0 %2096
    %vm2099 = vcmask 915269
    %2100 = vst.msk [vmem:[%s5 - $0x5] sm:$0x20] %vm2099, %v2097
    %v2101 = vsel %vm1010, %v1284, -inf
    %2102 = vmax.xlane.f32.xlu0 %v2101
    %v2103 = vpop.xlane.xlu0 %2102
    %v2104 = vsub.f32 %v1284, %v2103
    %v2105 = vmul.f32 %v2104, 1.442695
    %v2106 = vpow.pop %v2105
    %2108 = vrot.lane.b32.xlu0 %v2106, 110
    %v2109 = vpop.permute.xlu0 %2108
    %v2111 = vsel %vm1021, %v2109, 0.0
    %2112 = vadd.xlane.f32.xlu0 %v2111
    %v2113 = vpop.xlane.xlu0 %2112
    %v2114 = vrcp.pop %v2113
    %v2115 = vmul.f32 %v2113, %v2114
    %v2116 = vsub.f32 1.0, %v2115
    %v2117 = vmul.f32 %v2114, %v2116
    %v2118 = vadd.f32 %v2114, %v2117
    %vm2119 = vweird.f32 %v2113
    %vm2120 = vweird.f32 %v2114
    %vm2121 = vmor %vm2119, %vm2120
    %v2122 = vsel %vm2121, %v2114, %v2118
    %v2123 = vand.u32 2147483647, %v2113
    %vm2124 = vcmp.eq.f32.partialorder %v2123, 8.507059e+37
    %v2125 = vand.u32 %v2113, 2147483648
    %v2126 = vor.u32 1.1754944e-38, %v2125
    %v2127 = vsel %vm2124, %v2126, %v2122
    %v2128 = vmul.f32 %v2106, %v2127
    %2129 = vst [vmem:[#allocation1] sm:$0xff] %v113
    %s2130 = scalar_lea.vmem [#allocation1], 6
    %v2131 = vld [vmem:[%s2130] ss:$9 sm:$0xff]
    %s2132 = scalar_lea.vmem [#allocation1], 7
    %v2133 = vld [vmem:[%s2132] ss:$9 sm:$0xff]
    %v2134 = vperm.slane %v2131, 0
    %v2135 = vperm.slane %v2133, 0
    %v2138 = vmul.f32 %v2134, %v115
    %v2139 = vmul.f32 %v2135, %v116
    %v2140 = vsel %vm119, %v2138, 0.0
    %2141 = vadd.xlane.f32.xlu0 %v2140
    %v2142 = vpop.xlane.xlu0 %2141
    %v2143 = vsel %vm119, %v2139, 0.0
    %2144 = vadd.xlane.f32.xlu0 %v2143
    %v2145 = vpop.xlane.xlu0 %2144
    %v2146 = vsel %vm1057, %v1347, 0.0
    %2147 = vadd.xlane.f32.xlu0 %v2146
    %v2148 = vpop.xlane.xlu0 %2147
    %v2149 = vrsqrt.pop %v2148
    %v2150 = vmul.f32 %v2149, %v2148
    %v2151 = vmul.f32 %v2150, %v2149
    %v2152 = vmul.f32 0.5, %v2151
    %v2153 = vsub.f32 1.5, %v2152
    %v2154 = vmul.f32 %v2149, %v2153
    %v2155 = vmul.f32 %v2148, %v2154
    %vm2156 = vcmp.eq.f32.partialorder %v2148, inf
    %v2157 = vsel %vm2156, %v2148, %v2155
    %vm2158 = vcmp.eq.f32.partialorder %v2148, 0.0
    %v2159 = vand.u32 %v2148, 2147483648
    %v2160 = vsel %vm2158, %v2159, %v2157
    %v2161 = vmul.f32 %v2160, %v1074
    %v2162 = vadd.f32 %v2161, 1e-08
    %v2164 = vperm.slane %v2162, 6
    %v2165 = vlaneseq
    %v2166 = vshrl.u32 %v2165, 7
    %2168 = vset.pattern.permute.xlu0 %v2166
    %2169 = vperm.xlu0 %2168, %v2164
    %v2170 = vpop.permute.xlu0 %2169
    %v2171 = vperm.slane %v2162, 7
    %v2172 = vlaneseq
    %v2173 = vshrl.u32 %v2172, 7
    %2175 = vset.pattern.permute.xlu0 %v2173
    %2176 = vperm.xlu0 %2175, %v2171
    %v2177 = vpop.permute.xlu0 %2176
    %v2180 = vrcp.pop %v2170
    %v2181 = vmul.f32 %v2170, %v2180
    %v2182 = vsub.f32 1.0, %v2181
    %v2183 = vmul.f32 %v2180, %v2182
    %v2184 = vadd.f32 %v2180, %v2183
    %vm2185 = vweird.f32 %v2170
    %vm2186 = vweird.f32 %v2180
    %vm2187 = vmor %vm2185, %vm2186
    %v2188 = vsel %vm2187, %v2180, %v2184
    %v2189 = vand.u32 2147483647, %v2170
    %vm2190 = vcmp.eq.f32.partialorder %v2189, 8.507059e+37
    %v2191 = vand.u32 %v2170, 2147483648
    %v2192 = vor.u32 1.1754944e-38, %v2191
    %v2193 = vsel %vm2190, %v2192, %v2188
    %v2194 = vmul.f32 %v2142, %v2193
    %v2195 = vrcp.pop %v2177
    %v2196 = vmul.f32 %v2177, %v2195
    %v2197 = vsub.f32 1.0, %v2196
    %v2198 = vmul.f32 %v2195, %v2197
    %v2199 = vadd.f32 %v2195, %v2198
    %vm2200 = vweird.f32 %v2177
    %vm2201 = vweird.f32 %v2195
    %vm2202 = vmor %vm2200, %vm2201
    %v2203 = vsel %vm2202, %v2195, %v2199
    %v2204 = vand.u32 2147483647, %v2177
    %vm2205 = vcmp.eq.f32.partialorder %v2204, 8.507059e+37
    %v2206 = vand.u32 %v2177, 2147483648
    %v2207 = vor.u32 1.1754944e-38, %v2206
    %v2208 = vsel %vm2205, %v2207, %v2203
    %v2209 = vmul.f32 %v2145, %v2208
    %2212 = vset.pattern.permute.xlu0 0
    %2213 = vperm.xlu0 %2212, %v2194
    %v2214 = vpop.permute.xlu0 %2213
    %2215 = vset.pattern.permute.xlu0 0
    %2216 = vperm.xlu0 %2215, %v2209
    %v2217 = vpop.permute.xlu0 %2216
    %v2218 = vperm.slane %v2214, %v153
    %v2219 = vperm.slane %v2217, %v153
    %v2220 = vsel %vm1073, %v2219, %v2218
    %v2222 = vmul.f32 %v1415, %v2220
    %v2223 = vsel %vm1138, %v2222, -inf
    %2224 = vmax.xlane.f32.xlu0 %v2223
    %v2225 = vpop.xlane.xlu0 %2224
    %v2226 = vsub.f32 %v2222, %v2225
    %v2227 = vmul.f32 %v2226, 1.442695
    %v2228 = vpow.pop %v2227
    %v2229 = vsel %vm1138, %v2228, 0.0
    %2230 = vadd.xlane.f32.xlu0 %v2229
    %v2231 = vpop.xlane.xlu0 %2230
    %v2232 = vrcp.pop %v2231
    %v2233 = vmul.f32 %v2231, %v2232
    %v2234 = vsub.f32 1.0, %v2233
    %v2235 = vmul.f32 %v2232, %v2234
    %v2236 = vadd.f32 %v2232, %v2235
    %vm2237 = vweird.f32 %v2231
    %vm2238 = vweird.f32 %v2232
    %vm2239 = vmor %vm2237, %vm2238
    %v2240 = vsel %vm2239, %v2232, %v2236
    %v2241 = vand.u32 2147483647, %v2231
    %vm2242 = vcmp.eq.f32.partialorder %v2241, 8.507059e+37
    %v2243 = vand.u32 %v2231, 2147483648
    %v2244 = vor.u32 1.1754944e-38, %v2243
    %v2245 = vsel %vm2242, %v2244, %v2240
    %v2246 = vmul.f32 %v2228, %v2245
    %v2247 = vmul.f32 %v1457, %v2246
    %v2248 = vrot.slane %v2089, 6
    %v2250 = vmul.f32 %v1464, %v2248
    %v2251 = vadd.f32 %v2247, %v2250
    %v2252 = vperm.slane %v2251, 6
    %v2253 = vlaneseq
    %v2254 = vshrl.u32 %v2253, 7
    %2256 = vset.pattern.permute.xlu0 %v2254
    %2257 = vperm.xlu0 %2256, %v2252
    %v2258 = vpop.permute.xlu0 %2257
    %v2259 = vperm.slane %v2251, 7
    %v2260 = vlaneseq
    %v2261 = vshrl.u32 %v2260, 7
    %2263 = vset.pattern.permute.xlu0 %v2261
    %2264 = vperm.xlu0 %2263, %v2259
    %v2265 = vpop.permute.xlu0 %2264
    %v2266 = vmul.f32 %v2258, %v158
    %v2267 = vmul.f32 %v2265, %v158
    %v2268 = vsel %vm383, %v2266, 0.0
    %v2269 = vrot.slane %v2268, 4
    %v2270 = vadd.f32 %v2268, %v2269
    %v2271 = vrot.slane %v2270, 2
    %v2272 = vadd.f32 %v2270, %v2271
    %v2273 = vrot.slane %v2272, 1
    %v2274 = vadd.f32 %v2272, %v2273
    %v2275 = vsel %vm383, %v2267, 0.0
    %v2276 = vrot.slane %v2275, 4
    %v2277 = vadd.f32 %v2275, %v2276
    %v2278 = vrot.slane %v2277, 2
    %v2279 = vadd.f32 %v2277, %v2278
    %v2280 = vrot.slane %v2279, 1
    %v2281 = vadd.f32 %v2279, %v2280
    %v2282 = vmul.f32 %v2258, %v162
    %v2283 = vmul.f32 %v2265, %v162
    %v2284 = vsel %vm383, %v2282, 0.0
    %v2285 = vrot.slane %v2284, 4
    %v2286 = vadd.f32 %v2284, %v2285
    %v2287 = vrot.slane %v2286, 2
    %v2288 = vadd.f32 %v2286, %v2287
    %v2289 = vrot.slane %v2288, 1
    %v2290 = vadd.f32 %v2288, %v2289
    %v2291 = vsel %vm383, %v2283, 0.0
    %v2292 = vrot.slane %v2291, 4
    %v2293 = vadd.f32 %v2291, %v2292
    %v2294 = vrot.slane %v2293, 2
    %v2295 = vadd.f32 %v2293, %v2294
    %v2296 = vrot.slane %v2295, 1
    %v2297 = vadd.f32 %v2295, %v2296
    %2299 = vset.pattern.permute.xlu0 18
    %2300 = vperm.xlu0 %2299, %v2128
    %v2301 = vpop.permute.xlu0 %2300
    %v2305 = vsel %vm1073, %v2281, %v2274
    %v2307 = vmul.f32 %v2301, %v2305
    %2308 = vset.pattern.permute.xlu0 19
    %2309 = vperm.xlu0 %2308, %v2128
    %v2310 = vpop.permute.xlu0 %2309
    %v2312 = vmul.f32 %v2310, %v2251
    %v2313 = vadd.f32 %v2307, %v2312
    %2314 = vset.pattern.permute.xlu0 20
    %2315 = vperm.xlu0 %2314, %v2128
    %v2316 = vpop.permute.xlu0 %2315
    %v2320 = vsel %vm1073, %v2297, %v2290
    %v2322 = vmul.f32 %v2316, %v2320
    %v2323 = vadd.f32 %v2313, %v2322
    %v2324 = vmax.f32 %v2323, 1e-08
    %v2325 = vlog2.pop %v2324
    %v2326 = vmul.f32 %v2325, 0.6931472
    %v2327 = vmul.f32 %v1548, %v2326
    %v2328 = vmul.f32 %v2327, 1.442695
    %v2329 = vpow.pop %v2328
    %v2330 = vsel %vm1138, %v2329, 0.0
    %2331 = vadd.xlane.f32.xlu0 %v2330
    %v2332 = vpop.xlane.xlu0 %2331
    %v2333 = vadd.f32 %v2332, 1e-08
    %v2334 = vrcp.pop %v2333
    %v2335 = vmul.f32 %v2333, %v2334
    %v2336 = vsub.f32 1.0, %v2335
    %v2337 = vmul.f32 %v2334, %v2336
    %v2338 = vadd.f32 %v2334, %v2337
    %vm2339 = vweird.f32 %v2333
    %vm2340 = vweird.f32 %v2334
    %vm2341 = vmor %vm2339, %vm2340
    %v2342 = vsel %vm2341, %v2334, %v2338
    %v2343 = vand.u32 2147483647, %v2333
    %vm2344 = vcmp.eq.f32.partialorder %v2343, 8.507059e+37
    %v2345 = vand.u32 %v2333, 2147483648
    %v2346 = vor.u32 1.1754944e-38, %v2345
    %v2347 = vsel %vm2344, %v2346, %v2342
    %v2348 = vmul.f32 %v2329, %v2347
    %2350 = vrot.lane.b32.xlu0 %v2348, 112
    %v2351 = vpop.permute.xlu0 %2350
    %vm2353 = vcmask 981894
    %2354 = vst.msk [vmem:[%s5 - $0x6] sm:$0x40] %vm2353, %v2351
    %2355 = vrot.lane.b32.xlu0 %v2348, 120
    %v2356 = vpop.permute.xlu0 %2355
    %vm2358 = vcmask 1048519
    %2359 = vst.msk [vmem:[%s5 - $0x7] sm:$0x80] %vm2358, %v2356
    // Predicated region
    $region34: #{basic_heads_forward_seq.1} parent=1 // pred_check
      _
    $region35: #{basic_heads_forward_seq.1} parent=1 // pred_check_branch
      %2361 = sbr.rel (0) target = $region37
    $region36: #{basic_heads_forward_seq.1} parent=1 // pred_region
      _
    $region37: #{basic_heads_forward_seq.1} parent=1 // pred_fallthru
      _
    // Predicated region
    $region38: #{basic_heads_forward_seq.1} parent=1 // pred_check
      _
    $region39: #{basic_heads_forward_seq.1} parent=1 // pred_check_branch
      %2363 = sbr.rel (0) target = $region41
    $region40: #{basic_heads_forward_seq.1} parent=1 // pred_region
      _
    $region41: #{basic_heads_forward_seq.1} parent=1 // pred_fallthru
      _
    %2364 = vsyncpa [#allocation3], 1
    %2365 = vsyncpa [#allocation5], 1

</llo_original>
